<compile_context>
chip_gen: v7x
topology: tpu7x:2x2x1
jax: 0.10.0
libtpu: 0.0.40
codegen_flags: <defaults>
</compile_context>

<pallas_src>
import math
import jax
import jax.numpy as jnp
from jax.experimental import pallas as pl
from jax.experimental.pallas import tpu as pltpu

EPS = 1e-5  # PyTorch nn.LayerNorm default eps


def _layer_norm_cols(v, gamma, beta):
    """LayerNorm over the feature axis, which is axis 0 (sublanes) in the
    transposed (D, L) layout.  gamma/beta are (D, 1)."""
    mu = jnp.mean(v, axis=0, keepdims=True)
    var = jnp.mean(jnp.square(v - mu), axis=0, keepdims=True)
    return (v - mu) * jax.lax.rsqrt(var + EPS) * gamma + beta


def _fused_layers_kernel(xT_ref, mT_ref, w12T_ref, browsT_ref, gsT_ref, bsT_ref,
                         eclfT_ref, emapT_ref, ghT_ref, bhT_ref, out_ref):
    """One batch element; all depth layers fused; layout (D, T*N), lanes = T*N."""
    xT = xT_ref[0].astype(jnp.float32)           # (D, TN)
    D = xT.shape[0]
    depth = mT_ref.shape[0]
    eclfT = eclfT_ref[...]                       # (E, D)
    emapT = emapT_ref[...]                       # (E, E)  == edge_map^T
    ghT = ghT_ref[...]                           # (D, 1)
    bhT = bhT_ref[...]                           # (D, 1)

    for dl in range(depth):                      # static unroll (depth is small)
        # ------------- SpatialTemporalInteractiveGCN branch (transposed) -------------
        # q^T[d, (t,n)] = sum_m AL[n,m]*x[(t-1,m),d] + AR[n,m]*x[(t,m),d]
        qT = jnp.dot(xT, mT_ref[dl], preferred_element_type=jnp.float32)      # (D, TN)
        # fused proj_1|proj_2 applied after aggregation; browsT carries the bias
        # (including the bias hitting the zero temporal-pad rows of the original).
        gT = (jnp.dot(w12T_ref[dl], qT, preferred_element_type=jnp.float32)
              + browsT_ref[dl])                                               # (2D, TN)
        g1 = gT[:D, :]                            # free sublane slice
        g2 = gT[D:, :]
        stgcn = jnp.maximum(g1 * g2, 0.0) + g1    # relu(g1*g2) + g1
        out1 = _layer_norm_cols(stgcn + xT, gsT_ref[dl], bsT_ref[dl])

        # ---------------------- HypergraphLearning branch (transposed) ----------------
        scoresT = jnp.dot(eclfT, xT, preferred_element_type=jnp.float32)      # (E, TN)
        scoresT = scoresT - jnp.max(scoresT, axis=0, keepdims=True)
        es = jnp.exp(scoresT)
        inv_den = pl.reciprocal(jnp.sum(es, axis=0, keepdims=True), approx=True)
        assignT = es * inv_den                     # softmax over edges (sublane axis)
        # hyper_feat^T[d, e] = sum_k x^T[d,k] * assign^T[e,k]
        hyper_featT = jax.lax.dot_general(xT, assignT, (((1,), (1,)), ((), ())),
                                          preferred_element_type=jnp.float32)  # (D, E)
        mappedT = jnp.maximum(
            jnp.dot(hyper_featT, emapT, preferred_element_type=jnp.float32), 0.0)  # (D, E)
        hyper_outT = mappedT + hyper_featT
        yT = jnp.maximum(
            jnp.dot(hyper_outT, assignT, preferred_element_type=jnp.float32), 0.0)  # (D, TN)
        out2 = _layer_norm_cols(yT + xT, ghT, bhT)

        # (out_1 + out_2) / 2 ; nn.Dropout(0) is identity.
        xT = (out1 + out2) * 0.5

    out_ref[0] = xT.astype(out_ref.dtype)


def _rep_spec(shape):
    nd = len(shape)
    return pl.BlockSpec(shape, lambda b, _nd=nd: (0,) * _nd)


def prepare_fused_params(T, stgcn_params, hyper_params):
    """One-time parameter fusion (hoisted out of the jitted forward).

    stgcn_params: per-layer (w1t, b1, w2t, b2, a_left, a_right, gamma, beta)
                  with w*t = proj weight applied as  feat @ w*t + b*.
    hyper_params: (edge_clf (D,E), edge_map (E,E), gamma (1,D), beta (1,D)).
    Returns a dict of pre-transposed, pre-fused tensors for the kernel."""
    edge_clf, edge_map, gh, bh = hyper_params
    D = edge_clf.shape[0]
    dtype = edge_clf.dtype
    shift = jnp.eye(T, k=-1, dtype=dtype)          # shift[t, t-1] = 1
    ident = jnp.eye(T, dtype=dtype)

    mT, w12T, browsT, gsT, bsT = [], [], [], [], []
    for (w1t, b1, w2t, b2, al, ar, gs, bs) in stgcn_params:
        m = jnp.kron(shift, al) + jnp.kron(ident, ar)          # (TN, TN)
        mT.append(m.T)                                         # x^T @ M^T form
        w12T.append(jnp.concatenate([w1t, w2t], axis=1).T)     # (2D, D)
        # bias folded through the aggregation:  A @ (xW + 1b) = (Ax)W + rowsum(A) b
        # rowsum includes the zero temporal-pad rows, exactly as in the PyTorch code.
        rs = jnp.sum(al, axis=1) + jnp.sum(ar, axis=1)         # (N,)
        b12 = jnp.concatenate([b1[0], b2[0]])                  # (2D,)
        browsT.append(b12[:, None] * jnp.tile(rs, T)[None, :]) # (2D, TN)
        gsT.append(gs.reshape(D, 1))
        bsT.append(bs.reshape(D, 1))

    return dict(
        mT=jnp.stack(mT),                 # (depth, TN, TN)
        w12T=jnp.stack(w12T),             # (depth, 2D, D)
        browsT=jnp.stack(browsT),         # (depth, 2D, TN)
        gsT=jnp.stack(gsT),               # (depth, D, 1)
        bsT=jnp.stack(bsT),               # (depth, D, 1)
        edge_clfT=edge_clf.T,             # (E, D)
        edge_mapT=edge_map.T,             # (E, E)
        ghT=gh.reshape(D, 1),             # (D, 1)
        bhT=bh.reshape(D, 1),             # (D, 1)
    )


@jax.jit
def stgcn_with_hypergraph_forward(x, fused):
    """x: (B, T, N, D).  fused: output of prepare_fused_params (precomputed once)."""
    B, T, N, D = x.shape
    TN = T * N
    depth = fused['mT'].shape[0]
    E = fused['edge_clfT'].shape[0]

    # (B, T, N, D) -> (B, D, T*N): T*N on the lane axis inside the kernel.
    xT = x.reshape(B, TN, D).transpose(0, 2, 1)

    # Advisory cost hint so XLA overlaps surrounding ops with the custom call.
    matmul_flops = 2 * (D * TN * TN          # aggregation
                        + 2 * D * D * TN     # fused proj_1|proj_2
                        + E * D * TN         # edge scores
                        + D * TN * E         # hyper_feat
                        + D * E * E          # edge_map
                        + D * E * TN)        # y
    flops = B * depth * matmul_flops
    transcendentals = B * depth * E * TN
    param_bytes = 4 * (depth * (TN * TN + 2 * D * D + 2 * D * TN + 2 * D)
                       + E * D + E * E + 2 * D)
    bytes_accessed = jnp.dtype(x.dtype).itemsize * 2 * B * TN * D + param_bytes
    cost = pl.CostEstimate(flops=flops, transcendentals=transcendentals,
                           bytes_accessed=bytes_accessed)

    out = pl.pallas_call(
        _fused_layers_kernel,
        out_shape=jax.ShapeDtypeStruct((B, D, TN), x.dtype),
        grid=(B,),
        in_specs=[
            pl.BlockSpec((1, D, TN), lambda b: (b, 0, 0)),     # x^T rows (lane-dense)
            _rep_spec((depth, TN, TN)),                        # M^T  (fused ST aggregation)
            _rep_spec((depth, 2 * D, D)),                      # (proj_1|proj_2)^T
            _rep_spec((depth, 2 * D, TN)),                     # aggregated bias rows^T
            _rep_spec((depth, D, 1)), _rep_spec((depth, D, 1)),# stgcn LN gamma/beta (D,1)
            _rep_spec((E, D)), _rep_spec((E, E)),              # edge_clf^T, edge_map^T
            _rep_spec((D, 1)), _rep_spec((D, 1)),              # hyper LN gamma/beta (D,1)
        ],
        out_specs=pl.BlockSpec((1, D, TN), lambda b: (b, 0, 0)),
        compiler_params=pltpu.CompilerParams(dimension_semantics=("parallel",)),
        cost_estimate=cost,
    )(xT, fused['mT'], fused['w12T'], fused['browsT'], fused['gsT'], fused['bsT'],
      fused['edge_clfT'], fused['edge_mapT'], fused['ghT'], fused['bhT'])

    return out.transpose(0, 2, 1).reshape(B, T, N, D)


# ----------------------------- pure-JAX reference -------------------------------
def _layer_norm_ref(v, gamma, beta):
    mu = jnp.mean(v, axis=-1, keepdims=True)
    var = jnp.mean(jnp.square(v - mu), axis=-1, keepdims=True)
    return (v - mu) / jnp.sqrt(var + EPS) * gamma + beta


def reference_forward(x, stgcn_params, hyper_params):
    """Faithful translation of the PyTorch forward (time-window loop included)."""
    edge_clf, edge_map, gh, bh = hyper_params
    B, T, N, D = x.shape
    for (w1t, b1, w2t, b2, a_left, a_right, gs, bs) in stgcn_params:
        A = jnp.concatenate([a_left, a_right], axis=1)            # (N, 2N)
        # STGCN branch
        pad = jnp.zeros((B, 1, N, D), x.dtype)
        feat = jnp.concatenate([pad, x], axis=1)
        outs = []
        for t in range(T):
            win = feat[:, t:t + 2].reshape(B, 2 * N, D)
            g1 = jnp.einsum('nm,bmd->bnd', A, win @ w1t + b1)
            g2 = jnp.einsum('nm,bmd->bnd', A, win @ w2t + b2)
            outs.append(jax.nn.relu(g1 * g2) + g1)
        out1 = _layer_norm_ref(jnp.stack(outs, axis=1) + x, gs, bs)
        # Hypergraph branch
        fl = x.reshape(B, T * N, D)
        assign = jax.nn.softmax(fl @ edge_clf, axis=-1)
        hyper_feat = jnp.einsum('bke,bkd->bed', assign, fl)
        mapped = jax.nn.relu(jnp.einsum('ef,bfd->bed', edge_map, hyper_feat))
        hyper_out = mapped + hyper_feat
        y = jax.nn.relu(assign @ hyper_out).reshape(B, T, N, D)
        out2 = _layer_norm_ref(y + x, gh, bh)
        x = 0.5 * (out1 + out2)
    return x


if __name__ == "__main__":
    B, T, N, D, E, DEPTH = 2, 8, 16, 32, 32, 3
    key = jax.random.PRNGKey(0)
    keys = jax.random.split(key, 3 + 5 * DEPTH)
    k_x, k_clf, k_map = keys[0], keys[1], keys[2]
    k_layers = keys[3:]

    x = jax.random.normal(k_x, (B, T, N, D), jnp.float32)

    # HypergraphLearning parameters (shared across depth, as in the module)
    edge_clf = jax.random.normal(k_clf, (D, E), jnp.float32) / math.sqrt(E)
    edge_map = jax.random.normal(k_map, (E, E), jnp.float32) / math.sqrt(E)
    hyper_params = (edge_clf, edge_map,
                    jnp.ones((1, D), jnp.float32), jnp.zeros((1, D), jnp.float32))

    stgcn_params = []
    scale = 1.0 / math.sqrt(D)
    for i in range(DEPTH):
        kw1, kb1, kw2, kb2, kadj = k_layers[5 * i: 5 * i + 5]
        w1t = jax.random.uniform(kw1, (D, D), jnp.float32, -scale, scale)  # proj_1.weight^T
        b1 = jax.random.uniform(kb1, (1, D), jnp.float32, -scale, scale)
        w2t = jax.random.uniform(kw2, (D, D), jnp.float32, -scale, scale)  # proj_2.weight^T
        b2 = jax.random.uniform(kb2, (1, D), jnp.float32, -scale, scale)
        # expanded_adj (N, 2N) split into [A_left | A_right].  Use distinct,
        # non-identity, row-stochastic blocks so the kron/bias folding is exercised.
        # TODO(synk): norm_adj is not defined in the source; row normalization assumed.
        ea = jax.random.uniform(kadj, (N, 2 * N), jnp.float32, 0.05, 1.0)
        ea = ea / jnp.sum(ea, axis=1, keepdims=True)
        a_left, a_right = ea[:, :N], ea[:, N:]
        stgcn_params.append((w1t, b1, w2t, b2, a_left, a_right,
                             jnp.ones((1, D), jnp.float32),
                             jnp.zeros((1, D), jnp.float32)))

    # One-time parameter fusion (kron operator, proj concat, bias folding, transposes).
    fused = prepare_fused_params(T, stgcn_params, hyper_params)
    fused = jax.tree_util.tree_map(jax.block_until_ready, fused)

    out = stgcn_with_hypergraph_forward(x, fused)
    out = jax.block_until_ready(out)

    ref = jax.block_until_ready(reference_forward(x, stgcn_params, hyper_params))

    max_diff = float(jnp.max(jnp.abs(out - ref)))
    assert out.shape == (B, T, N, D)
    assert bool(jnp.all(jnp.isfinite(out)))
    assert max_diff < 5e-2, f"max abs diff vs reference: {max_diff}"
    print("KERNEL_OK")
</pallas_src>

<mosaic_0001>
module attributes {stable_mosaic.version = 11 : i64} {
  func.func @_fused_layers_kernel(%arg0: i32, %arg1: memref<1x32x128xf32, #tpu.memory_space<vmem>>, %arg2: memref<3x128x128xf32, #tpu.memory_space<vmem>>, %arg3: memref<3x64x32xf32, #tpu.memory_space<vmem>>, %arg4: memref<3x64x128xf32, #tpu.memory_space<vmem>>, %arg5: memref<3x32x1xf32, #tpu.memory_space<vmem>>, %arg6: memref<3x32x1xf32, #tpu.memory_space<vmem>>, %arg7: memref<32x32xf32, #tpu.memory_space<vmem>>, %arg8: memref<32x32xf32, #tpu.memory_space<vmem>>, %arg9: memref<32x1xf32, #tpu.memory_space<vmem>>, %arg10: memref<32x1xf32, #tpu.memory_space<vmem>>, %arg11: memref<1x32x128xf32, #tpu.memory_space<vmem>>) attributes {dimension_semantics = [#tpu.dimension_semantics<parallel>], iteration_bounds = array<i64: 2>, scalar_prefetch = 0 : i64, scratch_operands = 0 : i64, tpu.core_type = #tpu.core_type<tc>, window_params = [{transform_indices = @transform_0, window_bounds = array<i64: 1, 32, 128>}, {pipeline_mode = #tpu.pipeline_mode<synchronous>, transform_indices = @transform_1, window_bounds = array<i64: 3, 128, 128>}, {pipeline_mode = #tpu.pipeline_mode<synchronous>, transform_indices = @transform_2, window_bounds = array<i64: 3, 64, 32>}, {pipeline_mode = #tpu.pipeline_mode<synchronous>, transform_indices = @transform_3, window_bounds = array<i64: 3, 64, 128>}, {pipeline_mode = #tpu.pipeline_mode<synchronous>, transform_indices = @transform_4, window_bounds = array<i64: 3, 32, 1>}, {pipeline_mode = #tpu.pipeline_mode<synchronous>, transform_indices = @transform_5, window_bounds = array<i64: 3, 32, 1>}, {pipeline_mode = #tpu.pipeline_mode<synchronous>, transform_indices = @transform_6, window_bounds = array<i64: 32, 32>}, {pipeline_mode = #tpu.pipeline_mode<synchronous>, transform_indices = @transform_7, window_bounds = array<i64: 32, 32>}, {pipeline_mode = #tpu.pipeline_mode<synchronous>, transform_indices = @transform_8, window_bounds = array<i64: 32, 1>}, {pipeline_mode = #tpu.pipeline_mode<synchronous>, transform_indices = @transform_9, window_bounds = array<i64: 32, 1>}, {transform_indices = @transform_10, window_bounds = array<i64: 1, 32, 128>}]} {
    %c0 = arith.constant 0 : index
    %c0_0 = arith.constant 0 : index
    %c0_1 = arith.constant 0 : index
    %0 = vector.load %arg1[%c0, %c0_0, %c0_1] : memref<1x32x128xf32, #tpu.memory_space<vmem>>, vector<1x32x128xf32>
    %1 = vector.shape_cast %0 : vector<1x32x128xf32> to vector<32x128xf32>
    %c0_2 = arith.constant 0 : index
    %c0_3 = arith.constant 0 : index
    %2 = vector.load %arg7[%c0_2, %c0_3] : memref<32x32xf32, #tpu.memory_space<vmem>>, vector<32x32xf32>
    %c0_4 = arith.constant 0 : index
    %c0_5 = arith.constant 0 : index
    %3 = vector.load %arg8[%c0_4, %c0_5] : memref<32x32xf32, #tpu.memory_space<vmem>>, vector<32x32xf32>
    %c0_6 = arith.constant 0 : index
    %c0_7 = arith.constant 0 : index
    %4 = vector.load %arg9[%c0_6, %c0_7] : memref<32x1xf32, #tpu.memory_space<vmem>>, vector<32x1xf32>
    %c0_8 = arith.constant 0 : index
    %c0_9 = arith.constant 0 : index
    %5 = vector.load %arg10[%c0_8, %c0_9] : memref<32x1xf32, #tpu.memory_space<vmem>>, vector<32x1xf32>
    %c0_10 = arith.constant 0 : index
    %c0_11 = arith.constant 0 : index
    %c0_12 = arith.constant 0 : index
    %6 = vector.load %arg2[%c0_10, %c0_11, %c0_12] : memref<3x128x128xf32, #tpu.memory_space<vmem>>, vector<1x128x128xf32>
    %7 = vector.shape_cast %6 : vector<1x128x128xf32> to vector<128x128xf32>
    %cst = arith.constant dense<0.000000e+00> : vector<32x128xf32>
    %8 = tpu.matmul %1, %7, %cst {dimension_numbers = #tpu.dot_dimension_numbers<[1], [0], [0], [1], [0, 0, 1, 1], [], []>} : vector<32x128xf32>, vector<128x128xf32>, vector<32x128xf32> -> vector<32x128xf32>
    %c0_13 = arith.constant 0 : index
    %c0_14 = arith.constant 0 : index
    %c0_15 = arith.constant 0 : index
    %9 = vector.load %arg3[%c0_13, %c0_14, %c0_15] : memref<3x64x32xf32, #tpu.memory_space<vmem>>, vector<1x64x32xf32>
    %10 = vector.shape_cast %9 : vector<1x64x32xf32> to vector<64x32xf32>
    %cst_16 = arith.constant dense<0.000000e+00> : vector<64x128xf32>
    %11 = tpu.matmul %10, %8, %cst_16 {dimension_numbers = #tpu.dot_dimension_numbers<[1], [0], [0], [1], [0, 0, 1, 1], [], []>} : vector<64x32xf32>, vector<32x128xf32>, vector<64x128xf32> -> vector<64x128xf32>
    %c0_17 = arith.constant 0 : index
    %c0_18 = arith.constant 0 : index
    %c0_19 = arith.constant 0 : index
    %12 = vector.load %arg4[%c0_17, %c0_18, %c0_19] : memref<3x64x128xf32, #tpu.memory_space<vmem>>, vector<1x64x128xf32>
    %13 = vector.shape_cast %12 : vector<1x64x128xf32> to vector<64x128xf32>
    %14 = arith.addf %11, %13 : vector<64x128xf32>
    %15 = vector.extract_strided_slice %14 {offsets = [0, 0], sizes = [32, 128], strides = [1, 1]} : vector<64x128xf32> to vector<32x128xf32>
    %16 = vector.extract_strided_slice %14 {offsets = [32, 0], sizes = [32, 128], strides = [1, 1]} : vector<64x128xf32> to vector<32x128xf32>
    %17 = arith.mulf %15, %16 : vector<32x128xf32>
    %cst_20 = arith.constant 0.000000e+00 : f32
    %18 = vector.broadcast %cst_20 : f32 to vector<32x128xf32>
    %19 = arith.maximumf %17, %18 : vector<32x128xf32>
    %20 = arith.addf %19, %15 : vector<32x128xf32>
    %21 = arith.addf %20, %1 : vector<32x128xf32>
    %c0_21 = arith.constant 0 : index
    %c0_22 = arith.constant 0 : index
    %c0_23 = arith.constant 0 : index
    %22 = vector.load %arg5[%c0_21, %c0_22, %c0_23] : memref<3x32x1xf32, #tpu.memory_space<vmem>>, vector<1x32x1xf32>
    %23 = vector.shape_cast %22 : vector<1x32x1xf32> to vector<32x1xf32>
    %c0_24 = arith.constant 0 : index
    %c0_25 = arith.constant 0 : index
    %c0_26 = arith.constant 0 : index
    %24 = vector.load %arg6[%c0_24, %c0_25, %c0_26] : memref<3x32x1xf32, #tpu.memory_space<vmem>>, vector<1x32x1xf32>
    %25 = vector.shape_cast %24 : vector<1x32x1xf32> to vector<32x1xf32>
    %cst_27 = arith.constant dense<0.000000e+00> : vector<128xf32>
    %26 = vector.multi_reduction <add>, %21, %cst_27 [0] : vector<32x128xf32> to vector<128xf32>
    %27 = vector.shape_cast %26 : vector<128xf32> to vector<1x128xf32>
    %cst_28 = arith.constant 3.200000e+01 : f32
    %28 = vector.broadcast %cst_28 : f32 to vector<1x128xf32>
    %29 = arith.divf %27, %28 : vector<1x128xf32>
    %30 = vector.broadcast %29 : vector<1x128xf32> to vector<32x128xf32>
    %31 = arith.subf %21, %30 : vector<32x128xf32>
    %32 = arith.mulf %31, %31 : vector<32x128xf32>
    %cst_29 = arith.constant dense<0.000000e+00> : vector<128xf32>
    %33 = vector.multi_reduction <add>, %32, %cst_29 [0] : vector<32x128xf32> to vector<128xf32>
    %34 = vector.shape_cast %33 : vector<128xf32> to vector<1x128xf32>
    %cst_30 = arith.constant 3.200000e+01 : f32
    %35 = vector.broadcast %cst_30 : f32 to vector<1x128xf32>
    %36 = arith.divf %34, %35 : vector<1x128xf32>
    %37 = vector.broadcast %29 : vector<1x128xf32> to vector<32x128xf32>
    %38 = arith.subf %21, %37 : vector<32x128xf32>
    %cst_31 = arith.constant 9.99999974E-6 : f32
    %39 = vector.broadcast %cst_31 : f32 to vector<1x128xf32>
    %40 = arith.addf %36, %39 : vector<1x128xf32>
    %41 = math.rsqrt %40 : vector<1x128xf32>
    %42 = vector.broadcast %41 : vector<1x128xf32> to vector<32x128xf32>
    %43 = arith.mulf %38, %42 : vector<32x128xf32>
    %44 = vector.broadcast %23 : vector<32x1xf32> to vector<32x128xf32>
    %45 = arith.mulf %43, %44 : vector<32x128xf32>
    %46 = vector.broadcast %25 : vector<32x1xf32> to vector<32x128xf32>
    %47 = arith.addf %45, %46 : vector<32x128xf32>
    %cst_32 = arith.constant dense<0.000000e+00> : vector<32x128xf32>
    %48 = tpu.matmul %2, %1, %cst_32 {dimension_numbers = #tpu.dot_dimension_numbers<[1], [0], [0], [1], [0, 0, 1, 1], [], []>} : vector<32x32xf32>, vector<32x128xf32>, vector<32x128xf32> -> vector<32x128xf32>
    %cst_33 = arith.constant dense<0xFF800000> : vector<128xf32>
    %49 = vector.multi_reduction <maximumf>, %48, %cst_33 [0] : vector<32x128xf32> to vector<128xf32>
    %50 = vector.shape_cast %49 : vector<128xf32> to vector<1x128xf32>
    %51 = vector.broadcast %50 : vector<1x128xf32> to vector<32x128xf32>
    %52 = arith.subf %48, %51 : vector<32x128xf32>
    %53 = math.exp %52 : vector<32x128xf32>
    %cst_34 = arith.constant dense<0.000000e+00> : vector<128xf32>
    %54 = vector.multi_reduction <add>, %53, %cst_34 [0] : vector<32x128xf32> to vector<128xf32>
    %55 = vector.shape_cast %54 : vector<128xf32> to vector<1x128xf32>
    %56 = tpu.reciprocal %55 {approx = true} : vector<1x128xf32> -> vector<1x128xf32>
    %57 = vector.broadcast %56 : vector<1x128xf32> to vector<32x128xf32>
    %58 = arith.mulf %53, %57 : vector<32x128xf32>
    %cst_35 = arith.constant dense<0.000000e+00> : vector<32x32xf32>
    %59 = tpu.matmul %1, %58, %cst_35 {dimension_numbers = #tpu.dot_dimension_numbers<[1], [1], [0], [0], [0, 0, 1, 0], [], []>} : vector<32x128xf32>, vector<32x128xf32>, vector<32x32xf32> -> vector<32x32xf32>
    %cst_36 = arith.constant dense<0.000000e+00> : vector<32x32xf32>
    %60 = tpu.matmul %59, %3, %cst_36 {dimension_numbers = #tpu.dot_dimension_numbers<[1], [0], [0], [1], [0, 0, 1, 1], [], []>} : vector<32x32xf32>, vector<32x32xf32>, vector<32x32xf32> -> vector<32x32xf32>
    %cst_37 = arith.constant 0.000000e+00 : f32
    %61 = vector.broadcast %cst_37 : f32 to vector<32x32xf32>
    %62 = arith.maximumf %60, %61 : vector<32x32xf32>
    %63 = arith.addf %62, %59 : vector<32x32xf32>
    %cst_38 = arith.constant dense<0.000000e+00> : vector<32x128xf32>
    %64 = tpu.matmul %63, %58, %cst_38 {dimension_numbers = #tpu.dot_dimension_numbers<[1], [0], [0], [1], [0, 0, 1, 1], [], []>} : vector<32x32xf32>, vector<32x128xf32>, vector<32x128xf32> -> vector<32x128xf32>
    %cst_39 = arith.constant 0.000000e+00 : f32
    %65 = vector.broadcast %cst_39 : f32 to vector<32x128xf32>
    %66 = arith.maximumf %64, %65 : vector<32x128xf32>
    %67 = arith.addf %66, %1 : vector<32x128xf32>
    %cst_40 = arith.constant dense<0.000000e+00> : vector<128xf32>
    %68 = vector.multi_reduction <add>, %67, %cst_40 [0] : vector<32x128xf32> to vector<128xf32>
    %69 = vector.shape_cast %68 : vector<128xf32> to vector<1x128xf32>
    %cst_41 = arith.constant 3.200000e+01 : f32
    %70 = vector.broadcast %cst_41 : f32 to vector<1x128xf32>
    %71 = arith.divf %69, %70 : vector<1x128xf32>
    %72 = vector.broadcast %71 : vector<1x128xf32> to vector<32x128xf32>
    %73 = arith.subf %67, %72 : vector<32x128xf32>
    %74 = arith.mulf %73, %73 : vector<32x128xf32>
    %cst_42 = arith.constant dense<0.000000e+00> : vector<128xf32>
    %75 = vector.multi_reduction <add>, %74, %cst_42 [0] : vector<32x128xf32> to vector<128xf32>
    %76 = vector.shape_cast %75 : vector<128xf32> to vector<1x128xf32>
    %cst_43 = arith.constant 3.200000e+01 : f32
    %77 = vector.broadcast %cst_43 : f32 to vector<1x128xf32>
    %78 = arith.divf %76, %77 : vector<1x128xf32>
    %79 = vector.broadcast %71 : vector<1x128xf32> to vector<32x128xf32>
    %80 = arith.subf %67, %79 : vector<32x128xf32>
    %cst_44 = arith.constant 9.99999974E-6 : f32
    %81 = vector.broadcast %cst_44 : f32 to vector<1x128xf32>
    %82 = arith.addf %78, %81 : vector<1x128xf32>
    %83 = math.rsqrt %82 : vector<1x128xf32>
    %84 = vector.broadcast %83 : vector<1x128xf32> to vector<32x128xf32>
    %85 = arith.mulf %80, %84 : vector<32x128xf32>
    %86 = vector.broadcast %4 : vector<32x1xf32> to vector<32x128xf32>
    %87 = arith.mulf %85, %86 : vector<32x128xf32>
    %88 = vector.broadcast %5 : vector<32x1xf32> to vector<32x128xf32>
    %89 = arith.addf %87, %88 : vector<32x128xf32>
    %90 = arith.addf %47, %89 : vector<32x128xf32>
    %cst_45 = arith.constant 5.000000e-01 : f32
    %91 = vector.broadcast %cst_45 : f32 to vector<32x128xf32>
    %92 = arith.mulf %90, %91 : vector<32x128xf32>
    %c1 = arith.constant 1 : index
    %c0_46 = arith.constant 0 : index
    %c0_47 = arith.constant 0 : index
    %93 = vector.load %arg2[%c1, %c0_46, %c0_47] : memref<3x128x128xf32, #tpu.memory_space<vmem>>, vector<1x128x128xf32>
    %94 = vector.shape_cast %93 : vector<1x128x128xf32> to vector<128x128xf32>
    %cst_48 = arith.constant dense<0.000000e+00> : vector<32x128xf32>
    %95 = tpu.matmul %92, %94, %cst_48 {dimension_numbers = #tpu.dot_dimension_numbers<[1], [0], [0], [1], [0, 0, 1, 1], [], []>} : vector<32x128xf32>, vector<128x128xf32>, vector<32x128xf32> -> vector<32x128xf32>
    %c1_49 = arith.constant 1 : index
    %c0_50 = arith.constant 0 : index
    %c0_51 = arith.constant 0 : index
    %96 = vector.load %arg3[%c1_49, %c0_50, %c0_51] : memref<3x64x32xf32, #tpu.memory_space<vmem>>, vector<1x64x32xf32>
    %97 = vector.shape_cast %96 : vector<1x64x32xf32> to vector<64x32xf32>
    %cst_52 = arith.constant dense<0.000000e+00> : vector<64x128xf32>
    %98 = tpu.matmul %97, %95, %cst_52 {dimension_numbers = #tpu.dot_dimension_numbers<[1], [0], [0], [1], [0, 0, 1, 1], [], []>} : vector<64x32xf32>, vector<32x128xf32>, vector<64x128xf32> -> vector<64x128xf32>
    %c1_53 = arith.constant 1 : index
    %c0_54 = arith.constant 0 : index
    %c0_55 = arith.constant 0 : index
    %99 = vector.load %arg4[%c1_53, %c0_54, %c0_55] : memref<3x64x128xf32, #tpu.memory_space<vmem>>, vector<1x64x128xf32>
    %100 = vector.shape_cast %99 : vector<1x64x128xf32> to vector<64x128xf32>
    %101 = arith.addf %98, %100 : vector<64x128xf32>
    %102 = vector.extract_strided_slice %101 {offsets = [0, 0], sizes = [32, 128], strides = [1, 1]} : vector<64x128xf32> to vector<32x128xf32>
    %103 = vector.extract_strided_slice %101 {offsets = [32, 0], sizes = [32, 128], strides = [1, 1]} : vector<64x128xf32> to vector<32x128xf32>
    %104 = arith.mulf %102, %103 : vector<32x128xf32>
    %cst_56 = arith.constant 0.000000e+00 : f32
    %105 = vector.broadcast %cst_56 : f32 to vector<32x128xf32>
    %106 = arith.maximumf %104, %105 : vector<32x128xf32>
    %107 = arith.addf %106, %102 : vector<32x128xf32>
    %108 = arith.addf %107, %92 : vector<32x128xf32>
    %c1_57 = arith.constant 1 : index
    %c0_58 = arith.constant 0 : index
    %c0_59 = arith.constant 0 : index
    %109 = vector.load %arg5[%c1_57, %c0_58, %c0_59] : memref<3x32x1xf32, #tpu.memory_space<vmem>>, vector<1x32x1xf32>
    %110 = vector.shape_cast %109 : vector<1x32x1xf32> to vector<32x1xf32>
    %c1_60 = arith.constant 1 : index
    %c0_61 = arith.constant 0 : index
    %c0_62 = arith.constant 0 : index
    %111 = vector.load %arg6[%c1_60, %c0_61, %c0_62] : memref<3x32x1xf32, #tpu.memory_space<vmem>>, vector<1x32x1xf32>
    %112 = vector.shape_cast %111 : vector<1x32x1xf32> to vector<32x1xf32>
    %cst_63 = arith.constant dense<0.000000e+00> : vector<128xf32>
    %113 = vector.multi_reduction <add>, %108, %cst_63 [0] : vector<32x128xf32> to vector<128xf32>
    %114 = vector.shape_cast %113 : vector<128xf32> to vector<1x128xf32>
    %cst_64 = arith.constant 3.200000e+01 : f32
    %115 = vector.broadcast %cst_64 : f32 to vector<1x128xf32>
    %116 = arith.divf %114, %115 : vector<1x128xf32>
    %117 = vector.broadcast %116 : vector<1x128xf32> to vector<32x128xf32>
    %118 = arith.subf %108, %117 : vector<32x128xf32>
    %119 = arith.mulf %118, %118 : vector<32x128xf32>
    %cst_65 = arith.constant dense<0.000000e+00> : vector<128xf32>
    %120 = vector.multi_reduction <add>, %119, %cst_65 [0] : vector<32x128xf32> to vector<128xf32>
    %121 = vector.shape_cast %120 : vector<128xf32> to vector<1x128xf32>
    %cst_66 = arith.constant 3.200000e+01 : f32
    %122 = vector.broadcast %cst_66 : f32 to vector<1x128xf32>
    %123 = arith.divf %121, %122 : vector<1x128xf32>
    %124 = vector.broadcast %116 : vector<1x128xf32> to vector<32x128xf32>
    %125 = arith.subf %108, %124 : vector<32x128xf32>
    %cst_67 = arith.constant 9.99999974E-6 : f32
    %126 = vector.broadcast %cst_67 : f32 to vector<1x128xf32>
    %127 = arith.addf %123, %126 : vector<1x128xf32>
    %128 = math.rsqrt %127 : vector<1x128xf32>
    %129 = vector.broadcast %128 : vector<1x128xf32> to vector<32x128xf32>
    %130 = arith.mulf %125, %129 : vector<32x128xf32>
    %131 = vector.broadcast %110 : vector<32x1xf32> to vector<32x128xf32>
    %132 = arith.mulf %130, %131 : vector<32x128xf32>
    %133 = vector.broadcast %112 : vector<32x1xf32> to vector<32x128xf32>
    %134 = arith.addf %132, %133 : vector<32x128xf32>
    %cst_68 = arith.constant dense<0.000000e+00> : vector<32x128xf32>
    %135 = tpu.matmul %2, %92, %cst_68 {dimension_numbers = #tpu.dot_dimension_numbers<[1], [0], [0], [1], [0, 0, 1, 1], [], []>} : vector<32x32xf32>, vector<32x128xf32>, vector<32x128xf32> -> vector<32x128xf32>
    %cst_69 = arith.constant dense<0xFF800000> : vector<128xf32>
    %136 = vector.multi_reduction <maximumf>, %135, %cst_69 [0] : vector<32x128xf32> to vector<128xf32>
    %137 = vector.shape_cast %136 : vector<128xf32> to vector<1x128xf32>
    %138 = vector.broadcast %137 : vector<1x128xf32> to vector<32x128xf32>
    %139 = arith.subf %135, %138 : vector<32x128xf32>
    %140 = math.exp %139 : vector<32x128xf32>
    %cst_70 = arith.constant dense<0.000000e+00> : vector<128xf32>
    %141 = vector.multi_reduction <add>, %140, %cst_70 [0] : vector<32x128xf32> to vector<128xf32>
    %142 = vector.shape_cast %141 : vector<128xf32> to vector<1x128xf32>
    %143 = tpu.reciprocal %142 {approx = true} : vector<1x128xf32> -> vector<1x128xf32>
    %144 = vector.broadcast %143 : vector<1x128xf32> to vector<32x128xf32>
    %145 = arith.mulf %140, %144 : vector<32x128xf32>
    %cst_71 = arith.constant dense<0.000000e+00> : vector<32x32xf32>
    %146 = tpu.matmul %92, %145, %cst_71 {dimension_numbers = #tpu.dot_dimension_numbers<[1], [1], [0], [0], [0, 0, 1, 0], [], []>} : vector<32x128xf32>, vector<32x128xf32>, vector<32x32xf32> -> vector<32x32xf32>
    %cst_72 = arith.constant dense<0.000000e+00> : vector<32x32xf32>
    %147 = tpu.matmul %146, %3, %cst_72 {dimension_numbers = #tpu.dot_dimension_numbers<[1], [0], [0], [1], [0, 0, 1, 1], [], []>} : vector<32x32xf32>, vector<32x32xf32>, vector<32x32xf32> -> vector<32x32xf32>
    %cst_73 = arith.constant 0.000000e+00 : f32
    %148 = vector.broadcast %cst_73 : f32 to vector<32x32xf32>
    %149 = arith.maximumf %147, %148 : vector<32x32xf32>
    %150 = arith.addf %149, %146 : vector<32x32xf32>
    %cst_74 = arith.constant dense<0.000000e+00> : vector<32x128xf32>
    %151 = tpu.matmul %150, %145, %cst_74 {dimension_numbers = #tpu.dot_dimension_numbers<[1], [0], [0], [1], [0, 0, 1, 1], [], []>} : vector<32x32xf32>, vector<32x128xf32>, vector<32x128xf32> -> vector<32x128xf32>
    %cst_75 = arith.constant 0.000000e+00 : f32
    %152 = vector.broadcast %cst_75 : f32 to vector<32x128xf32>
    %153 = arith.maximumf %151, %152 : vector<32x128xf32>
    %154 = arith.addf %153, %92 : vector<32x128xf32>
    %cst_76 = arith.constant dense<0.000000e+00> : vector<128xf32>
    %155 = vector.multi_reduction <add>, %154, %cst_76 [0] : vector<32x128xf32> to vector<128xf32>
    %156 = vector.shape_cast %155 : vector<128xf32> to vector<1x128xf32>
    %cst_77 = arith.constant 3.200000e+01 : f32
    %157 = vector.broadcast %cst_77 : f32 to vector<1x128xf32>
    %158 = arith.divf %156, %157 : vector<1x128xf32>
    %159 = vector.broadcast %158 : vector<1x128xf32> to vector<32x128xf32>
    %160 = arith.subf %154, %159 : vector<32x128xf32>
    %161 = arith.mulf %160, %160 : vector<32x128xf32>
    %cst_78 = arith.constant dense<0.000000e+00> : vector<128xf32>
    %162 = vector.multi_reduction <add>, %161, %cst_78 [0] : vector<32x128xf32> to vector<128xf32>
    %163 = vector.shape_cast %162 : vector<128xf32> to vector<1x128xf32>
    %cst_79 = arith.constant 3.200000e+01 : f32
    %164 = vector.broadcast %cst_79 : f32 to vector<1x128xf32>
    %165 = arith.divf %163, %164 : vector<1x128xf32>
    %166 = vector.broadcast %158 : vector<1x128xf32> to vector<32x128xf32>
    %167 = arith.subf %154, %166 : vector<32x128xf32>
    %cst_80 = arith.constant 9.99999974E-6 : f32
    %168 = vector.broadcast %cst_80 : f32 to vector<1x128xf32>
    %169 = arith.addf %165, %168 : vector<1x128xf32>
    %170 = math.rsqrt %169 : vector<1x128xf32>
    %171 = vector.broadcast %170 : vector<1x128xf32> to vector<32x128xf32>
    %172 = arith.mulf %167, %171 : vector<32x128xf32>
    %173 = vector.broadcast %4 : vector<32x1xf32> to vector<32x128xf32>
    %174 = arith.mulf %172, %173 : vector<32x128xf32>
    %175 = vector.broadcast %5 : vector<32x1xf32> to vector<32x128xf32>
    %176 = arith.addf %174, %175 : vector<32x128xf32>
    %177 = arith.addf %134, %176 : vector<32x128xf32>
    %cst_81 = arith.constant 5.000000e-01 : f32
    %178 = vector.broadcast %cst_81 : f32 to vector<32x128xf32>
    %179 = arith.mulf %177, %178 : vector<32x128xf32>
    %c2 = arith.constant 2 : index
    %c0_82 = arith.constant 0 : index
    %c0_83 = arith.constant 0 : index
    %180 = vector.load %arg2[%c2, %c0_82, %c0_83] : memref<3x128x128xf32, #tpu.memory_space<vmem>>, vector<1x128x128xf32>
    %181 = vector.shape_cast %180 : vector<1x128x128xf32> to vector<128x128xf32>
    %cst_84 = arith.constant dense<0.000000e+00> : vector<32x128xf32>
    %182 = tpu.matmul %179, %181, %cst_84 {dimension_numbers = #tpu.dot_dimension_numbers<[1], [0], [0], [1], [0, 0, 1, 1], [], []>} : vector<32x128xf32>, vector<128x128xf32>, vector<32x128xf32> -> vector<32x128xf32>
    %c2_85 = arith.constant 2 : index
    %c0_86 = arith.constant 0 : index
    %c0_87 = arith.constant 0 : index
    %183 = vector.load %arg3[%c2_85, %c0_86, %c0_87] : memref<3x64x32xf32, #tpu.memory_space<vmem>>, vector<1x64x32xf32>
    %184 = vector.shape_cast %183 : vector<1x64x32xf32> to vector<64x32xf32>
    %cst_88 = arith.constant dense<0.000000e+00> : vector<64x128xf32>
    %185 = tpu.matmul %184, %182, %cst_88 {dimension_numbers = #tpu.dot_dimension_numbers<[1], [0], [0], [1], [0, 0, 1, 1], [], []>} : vector<64x32xf32>, vector<32x128xf32>, vector<64x128xf32> -> vector<64x128xf32>
    %c2_89 = arith.constant 2 : index
    %c0_90 = arith.constant 0 : index
    %c0_91 = arith.constant 0 : index
    %186 = vector.load %arg4[%c2_89, %c0_90, %c0_91] : memref<3x64x128xf32, #tpu.memory_space<vmem>>, vector<1x64x128xf32>
    %187 = vector.shape_cast %186 : vector<1x64x128xf32> to vector<64x128xf32>
    %188 = arith.addf %185, %187 : vector<64x128xf32>
    %189 = vector.extract_strided_slice %188 {offsets = [0, 0], sizes = [32, 128], strides = [1, 1]} : vector<64x128xf32> to vector<32x128xf32>
    %190 = vector.extract_strided_slice %188 {offsets = [32, 0], sizes = [32, 128], strides = [1, 1]} : vector<64x128xf32> to vector<32x128xf32>
    %191 = arith.mulf %189, %190 : vector<32x128xf32>
    %cst_92 = arith.constant 0.000000e+00 : f32
    %192 = vector.broadcast %cst_92 : f32 to vector<32x128xf32>
    %193 = arith.maximumf %191, %192 : vector<32x128xf32>
    %194 = arith.addf %193, %189 : vector<32x128xf32>
    %195 = arith.addf %194, %179 : vector<32x128xf32>
    %c2_93 = arith.constant 2 : index
    %c0_94 = arith.constant 0 : index
    %c0_95 = arith.constant 0 : index
    %196 = vector.load %arg5[%c2_93, %c0_94, %c0_95] : memref<3x32x1xf32, #tpu.memory_space<vmem>>, vector<1x32x1xf32>
    %197 = vector.shape_cast %196 : vector<1x32x1xf32> to vector<32x1xf32>
    %c2_96 = arith.constant 2 : index
    %c0_97 = arith.constant 0 : index
    %c0_98 = arith.constant 0 : index
    %198 = vector.load %arg6[%c2_96, %c0_97, %c0_98] : memref<3x32x1xf32, #tpu.memory_space<vmem>>, vector<1x32x1xf32>
    %199 = vector.shape_cast %198 : vector<1x32x1xf32> to vector<32x1xf32>
    %cst_99 = arith.constant dense<0.000000e+00> : vector<128xf32>
    %200 = vector.multi_reduction <add>, %195, %cst_99 [0] : vector<32x128xf32> to vector<128xf32>
    %201 = vector.shape_cast %200 : vector<128xf32> to vector<1x128xf32>
    %cst_100 = arith.constant 3.200000e+01 : f32
    %202 = vector.broadcast %cst_100 : f32 to vector<1x128xf32>
    %203 = arith.divf %201, %202 : vector<1x128xf32>
    %204 = vector.broadcast %203 : vector<1x128xf32> to vector<32x128xf32>
    %205 = arith.subf %195, %204 : vector<32x128xf32>
    %206 = arith.mulf %205, %205 : vector<32x128xf32>
    %cst_101 = arith.constant dense<0.000000e+00> : vector<128xf32>
    %207 = vector.multi_reduction <add>, %206, %cst_101 [0] : vector<32x128xf32> to vector<128xf32>
    %208 = vector.shape_cast %207 : vector<128xf32> to vector<1x128xf32>
    %cst_102 = arith.constant 3.200000e+01 : f32
    %209 = vector.broadcast %cst_102 : f32 to vector<1x128xf32>
    %210 = arith.divf %208, %209 : vector<1x128xf32>
    %211 = vector.broadcast %203 : vector<1x128xf32> to vector<32x128xf32>
    %212 = arith.subf %195, %211 : vector<32x128xf32>
    %cst_103 = arith.constant 9.99999974E-6 : f32
    %213 = vector.broadcast %cst_103 : f32 to vector<1x128xf32>
    %214 = arith.addf %210, %213 : vector<1x128xf32>
    %215 = math.rsqrt %214 : vector<1x128xf32>
    %216 = vector.broadcast %215 : vector<1x128xf32> to vector<32x128xf32>
    %217 = arith.mulf %212, %216 : vector<32x128xf32>
    %218 = vector.broadcast %197 : vector<32x1xf32> to vector<32x128xf32>
    %219 = arith.mulf %217, %218 : vector<32x128xf32>
    %220 = vector.broadcast %199 : vector<32x1xf32> to vector<32x128xf32>
    %221 = arith.addf %219, %220 : vector<32x128xf32>
    %cst_104 = arith.constant dense<0.000000e+00> : vector<32x128xf32>
    %222 = tpu.matmul %2, %179, %cst_104 {dimension_numbers = #tpu.dot_dimension_numbers<[1], [0], [0], [1], [0, 0, 1, 1], [], []>} : vector<32x32xf32>, vector<32x128xf32>, vector<32x128xf32> -> vector<32x128xf32>
    %cst_105 = arith.constant dense<0xFF800000> : vector<128xf32>
    %223 = vector.multi_reduction <maximumf>, %222, %cst_105 [0] : vector<32x128xf32> to vector<128xf32>
    %224 = vector.shape_cast %223 : vector<128xf32> to vector<1x128xf32>
    %225 = vector.broadcast %224 : vector<1x128xf32> to vector<32x128xf32>
    %226 = arith.subf %222, %225 : vector<32x128xf32>
    %227 = math.exp %226 : vector<32x128xf32>
    %cst_106 = arith.constant dense<0.000000e+00> : vector<128xf32>
    %228 = vector.multi_reduction <add>, %227, %cst_106 [0] : vector<32x128xf32> to vector<128xf32>
    %229 = vector.shape_cast %228 : vector<128xf32> to vector<1x128xf32>
    %230 = tpu.reciprocal %229 {approx = true} : vector<1x128xf32> -> vector<1x128xf32>
    %231 = vector.broadcast %230 : vector<1x128xf32> to vector<32x128xf32>
    %232 = arith.mulf %227, %231 : vector<32x128xf32>
    %cst_107 = arith.constant dense<0.000000e+00> : vector<32x32xf32>
    %233 = tpu.matmul %179, %232, %cst_107 {dimension_numbers = #tpu.dot_dimension_numbers<[1], [1], [0], [0], [0, 0, 1, 0], [], []>} : vector<32x128xf32>, vector<32x128xf32>, vector<32x32xf32> -> vector<32x32xf32>
    %cst_108 = arith.constant dense<0.000000e+00> : vector<32x32xf32>
    %234 = tpu.matmul %233, %3, %cst_108 {dimension_numbers = #tpu.dot_dimension_numbers<[1], [0], [0], [1], [0, 0, 1, 1], [], []>} : vector<32x32xf32>, vector<32x32xf32>, vector<32x32xf32> -> vector<32x32xf32>
    %cst_109 = arith.constant 0.000000e+00 : f32
    %235 = vector.broadcast %cst_109 : f32 to vector<32x32xf32>
    %236 = arith.maximumf %234, %235 : vector<32x32xf32>
    %237 = arith.addf %236, %233 : vector<32x32xf32>
    %cst_110 = arith.constant dense<0.000000e+00> : vector<32x128xf32>
    %238 = tpu.matmul %237, %232, %cst_110 {dimension_numbers = #tpu.dot_dimension_numbers<[1], [0], [0], [1], [0, 0, 1, 1], [], []>} : vector<32x32xf32>, vector<32x128xf32>, vector<32x128xf32> -> vector<32x128xf32>
    %cst_111 = arith.constant 0.000000e+00 : f32
    %239 = vector.broadcast %cst_111 : f32 to vector<32x128xf32>
    %240 = arith.maximumf %238, %239 : vector<32x128xf32>
    %241 = arith.addf %240, %179 : vector<32x128xf32>
    %cst_112 = arith.constant dense<0.000000e+00> : vector<128xf32>
    %242 = vector.multi_reduction <add>, %241, %cst_112 [0] : vector<32x128xf32> to vector<128xf32>
    %243 = vector.shape_cast %242 : vector<128xf32> to vector<1x128xf32>
    %cst_113 = arith.constant 3.200000e+01 : f32
    %244 = vector.broadcast %cst_113 : f32 to vector<1x128xf32>
    %245 = arith.divf %243, %244 : vector<1x128xf32>
    %246 = vector.broadcast %245 : vector<1x128xf32> to vector<32x128xf32>
    %247 = arith.subf %241, %246 : vector<32x128xf32>
    %248 = arith.mulf %247, %247 : vector<32x128xf32>
    %cst_114 = arith.constant dense<0.000000e+00> : vector<128xf32>
    %249 = vector.multi_reduction <add>, %248, %cst_114 [0] : vector<32x128xf32> to vector<128xf32>
    %250 = vector.shape_cast %249 : vector<128xf32> to vector<1x128xf32>
    %cst_115 = arith.constant 3.200000e+01 : f32
    %251 = vector.broadcast %cst_115 : f32 to vector<1x128xf32>
    %252 = arith.divf %250, %251 : vector<1x128xf32>
    %253 = vector.broadcast %245 : vector<1x128xf32> to vector<32x128xf32>
    %254 = arith.subf %241, %253 : vector<32x128xf32>
    %cst_116 = arith.constant 9.99999974E-6 : f32
    %255 = vector.broadcast %cst_116 : f32 to vector<1x128xf32>
    %256 = arith.addf %252, %255 : vector<1x128xf32>
    %257 = math.rsqrt %256 : vector<1x128xf32>
    %258 = vector.broadcast %257 : vector<1x128xf32> to vector<32x128xf32>
    %259 = arith.mulf %254, %258 : vector<32x128xf32>
    %260 = vector.broadcast %4 : vector<32x1xf32> to vector<32x128xf32>
    %261 = arith.mulf %259, %260 : vector<32x128xf32>
    %262 = vector.broadcast %5 : vector<32x1xf32> to vector<32x128xf32>
    %263 = arith.addf %261, %262 : vector<32x128xf32>
    %264 = arith.addf %221, %263 : vector<32x128xf32>
    %cst_117 = arith.constant 5.000000e-01 : f32
    %265 = vector.broadcast %cst_117 : f32 to vector<32x128xf32>
    %266 = arith.mulf %264, %265 : vector<32x128xf32>
    %c0_118 = arith.constant 0 : index
    %c0_119 = arith.constant 0 : index
    %c0_120 = arith.constant 0 : index
    %267 = vector.load %arg11[%c0_118, %c0_119, %c0_120] : memref<1x32x128xf32, #tpu.memory_space<vmem>>, vector<1x32x128xf32>
    %268 = vector.shape_cast %267 : vector<1x32x128xf32> to vector<32x128xf32>
    %269 = vector.shape_cast %266 : vector<32x128xf32> to vector<1x32x128xf32>
    tpu.vector_store %arg11[%c0_118, %c0_119, %c0_120], %269 {strides = array<i32>} : memref<1x32x128xf32, #tpu.memory_space<vmem>>, vector<1x32x128xf32>,
    return
  }
  func.func @transform_0(%arg0: i32) -> (i32, i32, i32) {
    %c0_i32 = arith.constant 0 : i32
    %c0_i32_0 = arith.constant 0 : i32
    %c0_i32_1 = arith.constant 0 : i32
    return %arg0, %c0_i32, %c0_i32_0 : i32, i32, i32
  }
  func.func @transform_1(%arg0: i32) -> (i32, i32, i32) {
    %c0_i32 = arith.constant 0 : i32
    %c0_i32_0 = arith.constant 0 : i32
    %c0_i32_1 = arith.constant 0 : i32
    %c0_i32_2 = arith.constant 0 : i32
    return %c0_i32, %c0_i32_0, %c0_i32_1 : i32, i32, i32
  }
  func.func @transform_2(%arg0: i32) -> (i32, i32, i32) {
    %c0_i32 = arith.constant 0 : i32
    %c0_i32_0 = arith.constant 0 : i32
    %c0_i32_1 = arith.constant 0 : i32
    %c0_i32_2 = arith.constant 0 : i32
    return %c0_i32, %c0_i32_0, %c0_i32_1 : i32, i32, i32
  }
  func.func @transform_3(%arg0: i32) -> (i32, i32, i32) {
    %c0_i32 = arith.constant 0 : i32
    %c0_i32_0 = arith.constant 0 : i32
    %c0_i32_1 = arith.constant 0 : i32
    %c0_i32_2 = arith.constant 0 : i32
    return %c0_i32, %c0_i32_0, %c0_i32_1 : i32, i32, i32
  }
  func.func @transform_4(%arg0: i32) -> (i32, i32, i32) {
    %c0_i32 = arith.constant 0 : i32
    %c0_i32_0 = arith.constant 0 : i32
    %c0_i32_1 = arith.constant 0 : i32
    %c0_i32_2 = arith.constant 0 : i32
    return %c0_i32, %c0_i32_0, %c0_i32_1 : i32, i32, i32
  }
  func.func @transform_5(%arg0: i32) -> (i32, i32, i32) {
    %c0_i32 = arith.constant 0 : i32
    %c0_i32_0 = arith.constant 0 : i32
    %c0_i32_1 = arith.constant 0 : i32
    %c0_i32_2 = arith.constant 0 : i32
    return %c0_i32, %c0_i32_0, %c0_i32_1 : i32, i32, i32
  }
  func.func @transform_6(%arg0: i32) -> (i32, i32) {
    %c0_i32 = arith.constant 0 : i32
    %c0_i32_0 = arith.constant 0 : i32
    %c0_i32_1 = arith.constant 0 : i32
    return %c0_i32, %c0_i32_0 : i32, i32
  }
  func.func @transform_7(%arg0: i32) -> (i32, i32) {
    %c0_i32 = arith.constant 0 : i32
    %c0_i32_0 = arith.constant 0 : i32
    %c0_i32_1 = arith.constant 0 : i32
    return %c0_i32, %c0_i32_0 : i32, i32
  }
  func.func @transform_8(%arg0: i32) -> (i32, i32) {
    %c0_i32 = arith.constant 0 : i32
    %c0_i32_0 = arith.constant 0 : i32
    %c0_i32_1 = arith.constant 0 : i32
    return %c0_i32, %c0_i32_0 : i32, i32
  }
  func.func @transform_9(%arg0: i32) -> (i32, i32) {
    %c0_i32 = arith.constant 0 : i32
    %c0_i32_0 = arith.constant 0 : i32
    %c0_i32_1 = arith.constant 0 : i32
    return %c0_i32, %c0_i32_0 : i32, i32
  }
  func.func @transform_10(%arg0: i32) -> (i32, i32, i32) {
    %c0_i32 = arith.constant 0 : i32
    %c0_i32_0 = arith.constant 0 : i32
    %c0_i32_1 = arith.constant 0 : i32
    return %arg0, %c0_i32, %c0_i32_0 : i32, i32, i32
  }
}

</mosaic_0001>

<llo_original>
// kernel: stgcn_with_hypergraph_forward.1
$region0: #{stgcn_with_hypergraph_forward.1}
  #allocation0 [shape = 'u32[]', space=smem, size = 0x4, offset = 0x4, fixed_abs, tag = 'smem constant byte address 0x4 - core index']
  #allocation1 [shape = 'u32[144,128]{1,0:T(1,128)}', space=vmem, size = 0x12000, scoped, tag = 'internal scratch']
  %s0 = inlined_call_operand.vmem [shape: f32[2,32,128], index: 0, kind: input, shape index: {}]
  %s1 = inlined_call_operand.vmem [shape: f32[3,128,128], index: 1, kind: input, shape index: {}]
  %s2 = inlined_call_operand.vmem [shape: f32[3,64,32], index: 2, kind: input, shape index: {}]
  %s3 = inlined_call_operand.vmem [shape: f32[3,64,128], index: 3, kind: input, shape index: {}]
  %s4 = inlined_call_operand.vmem [shape: f32[3,32,1], index: 4, kind: input, shape index: {}]
  %s5 = inlined_call_operand.vmem [shape: f32[3,32,1], index: 5, kind: input, shape index: {}]
  %s6 = inlined_call_operand.vmem [shape: f32[32,32], index: 6, kind: input, shape index: {}]
  %s7 = inlined_call_operand.vmem [shape: f32[32,32], index: 7, kind: input, shape index: {}]
  %s8 = inlined_call_operand.vmem [shape: f32[32,1], index: 8, kind: input, shape index: {}]
  %s9 = inlined_call_operand.vmem [shape: f32[32,1], index: 9, kind: input, shape index: {}]
  %s10 = inlined_call_operand.vmem [shape: f32[2,32,128], index: 10, kind: output, shape index: {}]
  %s11 = sld [smem:[#allocation0]]
  $region73: #{stgcn_with_hypergraph_forward.1} parent=0
    _
  %s13 = ssub.s32 1, %s11
  %s14 = scalar_select 0, %s13, %s11
  loop: start=0, step=1, limit=4
  $region2: #{stgcn_with_hypergraph_forward.1} parent=0 // loop_pre_header
    _
  $region3: #{stgcn_with_hypergraph_forward.1} parent=0 // loop_header
    %s16 = sphi 0, %s20
    %p17 = scmp.ge.s32.totalorder %s16, 4
    %s26 = sphi 0, %s28
    %s29 = sphi 0, %s26
    %s30 = sphi 0, %s29
    %s46 = sphi 0, %s30
    %s50 = sphi 0, %s50
    %s52 = sphi 0, %s50
    %s53 = sphi 0, %s52
    %s67 = sphi 0, %s53
    %s71 = sphi 0, %s71
    %s73 = sphi 0, %s71
    %s74 = sphi 0, %s73
    %s88 = sphi 0, %s74
    %s92 = sphi 0, %s92
    %s94 = sphi 0, %s92
    %s95 = sphi 0, %s94
    %s109 = sphi 0, %s95
    %s113 = sphi 0, %s113
    %s115 = sphi 0, %s113
    %s116 = sphi 0, %s115
    %s130 = sphi 0, %s116
    %s134 = sphi 0, %s134
    %s136 = sphi 0, %s134
    %s137 = sphi 0, %s136
    %s151 = sphi 0, %s137
    %s155 = sphi 0, %s155
    %s157 = sphi 0, %s155
    %s158 = sphi 0, %s157
    %s172 = sphi 0, %s158
    %s176 = sphi 0, %s176
    %s178 = sphi 0, %s176
    %s179 = sphi 0, %s178
    %s193 = sphi 0, %s179
    %s197 = sphi 0, %s197
    %s199 = sphi 0, %s197
    %s200 = sphi 0, %s199
    %s214 = sphi 0, %s200
    %s218 = sphi 0, %s218
    %s220 = sphi 0, %s218
    %s221 = sphi 0, %s220
    %s235 = sphi 0, %s221
    %s241 = sphi 0, %s243
    %s244 = sphi 0, %s241
    %s245 = sphi 0, %s244
    %s261 = sphi 0, %s245
  $region4: #{stgcn_with_hypergraph_forward.1} parent=0 // loop_header_branch
    %19 = sbr.rel (%p17) target = $region8
  $region5: #{stgcn_with_hypergraph_forward.1} parent=0 // loop_body
    %s21 = ssub.s32 %s16, 1
    %s22 = ssub.s32 %s16, 2
    %s23 = sadd.s32 %s16, 1
    %s24 = ssub.s32 %s16, %s23
    %p25 = scmp.eq.s32.totalorder %s24, 0
    %s27 = sadd.s32 %s26, 1
    %s28 = scalar_select %p25, %s26, %s27
    %p31 = pneg %p25
    %p32 = scmp.eq.s32.totalorder %s16, 1
    %p33 = por %p31, %p32
    %p34 = scmp.ne.s32.totalorder %s26, %s29
    %p35 = scmp.eq.s32.totalorder %s16, 0
    %p36 = por %p34, %p35
    %p37 = scmp.ne.s32.totalorder %s26, %s29
    %p38 = scmp.eq.s32.totalorder %s21, 1
    %p39 = por %p37, %p38
    %p40 = scmp.ne.s32.totalorder %s29, %s30
    %p41 = scmp.eq.s32.totalorder %s21, 0
    %p42 = por %p40, %p41
    %p43 = scmp.ne.s32.totalorder %s29, %s30
    %p44 = scmp.eq.s32.totalorder %s22, 1
    %p45 = por %p43, %p44
    %p47 = scmp.ne.s32.totalorder %s30, %s46
    %p48 = scmp.eq.s32.totalorder %s22, 0
    %p49 = por %p47, %p48
    %s51 = sadd.s32 %s50, 1
    %p54 = scmp.eq.s32.totalorder %s16, 1
    %p55 = scmp.ne.s32.totalorder %s50, %s52
    %p56 = scmp.eq.s32.totalorder %s16, 0
    %p57 = por %p55, %p56
    %p58 = scmp.ne.s32.totalorder %s50, %s52
    %p59 = scmp.eq.s32.totalorder %s21, 1
    %p60 = por %p58, %p59
    %p61 = scmp.ne.s32.totalorder %s52, %s53
    %p62 = scmp.eq.s32.totalorder %s21, 0
    %p63 = por %p61, %p62
    %p64 = scmp.ne.s32.totalorder %s52, %s53
    %p65 = scmp.eq.s32.totalorder %s22, 1
    %p66 = por %p64, %p65
    %p68 = scmp.ne.s32.totalorder %s53, %s67
    %p69 = scmp.eq.s32.totalorder %s22, 0
    %p70 = por %p68, %p69
    %s72 = sadd.s32 %s71, 1
    %p75 = scmp.eq.s32.totalorder %s16, 1
    %p76 = scmp.ne.s32.totalorder %s71, %s73
    %p77 = scmp.eq.s32.totalorder %s16, 0
    %p78 = por %p76, %p77
    %p79 = scmp.ne.s32.totalorder %s71, %s73
    %p80 = scmp.eq.s32.totalorder %s21, 1
    %p81 = por %p79, %p80
    %p82 = scmp.ne.s32.totalorder %s73, %s74
    %p83 = scmp.eq.s32.totalorder %s21, 0
    %p84 = por %p82, %p83
    %p85 = scmp.ne.s32.totalorder %s73, %s74
    %p86 = scmp.eq.s32.totalorder %s22, 1
    %p87 = por %p85, %p86
    %p89 = scmp.ne.s32.totalorder %s74, %s88
    %p90 = scmp.eq.s32.totalorder %s22, 0
    %p91 = por %p89, %p90
    %s93 = sadd.s32 %s92, 1
    %p96 = scmp.eq.s32.totalorder %s16, 1
    %p97 = scmp.ne.s32.totalorder %s92, %s94
    %p98 = scmp.eq.s32.totalorder %s16, 0
    %p99 = por %p97, %p98
    %p100 = scmp.ne.s32.totalorder %s92, %s94
    %p101 = scmp.eq.s32.totalorder %s21, 1
    %p102 = por %p100, %p101
    %p103 = scmp.ne.s32.totalorder %s94, %s95
    %p104 = scmp.eq.s32.totalorder %s21, 0
    %p105 = por %p103, %p104
    %p106 = scmp.ne.s32.totalorder %s94, %s95
    %p107 = scmp.eq.s32.totalorder %s22, 1
    %p108 = por %p106, %p107
    %p110 = scmp.ne.s32.totalorder %s95, %s109
    %p111 = scmp.eq.s32.totalorder %s22, 0
    %p112 = por %p110, %p111
    %s114 = sadd.s32 %s113, 1
    %p117 = scmp.eq.s32.totalorder %s16, 1
    %p118 = scmp.ne.s32.totalorder %s113, %s115
    %p119 = scmp.eq.s32.totalorder %s16, 0
    %p120 = por %p118, %p119
    %p121 = scmp.ne.s32.totalorder %s113, %s115
    %p122 = scmp.eq.s32.totalorder %s21, 1
    %p123 = por %p121, %p122
    %p124 = scmp.ne.s32.totalorder %s115, %s116
    %p125 = scmp.eq.s32.totalorder %s21, 0
    %p126 = por %p124, %p125
    %p127 = scmp.ne.s32.totalorder %s115, %s116
    %p128 = scmp.eq.s32.totalorder %s22, 1
    %p129 = por %p127, %p128
    %p131 = scmp.ne.s32.totalorder %s116, %s130
    %p132 = scmp.eq.s32.totalorder %s22, 0
    %p133 = por %p131, %p132
    %s135 = sadd.s32 %s134, 1
    %p138 = scmp.eq.s32.totalorder %s16, 1
    %p139 = scmp.ne.s32.totalorder %s134, %s136
    %p140 = scmp.eq.s32.totalorder %s16, 0
    %p141 = por %p139, %p140
    %p142 = scmp.ne.s32.totalorder %s134, %s136
    %p143 = scmp.eq.s32.totalorder %s21, 1
    %p144 = por %p142, %p143
    %p145 = scmp.ne.s32.totalorder %s136, %s137
    %p146 = scmp.eq.s32.totalorder %s21, 0
    %p147 = por %p145, %p146
    %p148 = scmp.ne.s32.totalorder %s136, %s137
    %p149 = scmp.eq.s32.totalorder %s22, 1
    %p150 = por %p148, %p149
    %p152 = scmp.ne.s32.totalorder %s137, %s151
    %p153 = scmp.eq.s32.totalorder %s22, 0
    %p154 = por %p152, %p153
    %s156 = sadd.s32 %s155, 1
    %p159 = scmp.eq.s32.totalorder %s16, 1
    %p160 = scmp.ne.s32.totalorder %s155, %s157
    %p161 = scmp.eq.s32.totalorder %s16, 0
    %p162 = por %p160, %p161
    %p163 = scmp.ne.s32.totalorder %s155, %s157
    %p164 = scmp.eq.s32.totalorder %s21, 1
    %p165 = por %p163, %p164
    %p166 = scmp.ne.s32.totalorder %s157, %s158
    %p167 = scmp.eq.s32.totalorder %s21, 0
    %p168 = por %p166, %p167
    %p169 = scmp.ne.s32.totalorder %s157, %s158
    %p170 = scmp.eq.s32.totalorder %s22, 1
    %p171 = por %p169, %p170
    %p173 = scmp.ne.s32.totalorder %s158, %s172
    %p174 = scmp.eq.s32.totalorder %s22, 0
    %p175 = por %p173, %p174
    %s177 = sadd.s32 %s176, 1
    %p180 = scmp.eq.s32.totalorder %s16, 1
    %p181 = scmp.ne.s32.totalorder %s176, %s178
    %p182 = scmp.eq.s32.totalorder %s16, 0
    %p183 = por %p181, %p182
    %p184 = scmp.ne.s32.totalorder %s176, %s178
    %p185 = scmp.eq.s32.totalorder %s21, 1
    %p186 = por %p184, %p185
    %p187 = scmp.ne.s32.totalorder %s178, %s179
    %p188 = scmp.eq.s32.totalorder %s21, 0
    %p189 = por %p187, %p188
    %p190 = scmp.ne.s32.totalorder %s178, %s179
    %p191 = scmp.eq.s32.totalorder %s22, 1
    %p192 = por %p190, %p191
    %p194 = scmp.ne.s32.totalorder %s179, %s193
    %p195 = scmp.eq.s32.totalorder %s22, 0
    %p196 = por %p194, %p195
    %s198 = sadd.s32 %s197, 1
    %p201 = scmp.eq.s32.totalorder %s16, 1
    %p202 = scmp.ne.s32.totalorder %s197, %s199
    %p203 = scmp.eq.s32.totalorder %s16, 0
    %p204 = por %p202, %p203
    %p205 = scmp.ne.s32.totalorder %s197, %s199
    %p206 = scmp.eq.s32.totalorder %s21, 1
    %p207 = por %p205, %p206
    %p208 = scmp.ne.s32.totalorder %s199, %s200
    %p209 = scmp.eq.s32.totalorder %s21, 0
    %p210 = por %p208, %p209
    %p211 = scmp.ne.s32.totalorder %s199, %s200
    %p212 = scmp.eq.s32.totalorder %s22, 1
    %p213 = por %p211, %p212
    %p215 = scmp.ne.s32.totalorder %s200, %s214
    %p216 = scmp.eq.s32.totalorder %s22, 0
    %p217 = por %p215, %p216
    %s219 = sadd.s32 %s218, 1
    %p222 = scmp.eq.s32.totalorder %s16, 1
    %p223 = scmp.ne.s32.totalorder %s218, %s220
    %p224 = scmp.eq.s32.totalorder %s16, 0
    %p225 = por %p223, %p224
    %p226 = scmp.ne.s32.totalorder %s218, %s220
    %p227 = scmp.eq.s32.totalorder %s21, 1
    %p228 = por %p226, %p227
    %p229 = scmp.ne.s32.totalorder %s220, %s221
    %p230 = scmp.eq.s32.totalorder %s21, 0
    %p231 = por %p229, %p230
    %p232 = scmp.ne.s32.totalorder %s220, %s221
    %p233 = scmp.eq.s32.totalorder %s22, 1
    %p234 = por %p232, %p233
    %p236 = scmp.ne.s32.totalorder %s221, %s235
    %p237 = scmp.eq.s32.totalorder %s22, 0
    %p238 = por %p236, %p237
    %s239 = ssub.s32 %s16, %s23
    %p240 = scmp.eq.s32.totalorder %s239, 0
    %s242 = sadd.s32 %s241, 1
    %s243 = scalar_select %p240, %s241, %s242
    %p246 = pneg %p240
    %p247 = scmp.eq.s32.totalorder %s16, 1
    %p248 = por %p246, %p247
    %p249 = scmp.ne.s32.totalorder %s241, %s244
    %p250 = scmp.eq.s32.totalorder %s16, 0
    %p251 = por %p249, %p250
    %p252 = scmp.ne.s32.totalorder %s241, %s244
    %p253 = scmp.eq.s32.totalorder %s21, 1
    %p254 = por %p252, %p253
    %p255 = scmp.ne.s32.totalorder %s244, %s245
    %p256 = scmp.eq.s32.totalorder %s21, 0
    %p257 = por %p255, %p256
    %p258 = scmp.ne.s32.totalorder %s244, %s245
    %p259 = scmp.eq.s32.totalorder %s22, 1
    %p260 = por %p258, %p259
    %p262 = scmp.ne.s32.totalorder %s245, %s261
    %p263 = scmp.eq.s32.totalorder %s22, 0
    %p264 = por %p262, %p263
    %p265 = scmp.le.s32.totalorder 1, %s16
    %p266 = scmp.lt.s32.totalorder %s16, 3
    %p267 = pnand %p265, %p266
    %p268 = pneg %p267
    // Predicated region
    $region9: #{stgcn_with_hypergraph_forward.1} parent=5 // pred_check
      _
    $region10: #{stgcn_with_hypergraph_forward.1} parent=5 // pred_check_branch
      %270 = sbr.rel (%p267) target = $region12
    $region11: #{stgcn_with_hypergraph_forward.1} parent=5 // pred_region
      %s271 = ssub.s32 %s16, 1
      // Predicated region
      $region13: #{stgcn_with_hypergraph_forward.1} parent=11 // pred_check
        %p272 = pneg %p63
      $region14: #{stgcn_with_hypergraph_forward.1} parent=11 // pred_check_branch
        %274 = sbr.rel (%p272) target = $region16
      $region15: #{stgcn_with_hypergraph_forward.1} parent=11 // pred_region
        _
      $region16: #{stgcn_with_hypergraph_forward.1} parent=11 // pred_fallthru
        _
      // Predicated region
      $region17: #{stgcn_with_hypergraph_forward.1} parent=11 // pred_check
        %p275 = pneg %p84
      $region18: #{stgcn_with_hypergraph_forward.1} parent=11 // pred_check_branch
        %277 = sbr.rel (%p275) target = $region20
      $region19: #{stgcn_with_hypergraph_forward.1} parent=11 // pred_region
        _
      $region20: #{stgcn_with_hypergraph_forward.1} parent=11 // pred_fallthru
        _
      // Predicated region
      $region21: #{stgcn_with_hypergraph_forward.1} parent=11 // pred_check
        %p278 = pneg %p105
      $region22: #{stgcn_with_hypergraph_forward.1} parent=11 // pred_check_branch
        %280 = sbr.rel (%p278) target = $region24
      $region23: #{stgcn_with_hypergraph_forward.1} parent=11 // pred_region
        _
      $region24: #{stgcn_with_hypergraph_forward.1} parent=11 // pred_fallthru
        _
      // Predicated region
      $region25: #{stgcn_with_hypergraph_forward.1} parent=11 // pred_check
        %p281 = pneg %p126
      $region26: #{stgcn_with_hypergraph_forward.1} parent=11 // pred_check_branch
        %283 = sbr.rel (%p281) target = $region28
      $region27: #{stgcn_with_hypergraph_forward.1} parent=11 // pred_region
        _
      $region28: #{stgcn_with_hypergraph_forward.1} parent=11 // pred_fallthru
        _
      // Predicated region
      $region29: #{stgcn_with_hypergraph_forward.1} parent=11 // pred_check
        %p284 = pneg %p147
      $region30: #{stgcn_with_hypergraph_forward.1} parent=11 // pred_check_branch
        %286 = sbr.rel (%p284) target = $region32
      $region31: #{stgcn_with_hypergraph_forward.1} parent=11 // pred_region
        _
      $region32: #{stgcn_with_hypergraph_forward.1} parent=11 // pred_fallthru
        _
      // Predicated region
      $region33: #{stgcn_with_hypergraph_forward.1} parent=11 // pred_check
        %p287 = pneg %p168
      $region34: #{stgcn_with_hypergraph_forward.1} parent=11 // pred_check_branch
        %289 = sbr.rel (%p287) target = $region36
      $region35: #{stgcn_with_hypergraph_forward.1} parent=11 // pred_region
        _
      $region36: #{stgcn_with_hypergraph_forward.1} parent=11 // pred_fallthru
        _
      // Predicated region
      $region37: #{stgcn_with_hypergraph_forward.1} parent=11 // pred_check
        %p290 = pneg %p189
      $region38: #{stgcn_with_hypergraph_forward.1} parent=11 // pred_check_branch
        %292 = sbr.rel (%p290) target = $region40
      $region39: #{stgcn_with_hypergraph_forward.1} parent=11 // pred_region
        _
      $region40: #{stgcn_with_hypergraph_forward.1} parent=11 // pred_fallthru
        _
      // Predicated region
      $region41: #{stgcn_with_hypergraph_forward.1} parent=11 // pred_check
        %p293 = pneg %p210
      $region42: #{stgcn_with_hypergraph_forward.1} parent=11 // pred_check_branch
        %295 = sbr.rel (%p293) target = $region44
      $region43: #{stgcn_with_hypergraph_forward.1} parent=11 // pred_region
        _
      $region44: #{stgcn_with_hypergraph_forward.1} parent=11 // pred_fallthru
        _
      // Predicated region
      $region45: #{stgcn_with_hypergraph_forward.1} parent=11 // pred_check
        %p296 = pneg %p231
      $region46: #{stgcn_with_hypergraph_forward.1} parent=11 // pred_check_branch
        %298 = sbr.rel (%p296) target = $region48
      $region47: #{stgcn_with_hypergraph_forward.1} parent=11 // pred_region
        _
      $region48: #{stgcn_with_hypergraph_forward.1} parent=11 // pred_fallthru
        _
    $region12: #{stgcn_with_hypergraph_forward.1} parent=5 // pred_fallthru
      _
    %p299 = scmp.lt.s32.totalorder %s16, 2
    // Predicated region
    $region49: #{stgcn_with_hypergraph_forward.1} parent=5 // pred_check
      %p300 = pneg %p299
    $region50: #{stgcn_with_hypergraph_forward.1} parent=5 // pred_check_branch
      %302 = sbr.rel (%p300) target = $region52
    $region51: #{stgcn_with_hypergraph_forward.1} parent=5 // pred_region
      // Predicated region
      $region53: #{stgcn_with_hypergraph_forward.1} parent=51 // pred_check
        %p303 = pneg %p36
      $region54: #{stgcn_with_hypergraph_forward.1} parent=51 // pred_check_branch
        %305 = sbr.rel (%p303) target = $region56
      $region55: #{stgcn_with_hypergraph_forward.1} parent=51 // pred_region
        %p306 = scmp.lt.s32.totalorder %s16, 1
        %s307 = scalar_select %p306, %s16, 1
        %s308 = smul.addr %s307, 4
        %s309 = smul.addr %s308, 8
        %s310 = scalar_lea.vmem %s0, %s309
      $region56: #{stgcn_with_hypergraph_forward.1} parent=51 // pred_fallthru
        _
    $region52: #{stgcn_with_hypergraph_forward.1} parent=5 // pred_fallthru
      _
    %p311 = scmp.le.s32.totalorder 1, %s16
    %p312 = scmp.lt.s32.totalorder %s16, 3
    %p313 = pnand %p311, %p312
    %p314 = pneg %p313
    // Predicated region
    $region57: #{stgcn_with_hypergraph_forward.1} parent=5 // pred_check
      _
    $region58: #{stgcn_with_hypergraph_forward.1} parent=5 // pred_check_branch
      %316 = sbr.rel (%p313) target = $region60
    $region59: #{stgcn_with_hypergraph_forward.1} parent=5 // pred_region
      %s317 = ssub.s32 %s16, 1
      %p318 = scmp.lt.s32.totalorder %s21, 1
      %s319 = scalar_select %p318, %s21, 1
      %s320 = smul.addr %s319, 4
      %s321 = smul.addr %s320, 8
      %s322 = scalar_lea.vmem %s0, %s321
      %p323 = pneg %p42
      %p324 = pneg %p39
      %p325 = pneg %p63
      %p326 = pneg %p60
      %p327 = pneg %p84
      %p328 = pneg %p81
      %p329 = pneg %p105
      %p330 = pneg %p102
      %p331 = pneg %p126
      %p332 = pneg %p123
      %p333 = pneg %p147
      %p334 = pneg %p144
      %p335 = pneg %p168
      %p336 = pneg %p165
      %p337 = pneg %p189
      %p338 = pneg %p186
      %p339 = pneg %p210
      %p340 = pneg %p207
      %p341 = pneg %p231
      %p342 = pneg %p228
      %p343 = pneg %p257
      %p344 = pneg %p254
      %p345 = scmp.lt.s32.totalorder %s21, 1
      %s346 = scalar_select %p345, %s21, 1
      %s347 = smul.addr %s346, 4
      %s348 = smul.addr %s347, 8
      %s349 = scalar_lea.vmem %s10, %s348
      %p350 = scmp.lt.s32.totalorder %s21, 1
      %s351 = scalar_select %p350, %s21, 1
      %s352 = smul.addr %s351, 4
      %s353 = smul.addr %s352, 8
      %s354 = scalar_lea.vmem %s0, %s353
      %p355 = scmp.lt.s32.totalorder %s21, 1
      %s356 = scalar_select %p355, %s21, 1
      %s357 = smul.addr %s356, 4
      %s358 = smul.addr %s357, 8
      %s359 = scalar_lea.vmem %s10, %s358
      %v360 = vld [vmem:[%s354] sm:$0xff]
      %v361 = vld [vmem:[%s354 + $0x8] sm:$0xff]
      %v362 = vld [vmem:[%s354 + $0x10] sm:$0xff]
      %v363 = vld [vmem:[%s354 + $0x18] sm:$0xff]
      %v364 = vld [vmem:[%s6] sm:$0xff]
      %v365 = vld [vmem:[%s6 + $0x8] sm:$0xff]
      %v366 = vld [vmem:[%s6 + $0x10] sm:$0xff]
      %v367 = vld [vmem:[%s6 + $0x18] sm:$0xff]
      %v368 = vld [vmem:[%s7] sm:$0xff]
      %v369 = vld [vmem:[%s7 + $0x8] sm:$0xff]
      %v370 = vld [vmem:[%s7 + $0x10] sm:$0xff]
      %v371 = vld [vmem:[%s7 + $0x18] sm:$0xff]
      %v372 = vld [vmem:[%s8] sm:$0xff]
      %v373 = vld [vmem:[%s8 + $0x8] sm:$0xff]
      %v374 = vld [vmem:[%s8 + $0x10] sm:$0xff]
      %v375 = vld [vmem:[%s8 + $0x18] sm:$0xff]
      %v376 = vld [vmem:[%s9] sm:$0xff]
      %v377 = vld [vmem:[%s9 + $0x8] sm:$0xff]
      %v378 = vld [vmem:[%s9 + $0x10] sm:$0xff]
      %v379 = vld [vmem:[%s9 + $0x18] sm:$0xff]
      %v380 = vld [vmem:[%s1] sm:$0xff]
      %v381 = vld [vmem:[%s1 + $0x8] sm:$0xff]
      %v382 = vld [vmem:[%s1 + $0x10] sm:$0xff]
      %v383 = vld [vmem:[%s1 + $0x18] sm:$0xff]
      %v384 = vld [vmem:[%s1 + $0x20] sm:$0xff]
      %v385 = vld [vmem:[%s1 + $0x28] sm:$0xff]
      %v386 = vld [vmem:[%s1 + $0x30] sm:$0xff]
      %v387 = vld [vmem:[%s1 + $0x38] sm:$0xff]
      %v388 = vld [vmem:[%s1 + $0x40] sm:$0xff]
      %v389 = vld [vmem:[%s1 + $0x48] sm:$0xff]
      %v390 = vld [vmem:[%s1 + $0x50] sm:$0xff]
      %v391 = vld [vmem:[%s1 + $0x58] sm:$0xff]
      %v392 = vld [vmem:[%s1 + $0x60] sm:$0xff]
      %v393 = vld [vmem:[%s1 + $0x68] sm:$0xff]
      %v394 = vld [vmem:[%s1 + $0x70] sm:$0xff]
      %v395 = vld [vmem:[%s1 + $0x78] sm:$0xff]
      %396 = vmatprep.subr.mxu0 0.0
      %397 = vmatpush1.msra.mxu0 %v380
      %398 = vmatprep.subr.mxu0 0.0
      %399 = vmatpush1.msra.mxu0 %v381
      %400 = vmatprep.subr.mxu0 0.0
      %401 = vmatpush1.msra.mxu0 %v382
      %402 = vmatprep.subr.mxu0 0.0
      %403 = vmatpush1.msra.mxu0 %v383
      %404 = vmatprep.subr.mxu0 0.0
      %405 = vmatpush1.msra.mxu0 %v384
      %406 = vmatprep.subr.mxu0 0.0
      %407 = vmatpush1.msra.mxu0 %v385
      %408 = vmatprep.subr.mxu0 0.0
      %409 = vmatpush1.msra.mxu0 %v386
      %410 = vmatprep.subr.mxu0 0.0
      %411 = vmatpush1.msra.mxu0 %v387
      %412 = vmatprep.subr.mxu0 0.0
      %413 = vmatpush1.msra.mxu0 %v388
      %414 = vmatprep.subr.mxu0 0.0
      %415 = vmatpush1.msra.mxu0 %v389
      %416 = vmatprep.subr.mxu0 0.0
      %417 = vmatpush1.msra.mxu0 %v390
      %418 = vmatprep.subr.mxu0 0.0
      %419 = vmatpush1.msra.mxu0 %v391
      %420 = vmatprep.subr.mxu0 0.0
      %421 = vmatpush1.msra.mxu0 %v392
      %422 = vmatprep.subr.mxu0 0.0
      %423 = vmatpush1.msra.mxu0 %v393
      %424 = vmatprep.subr.mxu0 0.0
      %425 = vmatpush1.msra.mxu0 %v394
      %426 = vmatprep.subr.mxu0 0.0
      %427 = vmatpush1.msra.mxu0 %v395
      %428 = vmatprep.subr.mxu0 0.0
      %429 = vmatpush1.msra.mxu0 0.0
      %430 = vmatprep.subr.mxu0 0.0
      %431 = vmatpush1.msra.mxu0 0.0
      %432 = vmatprep.subr.mxu0 0.0
      %433 = vmatpush1.msra.mxu0 0.0
      %434 = vmatprep.subr.mxu0 0.0
      %435 = vmatpush1.msra.mxu0 0.0
      %436 = vmatprep.subr.mxu0 0.0
      %437 = vmatpush1.msra.mxu0 0.0
      %438 = vmatprep.subr.mxu0 0.0
      %439 = vmatpush1.msra.mxu0 0.0
      %440 = vmatprep.subr.mxu0 0.0
      %441 = vmatpush1.msra.mxu0 0.0
      %442 = vmatprep.subr.mxu0 0.0
      %443 = vmatpush1.msra.mxu0 0.0
      %444 = vmatprep.subr.mxu0 0.0
      %445 = vmatpush1.msra.mxu0 0.0
      %446 = vmatprep.subr.mxu0 0.0
      %447 = vmatpush1.msra.mxu0 0.0
      %448 = vmatprep.subr.mxu0 0.0
      %449 = vmatpush1.msra.mxu0 0.0
      %450 = vmatprep.subr.mxu0 0.0
      %451 = vmatpush1.msra.mxu0 0.0
      %452 = vmatprep.subr.mxu0 0.0
      %453 = vmatpush1.msra.mxu0 0.0
      %454 = vmatprep.subr.mxu0 0.0
      %455 = vmatpush1.msra.mxu0 0.0
      %456 = vmatprep.subr.mxu0 0.0
      %457 = vmatpush1.msra.mxu0 0.0
      %458 = vmatprep.subr.mxu0 0.0
      %459 = vmatpush1.msra.mxu0 0.0
      %460 = vmatprep.mubr.f32.mxu0 0.0
      %461 = vmatmul.mubr.f32.gmra.mrb[0].mxu0 %v360
      %v462 = vpop.f32.mrb[0].mxu0
      %v463 = vadd.f32 0.0, %v462
      %v464 = vpop.f32.mrb[0].mxu0
      %465 = vmatprep.mubr.f32.mxu0 0.0
      %466 = vmatmul.mubr.f32.gmra.mrb[0].mxu0 %v361
      %v467 = vpop.f32.mrb[0].mxu0
      %v468 = vadd.f32 0.0, %v467
      %v469 = vpop.f32.mrb[0].mxu0
      %470 = vmatprep.mubr.f32.mxu0 0.0
      %471 = vmatmul.mubr.f32.gmra.mrb[0].mxu0 %v362
      %v472 = vpop.f32.mrb[0].mxu0
      %v473 = vadd.f32 0.0, %v472
      %v474 = vpop.f32.mrb[0].mxu0
      %475 = vmatprep.mubr.f32.mxu0 0.0
      %476 = vmatmul.mubr.f32.gmra.mrb[0].mxu0 %v363
      %v477 = vpop.f32.mrb[0].mxu0
      %v478 = vadd.f32 0.0, %v477
      %v479 = vpop.f32.mrb[0].mxu0
      %480 = vdwg.mxu0
      %v481 = vld [vmem:[%s2] sm:$0xff]
      %v482 = vld [vmem:[%s2 + $0x8] sm:$0xff]
      %v483 = vld [vmem:[%s2 + $0x10] sm:$0xff]
      %v484 = vld [vmem:[%s2 + $0x18] sm:$0xff]
      %v485 = vld [vmem:[%s2 + $0x20] sm:$0xff]
      %v486 = vld [vmem:[%s2 + $0x28] sm:$0xff]
      %v487 = vld [vmem:[%s2 + $0x30] sm:$0xff]
      %v488 = vld [vmem:[%s2 + $0x38] sm:$0xff]
      %v489 = vld [vmem:[%s3] sm:$0xff]
      %v490 = vld [vmem:[%s3 + $0x8] sm:$0xff]
      %v491 = vld [vmem:[%s3 + $0x10] sm:$0xff]
      %v492 = vld [vmem:[%s3 + $0x18] sm:$0xff]
      %v493 = vld [vmem:[%s3 + $0x20] sm:$0xff]
      %v494 = vld [vmem:[%s3 + $0x28] sm:$0xff]
      %v495 = vld [vmem:[%s3 + $0x30] sm:$0xff]
      %v496 = vld [vmem:[%s3 + $0x38] sm:$0xff]
      %vm497 = vcmask 261120
      %v499 = vsel %vm497, %v481, 0
      %v502 = vsel %vm497, %v482, 0
      %v505 = vsel %vm497, %v483, 0
      %v508 = vsel %vm497, %v484, 0
      %v511 = vsel %vm497, %v485, 0
      %v514 = vsel %vm497, %v486, 0
      %v517 = vsel %vm497, %v487, 0
      %v520 = vsel %vm497, %v488, 0
      %522 = vmatprep.subr.mxu0 0.0
      %523 = vmatpush1.msra.mxu0 %v463
      %524 = vmatprep.subr.mxu0 0.0
      %525 = vmatpush1.msra.mxu0 %v468
      %526 = vmatprep.subr.mxu0 0.0
      %527 = vmatpush1.msra.mxu0 %v473
      %528 = vmatprep.subr.mxu0 0.0
      %529 = vmatpush1.msra.mxu0 %v478
      %530 = vmatprep.subr.mxu0 0.0
      %531 = vmatpush1.msra.mxu0 0.0
      %532 = vmatprep.subr.mxu0 0.0
      %533 = vmatpush1.msra.mxu0 0.0
      %534 = vmatprep.subr.mxu0 0.0
      %535 = vmatpush1.msra.mxu0 0.0
      %536 = vmatprep.subr.mxu0 0.0
      %537 = vmatpush1.msra.mxu0 0.0
      %538 = vmatprep.subr.mxu0 0.0
      %539 = vmatpush1.msra.mxu0 0.0
      %540 = vmatprep.subr.mxu0 0.0
      %541 = vmatpush1.msra.mxu0 0.0
      %542 = vmatprep.subr.mxu0 0.0
      %543 = vmatpush1.msra.mxu0 0.0
      %544 = vmatprep.subr.mxu0 0.0
      %545 = vmatpush1.msra.mxu0 0.0
      %546 = vmatprep.subr.mxu0 0.0
      %547 = vmatpush1.msra.mxu0 0.0
      %548 = vmatprep.subr.mxu0 0.0
      %549 = vmatpush1.msra.mxu0 0.0
      %550 = vmatprep.subr.mxu0 0.0
      %551 = vmatpush1.msra.mxu0 0.0
      %552 = vmatprep.subr.mxu0 0.0
      %553 = vmatpush1.msra.mxu0 0.0
      %554 = vmatprep.subr.mxu0 0.0
      %555 = vmatpush1.msra.mxu0 0.0
      %556 = vmatprep.subr.mxu0 0.0
      %557 = vmatpush1.msra.mxu0 0.0
      %558 = vmatprep.subr.mxu0 0.0
      %559 = vmatpush1.msra.mxu0 0.0
      %560 = vmatprep.subr.mxu0 0.0
      %561 = vmatpush1.msra.mxu0 0.0
      %562 = vmatprep.subr.mxu0 0.0
      %563 = vmatpush1.msra.mxu0 0.0
      %564 = vmatprep.subr.mxu0 0.0
      %565 = vmatpush1.msra.mxu0 0.0
      %566 = vmatprep.subr.mxu0 0.0
      %567 = vmatpush1.msra.mxu0 0.0
      %568 = vmatprep.subr.mxu0 0.0
      %569 = vmatpush1.msra.mxu0 0.0
      %570 = vmatprep.subr.mxu0 0.0
      %571 = vmatpush1.msra.mxu0 0.0
      %572 = vmatprep.subr.mxu0 0.0
      %573 = vmatpush1.msra.mxu0 0.0
      %574 = vmatprep.subr.mxu0 0.0
      %575 = vmatpush1.msra.mxu0 0.0
      %576 = vmatprep.subr.mxu0 0.0
      %577 = vmatpush1.msra.mxu0 0.0
      %578 = vmatprep.subr.mxu0 0.0
      %579 = vmatpush1.msra.mxu0 0.0
      %580 = vmatprep.subr.mxu0 0.0
      %581 = vmatpush1.msra.mxu0 0.0
      %582 = vmatprep.subr.mxu0 0.0
      %583 = vmatpush1.msra.mxu0 0.0
      %584 = vmatprep.subr.mxu0 0.0
      %585 = vmatpush1.msra.mxu0 0.0
      %586 = vmatprep.mubr.f32.mxu0 0.0
      %587 = vmatmul.mubr.f32.gmra.mrb[0].mxu0 %v499
      %v588 = vpop.f32.mrb[0].mxu0
      %v589 = vadd.f32 %v489, %v588
      %v590 = vpop.f32.mrb[0].mxu0
      %591 = vmatprep.mubr.f32.mxu0 0.0
      %592 = vmatmul.mubr.f32.gmra.mrb[0].mxu0 %v502
      %v593 = vpop.f32.mrb[0].mxu0
      %v594 = vadd.f32 %v490, %v593
      %v595 = vpop.f32.mrb[0].mxu0
      %596 = vmatprep.mubr.f32.mxu0 0.0
      %597 = vmatmul.mubr.f32.gmra.mrb[0].mxu0 %v505
      %v598 = vpop.f32.mrb[0].mxu0
      %v599 = vadd.f32 %v491, %v598
      %v600 = vpop.f32.mrb[0].mxu0
      %601 = vmatprep.mubr.f32.mxu0 0.0
      %602 = vmatmul.mubr.f32.gmra.mrb[0].mxu0 %v508
      %v603 = vpop.f32.mrb[0].mxu0
      %v604 = vadd.f32 %v492, %v603
      %v605 = vpop.f32.mrb[0].mxu0
      %606 = vmatprep.mubr.f32.mxu0 0.0
      %607 = vmatmul.mubr.f32.gmra.mrb[0].mxu0 %v511
      %v608 = vpop.f32.mrb[0].mxu0
      %v609 = vadd.f32 %v493, %v608
      %v610 = vpop.f32.mrb[0].mxu0
      %611 = vmatprep.mubr.f32.mxu0 0.0
      %612 = vmatmul.mubr.f32.gmra.mrb[0].mxu0 %v514
      %v613 = vpop.f32.mrb[0].mxu0
      %v614 = vadd.f32 %v494, %v613
      %v615 = vpop.f32.mrb[0].mxu0
      %616 = vmatprep.mubr.f32.mxu0 0.0
      %617 = vmatmul.mubr.f32.gmra.mrb[0].mxu0 %v517
      %v618 = vpop.f32.mrb[0].mxu0
      %v619 = vadd.f32 %v495, %v618
      %v620 = vpop.f32.mrb[0].mxu0
      %621 = vmatprep.mubr.f32.mxu0 0.0
      %622 = vmatmul.mubr.f32.gmra.mrb[0].mxu0 %v520
      %v623 = vpop.f32.mrb[0].mxu0
      %v624 = vadd.f32 %v496, %v623
      %v625 = vpop.f32.mrb[0].mxu0
      %626 = vdwg.mxu0
      %v627 = vmul.f32 %v589, %v609
      %v628 = vmul.f32 %v594, %v614
      %v629 = vmul.f32 %v599, %v619
      %v630 = vmul.f32 %v604, %v624
      %v631 = vmax.f32 %v627, 0.0
      %v632 = vmax.f32 %v628, 0.0
      %v633 = vmax.f32 %v629, 0.0
      %v634 = vmax.f32 %v630, 0.0
      %v635 = vadd.f32 %v631, %v589
      %v636 = vadd.f32 %v632, %v594
      %v637 = vadd.f32 %v633, %v599
      %v638 = vadd.f32 %v634, %v604
      %v639 = vadd.f32 %v635, %v360
      %v640 = vadd.f32 %v636, %v361
      %v641 = vadd.f32 %v637, %v362
      %v642 = vadd.f32 %v638, %v363
      %v643 = vld [vmem:[%s4] sm:$0xff]
      %v644 = vld [vmem:[%s4 + $0x8] sm:$0xff]
      %v645 = vld [vmem:[%s4 + $0x10] sm:$0xff]
      %v646 = vld [vmem:[%s4 + $0x18] sm:$0xff]
      %v647 = vld [vmem:[%s5] sm:$0xff]
      %v648 = vld [vmem:[%s5 + $0x8] sm:$0xff]
      %v649 = vld [vmem:[%s5 + $0x10] sm:$0xff]
      %v650 = vld [vmem:[%s5 + $0x18] sm:$0xff]
      %v651 = vadd.f32 %v639, %v640
      %v652 = vadd.f32 %v651, %v641
      %v653 = vadd.f32 %v652, %v642
      %v654 = vrot.slane %v653, 4
      %v655 = vadd.f32 %v653, %v654
      %v656 = vrot.slane %v655, 2
      %v657 = vadd.f32 %v655, %v656
      %v658 = vrot.slane %v657, 1
      %v659 = vadd.f32 %v657, %v658
      %v660 = vrcp.pop 32.0
      %v661 = vmul.f32 %v659, %v660
      %v662 = vsub.f32 %v639, %v661
      %v663 = vsub.f32 %v640, %v661
      %v664 = vsub.f32 %v641, %v661
      %v665 = vsub.f32 %v642, %v661
      %v666 = vmul.f32 %v662, %v662
      %v667 = vmul.f32 %v663, %v663
      %v668 = vmul.f32 %v664, %v664
      %v669 = vmul.f32 %v665, %v665
      %v670 = vadd.f32 %v666, %v667
      %v671 = vadd.f32 %v670, %v668
      %v672 = vadd.f32 %v671, %v669
      %v673 = vrot.slane %v672, 4
      %v674 = vadd.f32 %v672, %v673
      %v675 = vrot.slane %v674, 2
      %v676 = vadd.f32 %v674, %v675
      %v677 = vrot.slane %v676, 1
      %v678 = vadd.f32 %v676, %v677
      %v679 = vmul.f32 %v678, %v660
      %v680 = vadd.f32 %v679, 1e-05
      %v681 = vrsqrt.pop %v680
      %v682 = vmul.f32 %v662, %v681
      %v683 = vmul.f32 %v663, %v681
      %v684 = vmul.f32 %v664, %v681
      %v685 = vmul.f32 %v665, %v681
      %687 = vset.pattern.permute.xlu0 0
      %688 = vperm.xlu0 %687, %v643
      %v689 = vpop.permute.xlu0 %688
      %692 = vset.pattern.permute.xlu0 0
      %693 = vperm.xlu0 %692, %v644
      %v694 = vpop.permute.xlu0 %693
      %697 = vset.pattern.permute.xlu0 0
      %698 = vperm.xlu0 %697, %v645
      %v699 = vpop.permute.xlu0 %698
      %702 = vset.pattern.permute.xlu0 0
      %703 = vperm.xlu0 %702, %v646
      %v704 = vpop.permute.xlu0 %703
      %v706 = vmul.f32 %v682, %v689
      %v707 = vmul.f32 %v683, %v694
      %v708 = vmul.f32 %v684, %v699
      %v709 = vmul.f32 %v685, %v704
      %711 = vset.pattern.permute.xlu0 0
      %712 = vperm.xlu0 %711, %v647
      %v713 = vpop.permute.xlu0 %712
      %716 = vset.pattern.permute.xlu0 0
      %717 = vperm.xlu0 %716, %v648
      %v718 = vpop.permute.xlu0 %717
      %721 = vset.pattern.permute.xlu0 0
      %722 = vperm.xlu0 %721, %v649
      %v723 = vpop.permute.xlu0 %722
      %726 = vset.pattern.permute.xlu0 0
      %727 = vperm.xlu0 %726, %v650
      %v728 = vpop.permute.xlu0 %727
      %v730 = vadd.f32 %v706, %v713
      %v731 = vadd.f32 %v707, %v718
      %v732 = vadd.f32 %v708, %v723
      %v733 = vadd.f32 %v709, %v728
      %v735 = vsel %vm497, %v364, 0
      %v738 = vsel %vm497, %v365, 0
      %v741 = vsel %vm497, %v366, 0
      %v744 = vsel %vm497, %v367, 0
      %746 = vmatprep.subr.mxu0 0.0
      %747 = vmatpush1.msra.mxu0 %v360
      %748 = vmatprep.subr.mxu0 0.0
      %749 = vmatpush1.msra.mxu0 %v361
      %750 = vmatprep.subr.mxu0 0.0
      %751 = vmatpush1.msra.mxu0 %v362
      %752 = vmatprep.subr.mxu0 0.0
      %753 = vmatpush1.msra.mxu0 %v363
      %754 = vmatprep.subr.mxu0 0.0
      %755 = vmatpush1.msra.mxu0 0.0
      %756 = vmatprep.subr.mxu0 0.0
      %757 = vmatpush1.msra.mxu0 0.0
      %758 = vmatprep.subr.mxu0 0.0
      %759 = vmatpush1.msra.mxu0 0.0
      %760 = vmatprep.subr.mxu0 0.0
      %761 = vmatpush1.msra.mxu0 0.0
      %762 = vmatprep.subr.mxu0 0.0
      %763 = vmatpush1.msra.mxu0 0.0
      %764 = vmatprep.subr.mxu0 0.0
      %765 = vmatpush1.msra.mxu0 0.0
      %766 = vmatprep.subr.mxu0 0.0
      %767 = vmatpush1.msra.mxu0 0.0
      %768 = vmatprep.subr.mxu0 0.0
      %769 = vmatpush1.msra.mxu0 0.0
      %770 = vmatprep.subr.mxu0 0.0
      %771 = vmatpush1.msra.mxu0 0.0
      %772 = vmatprep.subr.mxu0 0.0
      %773 = vmatpush1.msra.mxu0 0.0
      %774 = vmatprep.subr.mxu0 0.0
      %775 = vmatpush1.msra.mxu0 0.0
      %776 = vmatprep.subr.mxu0 0.0
      %777 = vmatpush1.msra.mxu0 0.0
      %778 = vmatprep.subr.mxu0 0.0
      %779 = vmatpush1.msra.mxu0 0.0
      %780 = vmatprep.subr.mxu0 0.0
      %781 = vmatpush1.msra.mxu0 0.0
      %782 = vmatprep.subr.mxu0 0.0
      %783 = vmatpush1.msra.mxu0 0.0
      %784 = vmatprep.subr.mxu0 0.0
      %785 = vmatpush1.msra.mxu0 0.0
      %786 = vmatprep.subr.mxu0 0.0
      %787 = vmatpush1.msra.mxu0 0.0
      %788 = vmatprep.subr.mxu0 0.0
      %789 = vmatpush1.msra.mxu0 0.0
      %790 = vmatprep.subr.mxu0 0.0
      %791 = vmatpush1.msra.mxu0 0.0
      %792 = vmatprep.subr.mxu0 0.0
      %793 = vmatpush1.msra.mxu0 0.0
      %794 = vmatprep.subr.mxu0 0.0
      %795 = vmatpush1.msra.mxu0 0.0
      %796 = vmatprep.subr.mxu0 0.0
      %797 = vmatpush1.msra.mxu0 0.0
      %798 = vmatprep.subr.mxu0 0.0
      %799 = vmatpush1.msra.mxu0 0.0
      %800 = vmatprep.subr.mxu0 0.0
      %801 = vmatpush1.msra.mxu0 0.0
      %802 = vmatprep.subr.mxu0 0.0
      %803 = vmatpush1.msra.mxu0 0.0
      %804 = vmatprep.subr.mxu0 0.0
      %805 = vmatpush1.msra.mxu0 0.0
      %806 = vmatprep.subr.mxu0 0.0
      %807 = vmatpush1.msra.mxu0 0.0
      %808 = vmatprep.subr.mxu0 0.0
      %809 = vmatpush1.msra.mxu0 0.0
      %810 = vmatprep.mubr.f32.mxu0 0.0
      %811 = vmatmul.mubr.f32.gmra.mrb[0].mxu0 %v735
      %v812 = vpop.f32.mrb[0].mxu0
      %v813 = vadd.f32 0.0, %v812
      %v814 = vpop.f32.mrb[0].mxu0
      %815 = vmatprep.mubr.f32.mxu0 0.0
      %816 = vmatmul.mubr.f32.gmra.mrb[0].mxu0 %v738
      %v817 = vpop.f32.mrb[0].mxu0
      %v818 = vadd.f32 0.0, %v817
      %v819 = vpop.f32.mrb[0].mxu0
      %820 = vmatprep.mubr.f32.mxu0 0.0
      %821 = vmatmul.mubr.f32.gmra.mrb[0].mxu0 %v741
      %v822 = vpop.f32.mrb[0].mxu0
      %v823 = vadd.f32 0.0, %v822
      %v824 = vpop.f32.mrb[0].mxu0
      %825 = vmatprep.mubr.f32.mxu0 0.0
      %826 = vmatmul.mubr.f32.gmra.mrb[0].mxu0 %v744
      %v827 = vpop.f32.mrb[0].mxu0
      %v828 = vadd.f32 0.0, %v827
      %v829 = vpop.f32.mrb[0].mxu0
      %830 = vdwg.mxu0
      %v831 = vmax.f32 %v813, %v818
      %v832 = vmax.f32 %v823, %v828
      %v833 = vmax.f32 %v831, %v832
      %v834 = vrot.slane %v833, 4
      %v835 = vmax.f32 %v833, %v834
      %v836 = vrot.slane %v835, 2
      %v837 = vmax.f32 %v835, %v836
      %v838 = vrot.slane %v837, 1
      %v839 = vmax.f32 %v837, %v838
      %v840 = vsub.f32 %v813, %v839
      %v841 = vsub.f32 %v818, %v839
      %v842 = vsub.f32 %v823, %v839
      %v843 = vsub.f32 %v828, %v839
      %v844 = vmul.f32 %v840, 1.442695
      %v845 = vpow.pop %v844
      %v846 = vmul.f32 %v841, 1.442695
      %v847 = vpow.pop %v846
      %v848 = vmul.f32 %v842, 1.442695
      %v849 = vpow.pop %v848
      %v850 = vmul.f32 %v843, 1.442695
      %v851 = vpow.pop %v850
      %v852 = vadd.f32 %v845, %v847
      %v853 = vadd.f32 %v852, %v849
      %v854 = vadd.f32 %v853, %v851
      %v855 = vrot.slane %v854, 4
      %v856 = vadd.f32 %v854, %v855
      %v857 = vrot.slane %v856, 2
      %v858 = vadd.f32 %v856, %v857
      %v859 = vrot.slane %v858, 1
      %v860 = vadd.f32 %v858, %v859
      %v861 = vrcp.pop %v860
      %v862 = vmul.f32 %v845, %v861
      %v863 = vmul.f32 %v847, %v861
      %v864 = vmul.f32 %v849, %v861
      %v865 = vmul.f32 %v851, %v861
      %866 = vmatprep.subr.mxu0 0.0
      %867 = vmatpush1.xpose.msra.mxu0 %v862
      %868 = vmatprep.subr.mxu0 0.0
      %869 = vmatpush1.xpose.msra.mxu0 %v863
      %870 = vmatprep.subr.mxu0 0.0
      %871 = vmatpush1.xpose.msra.mxu0 %v864
      %872 = vmatprep.subr.mxu0 0.0
      %873 = vmatpush1.xpose.msra.mxu0 %v865
      %874 = vmatprep.subr.mxu0 0.0
      %875 = vmatpush1.xpose.msra.mxu0 0.0
      %876 = vmatprep.subr.mxu0 0.0
      %877 = vmatpush1.xpose.msra.mxu0 0.0
      %878 = vmatprep.subr.mxu0 0.0
      %879 = vmatpush1.xpose.msra.mxu0 0.0
      %880 = vmatprep.subr.mxu0 0.0
      %881 = vmatpush1.xpose.msra.mxu0 0.0
      %882 = vmatprep.subr.mxu0 0.0
      %883 = vmatpush1.xpose.msra.mxu0 0.0
      %884 = vmatprep.subr.mxu0 0.0
      %885 = vmatpush1.xpose.msra.mxu0 0.0
      %886 = vmatprep.subr.mxu0 0.0
      %887 = vmatpush1.xpose.msra.mxu0 0.0
      %888 = vmatprep.subr.mxu0 0.0
      %889 = vmatpush1.xpose.msra.mxu0 0.0
      %890 = vmatprep.subr.mxu0 0.0
      %891 = vmatpush1.xpose.msra.mxu0 0.0
      %892 = vmatprep.subr.mxu0 0.0
      %893 = vmatpush1.xpose.msra.mxu0 0.0
      %894 = vmatprep.subr.mxu0 0.0
      %895 = vmatpush1.xpose.msra.mxu0 0.0
      %896 = vmatprep.subr.mxu0 0.0
      %897 = vmatpush1.xpose.msra.mxu0 0.0
      %898 = vmatprep.subr.mxu0 0.0
      %899 = vmatpush1.xpose.msra.mxu0 0.0
      %900 = vmatprep.subr.mxu0 0.0
      %901 = vmatpush1.xpose.msra.mxu0 0.0
      %902 = vmatprep.subr.mxu0 0.0
      %903 = vmatpush1.xpose.msra.mxu0 0.0
      %904 = vmatprep.subr.mxu0 0.0
      %905 = vmatpush1.xpose.msra.mxu0 0.0
      %906 = vmatprep.subr.mxu0 0.0
      %907 = vmatpush1.xpose.msra.mxu0 0.0
      %908 = vmatprep.subr.mxu0 0.0
      %909 = vmatpush1.xpose.msra.mxu0 0.0
      %910 = vmatprep.subr.mxu0 0.0
      %911 = vmatpush1.xpose.msra.mxu0 0.0
      %912 = vmatprep.subr.mxu0 0.0
      %913 = vmatpush1.xpose.msra.mxu0 0.0
      %914 = vmatprep.subr.mxu0 0.0
      %915 = vmatpush1.xpose.msra.mxu0 0.0
      %916 = vmatprep.subr.mxu0 0.0
      %917 = vmatpush1.xpose.msra.mxu0 0.0
      %918 = vmatprep.subr.mxu0 0.0
      %919 = vmatpush1.xpose.msra.mxu0 0.0
      %920 = vmatprep.subr.mxu0 0.0
      %921 = vmatpush1.xpose.msra.mxu0 0.0
      %922 = vmatprep.subr.mxu0 0.0
      %923 = vmatpush1.xpose.msra.mxu0 0.0
      %924 = vmatprep.subr.mxu0 0.0
      %925 = vmatpush1.xpose.msra.mxu0 0.0
      %926 = vmatprep.subr.mxu0 0.0
      %927 = vmatpush1.xpose.msra.mxu0 0.0
      %928 = vmatprep.subr.mxu0 0.0
      %929 = vmatpush1.xpose.msra.mxu0 0.0
      %930 = vmatprep.mubr.f32.mxu0 0.0
      %931 = vmatmul.mubr.f32.gmra.mrb[0].mxu0 %v360
      %v932 = vpop.f32.mrb[0].mxu0
      %v933 = vadd.f32 0.0, %v932
      %v934 = vpop.f32.mrb[0].mxu0
      %935 = vmatprep.mubr.f32.mxu0 0.0
      %936 = vmatmul.mubr.f32.gmra.mrb[0].mxu0 %v361
      %v937 = vpop.f32.mrb[0].mxu0
      %v938 = vadd.f32 0.0, %v937
      %v939 = vpop.f32.mrb[0].mxu0
      %940 = vmatprep.mubr.f32.mxu0 0.0
      %941 = vmatmul.mubr.f32.gmra.mrb[0].mxu0 %v362
      %v942 = vpop.f32.mrb[0].mxu0
      %v943 = vadd.f32 0.0, %v942
      %v944 = vpop.f32.mrb[0].mxu0
      %945 = vmatprep.mubr.f32.mxu0 0.0
      %946 = vmatmul.mubr.f32.gmra.mrb[0].mxu0 %v363
      %v947 = vpop.f32.mrb[0].mxu0
      %v948 = vadd.f32 0.0, %v947
      %v949 = vpop.f32.mrb[0].mxu0
      %950 = vdwg.mxu0
      %v952 = vsel %vm497, %v933, 0
      %v955 = vsel %vm497, %v938, 0
      %v958 = vsel %vm497, %v943, 0
      %v961 = vsel %vm497, %v948, 0
      %963 = vmatprep.subr.mxu0 0.0
      %964 = vmatpush1.msra.mxu0 %v368
      %965 = vmatprep.subr.mxu0 0.0
      %966 = vmatpush1.msra.mxu0 %v369
      %967 = vmatprep.subr.mxu0 0.0
      %968 = vmatpush1.msra.mxu0 %v370
      %969 = vmatprep.subr.mxu0 0.0
      %970 = vmatpush1.msra.mxu0 %v371
      %971 = vmatprep.subr.mxu0 0.0
      %972 = vmatpush1.msra.mxu0 0.0
      %973 = vmatprep.subr.mxu0 0.0
      %974 = vmatpush1.msra.mxu0 0.0
      %975 = vmatprep.subr.mxu0 0.0
      %976 = vmatpush1.msra.mxu0 0.0
      %977 = vmatprep.subr.mxu0 0.0
      %978 = vmatpush1.msra.mxu0 0.0
      %979 = vmatprep.subr.mxu0 0.0
      %980 = vmatpush1.msra.mxu0 0.0
      %981 = vmatprep.subr.mxu0 0.0
      %982 = vmatpush1.msra.mxu0 0.0
      %983 = vmatprep.subr.mxu0 0.0
      %984 = vmatpush1.msra.mxu0 0.0
      %985 = vmatprep.subr.mxu0 0.0
      %986 = vmatpush1.msra.mxu0 0.0
      %987 = vmatprep.subr.mxu0 0.0
      %988 = vmatpush1.msra.mxu0 0.0
      %989 = vmatprep.subr.mxu0 0.0
      %990 = vmatpush1.msra.mxu0 0.0
      %991 = vmatprep.subr.mxu0 0.0
      %992 = vmatpush1.msra.mxu0 0.0
      %993 = vmatprep.subr.mxu0 0.0
      %994 = vmatpush1.msra.mxu0 0.0
      %995 = vmatprep.subr.mxu0 0.0
      %996 = vmatpush1.msra.mxu0 0.0
      %997 = vmatprep.subr.mxu0 0.0
      %998 = vmatpush1.msra.mxu0 0.0
      %999 = vmatprep.subr.mxu0 0.0
      %1000 = vmatpush1.msra.mxu0 0.0
      %1001 = vmatprep.subr.mxu0 0.0
      %1002 = vmatpush1.msra.mxu0 0.0
      %1003 = vmatprep.subr.mxu0 0.0
      %1004 = vmatpush1.msra.mxu0 0.0
      %1005 = vmatprep.subr.mxu0 0.0
      %1006 = vmatpush1.msra.mxu0 0.0
      %1007 = vmatprep.subr.mxu0 0.0
      %1008 = vmatpush1.msra.mxu0 0.0
      %1009 = vmatprep.subr.mxu0 0.0
      %1010 = vmatpush1.msra.mxu0 0.0
      %1011 = vmatprep.subr.mxu0 0.0
      %1012 = vmatpush1.msra.mxu0 0.0
      %1013 = vmatprep.subr.mxu0 0.0
      %1014 = vmatpush1.msra.mxu0 0.0
      %1015 = vmatprep.subr.mxu0 0.0
      %1016 = vmatpush1.msra.mxu0 0.0
      %1017 = vmatprep.subr.mxu0 0.0
      %1018 = vmatpush1.msra.mxu0 0.0
      %1019 = vmatprep.subr.mxu0 0.0
      %1020 = vmatpush1.msra.mxu0 0.0
      %1021 = vmatprep.subr.mxu0 0.0
      %1022 = vmatpush1.msra.mxu0 0.0
      %1023 = vmatprep.subr.mxu0 0.0
      %1024 = vmatpush1.msra.mxu0 0.0
      %1025 = vmatprep.subr.mxu0 0.0
      %1026 = vmatpush1.msra.mxu0 0.0
      %1027 = vmatprep.mubr.f32.mxu0 0.0
      %1028 = vmatmul.mubr.f32.gmra.mrb[0].mxu0 %v952
      %v1029 = vpop.f32.mrb[0].mxu0
      %v1030 = vadd.f32 0.0, %v1029
      %v1031 = vpop.f32.mrb[0].mxu0
      %1032 = vmatprep.mubr.f32.mxu0 0.0
      %1033 = vmatmul.mubr.f32.gmra.mrb[0].mxu0 %v955
      %v1034 = vpop.f32.mrb[0].mxu0
      %v1035 = vadd.f32 0.0, %v1034
      %v1036 = vpop.f32.mrb[0].mxu0
      %1037 = vmatprep.mubr.f32.mxu0 0.0
      %1038 = vmatmul.mubr.f32.gmra.mrb[0].mxu0 %v958
      %v1039 = vpop.f32.mrb[0].mxu0
      %v1040 = vadd.f32 0.0, %v1039
      %v1041 = vpop.f32.mrb[0].mxu0
      %1042 = vmatprep.mubr.f32.mxu0 0.0
      %1043 = vmatmul.mubr.f32.gmra.mrb[0].mxu0 %v961
      %v1044 = vpop.f32.mrb[0].mxu0
      %v1045 = vadd.f32 0.0, %v1044
      %v1046 = vpop.f32.mrb[0].mxu0
      %1047 = vdwg.mxu0
      %v1048 = vmax.f32 %v1030, 0.0
      %v1049 = vmax.f32 %v1035, 0.0
      %v1050 = vmax.f32 %v1040, 0.0
      %v1051 = vmax.f32 %v1045, 0.0
      %v1052 = vadd.f32 %v1048, %v933
      %v1053 = vadd.f32 %v1049, %v938
      %v1054 = vadd.f32 %v1050, %v943
      %v1055 = vadd.f32 %v1051, %v948
      %v1057 = vsel %vm497, %v1052, 0
      %v1060 = vsel %vm497, %v1053, 0
      %v1063 = vsel %vm497, %v1054, 0
      %v1066 = vsel %vm497, %v1055, 0
      %1068 = vmatprep.subr.mxu0 0.0
      %1069 = vmatpush1.msra.mxu0 %v862
      %1070 = vmatprep.subr.mxu0 0.0
      %1071 = vmatpush1.msra.mxu0 %v863
      %1072 = vmatprep.subr.mxu0 0.0
      %1073 = vmatpush1.msra.mxu0 %v864
      %1074 = vmatprep.subr.mxu0 0.0
      %1075 = vmatpush1.msra.mxu0 %v865
      %1076 = vmatprep.subr.mxu0 0.0
      %1077 = vmatpush1.msra.mxu0 0.0
      %1078 = vmatprep.subr.mxu0 0.0
      %1079 = vmatpush1.msra.mxu0 0.0
      %1080 = vmatprep.subr.mxu0 0.0
      %1081 = vmatpush1.msra.mxu0 0.0
      %1082 = vmatprep.subr.mxu0 0.0
      %1083 = vmatpush1.msra.mxu0 0.0
      %1084 = vmatprep.subr.mxu0 0.0
      %1085 = vmatpush1.msra.mxu0 0.0
      %1086 = vmatprep.subr.mxu0 0.0
      %1087 = vmatpush1.msra.mxu0 0.0
      %1088 = vmatprep.subr.mxu0 0.0
      %1089 = vmatpush1.msra.mxu0 0.0
      %1090 = vmatprep.subr.mxu0 0.0
      %1091 = vmatpush1.msra.mxu0 0.0
      %1092 = vmatprep.subr.mxu0 0.0
      %1093 = vmatpush1.msra.mxu0 0.0
      %1094 = vmatprep.subr.mxu0 0.0
      %1095 = vmatpush1.msra.mxu0 0.0
      %1096 = vmatprep.subr.mxu0 0.0
      %1097 = vmatpush1.msra.mxu0 0.0
      %1098 = vmatprep.subr.mxu0 0.0
      %1099 = vmatpush1.msra.mxu0 0.0
      %1100 = vmatprep.subr.mxu0 0.0
      %1101 = vmatpush1.msra.mxu0 0.0
      %1102 = vmatprep.subr.mxu0 0.0
      %1103 = vmatpush1.msra.mxu0 0.0
      %1104 = vmatprep.subr.mxu0 0.0
      %1105 = vmatpush1.msra.mxu0 0.0
      %1106 = vmatprep.subr.mxu0 0.0
      %1107 = vmatpush1.msra.mxu0 0.0
      %1108 = vmatprep.subr.mxu0 0.0
      %1109 = vmatpush1.msra.mxu0 0.0
      %1110 = vmatprep.subr.mxu0 0.0
      %1111 = vmatpush1.msra.mxu0 0.0
      %1112 = vmatprep.subr.mxu0 0.0
      %1113 = vmatpush1.msra.mxu0 0.0
      %1114 = vmatprep.subr.mxu0 0.0
      %1115 = vmatpush1.msra.mxu0 0.0
      %1116 = vmatprep.subr.mxu0 0.0
      %1117 = vmatpush1.msra.mxu0 0.0
      %1118 = vmatprep.subr.mxu0 0.0
      %1119 = vmatpush1.msra.mxu0 0.0
      %1120 = vmatprep.subr.mxu0 0.0
      %1121 = vmatpush1.msra.mxu0 0.0
      %1122 = vmatprep.subr.mxu0 0.0
      %1123 = vmatpush1.msra.mxu0 0.0
      %1124 = vmatprep.subr.mxu0 0.0
      %1125 = vmatpush1.msra.mxu0 0.0
      %1126 = vmatprep.subr.mxu0 0.0
      %1127 = vmatpush1.msra.mxu0 0.0
      %1128 = vmatprep.subr.mxu0 0.0
      %1129 = vmatpush1.msra.mxu0 0.0
      %1130 = vmatprep.subr.mxu0 0.0
      %1131 = vmatpush1.msra.mxu0 0.0
      %1132 = vmatprep.mubr.f32.mxu0 0.0
      %1133 = vmatmul.mubr.f32.gmra.mrb[0].mxu0 %v1057
      %v1134 = vpop.f32.mrb[0].mxu0
      %v1135 = vadd.f32 0.0, %v1134
      %v1136 = vpop.f32.mrb[0].mxu0
      %1137 = vmatprep.mubr.f32.mxu0 0.0
      %1138 = vmatmul.mubr.f32.gmra.mrb[0].mxu0 %v1060
      %v1139 = vpop.f32.mrb[0].mxu0
      %v1140 = vadd.f32 0.0, %v1139
      %v1141 = vpop.f32.mrb[0].mxu0
      %1142 = vmatprep.mubr.f32.mxu0 0.0
      %1143 = vmatmul.mubr.f32.gmra.mrb[0].mxu0 %v1063
      %v1144 = vpop.f32.mrb[0].mxu0
      %v1145 = vadd.f32 0.0, %v1144
      %v1146 = vpop.f32.mrb[0].mxu0
      %1147 = vmatprep.mubr.f32.mxu0 0.0
      %1148 = vmatmul.mubr.f32.gmra.mrb[0].mxu0 %v1066
      %v1149 = vpop.f32.mrb[0].mxu0
      %v1150 = vadd.f32 0.0, %v1149
      %v1151 = vpop.f32.mrb[0].mxu0
      %1152 = vdwg.mxu0
      %v1153 = vmax.f32 %v1135, 0.0
      %v1154 = vmax.f32 %v1140, 0.0
      %v1155 = vmax.f32 %v1145, 0.0
      %v1156 = vmax.f32 %v1150, 0.0
      %v1157 = vadd.f32 %v1153, %v360
      %v1158 = vadd.f32 %v1154, %v361
      %v1159 = vadd.f32 %v1155, %v362
      %v1160 = vadd.f32 %v1156, %v363
      %v1161 = vadd.f32 %v1157, %v1158
      %v1162 = vadd.f32 %v1161, %v1159
      %v1163 = vadd.f32 %v1162, %v1160
      %v1164 = vrot.slane %v1163, 4
      %v1165 = vadd.f32 %v1163, %v1164
      %v1166 = vrot.slane %v1165, 2
      %v1167 = vadd.f32 %v1165, %v1166
      %v1168 = vrot.slane %v1167, 1
      %v1169 = vadd.f32 %v1167, %v1168
      %v1170 = vmul.f32 %v1169, %v660
      %v1171 = vsub.f32 %v1157, %v1170
      %v1172 = vsub.f32 %v1158, %v1170
      %v1173 = vsub.f32 %v1159, %v1170
      %v1174 = vsub.f32 %v1160, %v1170
      %v1175 = vmul.f32 %v1171, %v1171
      %v1176 = vmul.f32 %v1172, %v1172
      %v1177 = vmul.f32 %v1173, %v1173
      %v1178 = vmul.f32 %v1174, %v1174
      %v1179 = vadd.f32 %v1175, %v1176
      %v1180 = vadd.f32 %v1179, %v1177
      %v1181 = vadd.f32 %v1180, %v1178
      %v1182 = vrot.slane %v1181, 4
      %v1183 = vadd.f32 %v1181, %v1182
      %v1184 = vrot.slane %v1183, 2
      %v1185 = vadd.f32 %v1183, %v1184
      %v1186 = vrot.slane %v1185, 1
      %v1187 = vadd.f32 %v1185, %v1186
      %v1188 = vmul.f32 %v1187, %v660
      %v1189 = vadd.f32 %v1188, 1e-05
      %v1190 = vrsqrt.pop %v1189
      %v1191 = vmul.f32 %v1171, %v1190
      %v1192 = vmul.f32 %v1172, %v1190
      %v1193 = vmul.f32 %v1173, %v1190
      %v1194 = vmul.f32 %v1174, %v1190
      %1196 = vset.pattern.permute.xlu0 0
      %1197 = vperm.xlu0 %1196, %v372
      %v1198 = vpop.permute.xlu0 %1197
      %1201 = vset.pattern.permute.xlu0 0
      %1202 = vperm.xlu0 %1201, %v373
      %v1203 = vpop.permute.xlu0 %1202
      %1206 = vset.pattern.permute.xlu0 0
      %1207 = vperm.xlu0 %1206, %v374
      %v1208 = vpop.permute.xlu0 %1207
      %1211 = vset.pattern.permute.xlu0 0
      %1212 = vperm.xlu0 %1211, %v375
      %v1213 = vpop.permute.xlu0 %1212
      %v1215 = vmul.f32 %v1191, %v1198
      %v1216 = vmul.f32 %v1192, %v1203
      %v1217 = vmul.f32 %v1193, %v1208
      %v1218 = vmul.f32 %v1194, %v1213
      %1220 = vset.pattern.permute.xlu0 0
      %1221 = vperm.xlu0 %1220, %v376
      %v1222 = vpop.permute.xlu0 %1221
      %1225 = vset.pattern.permute.xlu0 0
      %1226 = vperm.xlu0 %1225, %v377
      %v1227 = vpop.permute.xlu0 %1226
      %1230 = vset.pattern.permute.xlu0 0
      %1231 = vperm.xlu0 %1230, %v378
      %v1232 = vpop.permute.xlu0 %1231
      %1235 = vset.pattern.permute.xlu0 0
      %1236 = vperm.xlu0 %1235, %v379
      %v1237 = vpop.permute.xlu0 %1236
      %v1239 = vadd.f32 %v1215, %v1222
      %v1240 = vadd.f32 %v1216, %v1227
      %v1241 = vadd.f32 %v1217, %v1232
      %v1242 = vadd.f32 %v1218, %v1237
      %v1243 = vadd.f32 %v730, %v1239
      %v1244 = vadd.f32 %v731, %v1240
      %v1245 = vadd.f32 %v732, %v1241
      %v1246 = vadd.f32 %v733, %v1242
      %v1247 = vmul.f32 %v1243, 0.5
      %v1248 = vmul.f32 %v1244, 0.5
      %v1249 = vmul.f32 %v1245, 0.5
      %v1250 = vmul.f32 %v1246, 0.5
      %s1251 = scalar_lea.vmem %s1, 128
      %v1252 = vld [vmem:[%s1251] sm:$0xff]
      %v1253 = vld [vmem:[%s1251 + $0x8] sm:$0xff]
      %v1254 = vld [vmem:[%s1251 + $0x10] sm:$0xff]
      %v1255 = vld [vmem:[%s1251 + $0x18] sm:$0xff]
      %v1256 = vld [vmem:[%s1251 + $0x20] sm:$0xff]
      %v1257 = vld [vmem:[%s1251 + $0x28] sm:$0xff]
      %v1258 = vld [vmem:[%s1251 + $0x30] sm:$0xff]
      %v1259 = vld [vmem:[%s1251 + $0x38] sm:$0xff]
      %v1260 = vld [vmem:[%s1251 + $0x40] sm:$0xff]
      %v1261 = vld [vmem:[%s1251 + $0x48] sm:$0xff]
      %v1262 = vld [vmem:[%s1251 + $0x50] sm:$0xff]
      %v1263 = vld [vmem:[%s1251 + $0x58] sm:$0xff]
      %v1264 = vld [vmem:[%s1251 + $0x60] sm:$0xff]
      %v1265 = vld [vmem:[%s1251 + $0x68] sm:$0xff]
      %v1266 = vld [vmem:[%s1251 + $0x70] sm:$0xff]
      %v1267 = vld [vmem:[%s1251 + $0x78] sm:$0xff]
      %1268 = vmatprep.subr.mxu0 0.0
      %1269 = vmatpush1.msra.mxu0 %v1252
      %1270 = vmatprep.subr.mxu0 0.0
      %1271 = vmatpush1.msra.mxu0 %v1253
      %1272 = vmatprep.subr.mxu0 0.0
      %1273 = vmatpush1.msra.mxu0 %v1254
      %1274 = vmatprep.subr.mxu0 0.0
      %1275 = vmatpush1.msra.mxu0 %v1255
      %1276 = vmatprep.subr.mxu0 0.0
      %1277 = vmatpush1.msra.mxu0 %v1256
      %1278 = vmatprep.subr.mxu0 0.0
      %1279 = vmatpush1.msra.mxu0 %v1257
      %1280 = vmatprep.subr.mxu0 0.0
      %1281 = vmatpush1.msra.mxu0 %v1258
      %1282 = vmatprep.subr.mxu0 0.0
      %1283 = vmatpush1.msra.mxu0 %v1259
      %1284 = vmatprep.subr.mxu0 0.0
      %1285 = vmatpush1.msra.mxu0 %v1260
      %1286 = vmatprep.subr.mxu0 0.0
      %1287 = vmatpush1.msra.mxu0 %v1261
      %1288 = vmatprep.subr.mxu0 0.0
      %1289 = vmatpush1.msra.mxu0 %v1262
      %1290 = vmatprep.subr.mxu0 0.0
      %1291 = vmatpush1.msra.mxu0 %v1263
      %1292 = vmatprep.subr.mxu0 0.0
      %1293 = vmatpush1.msra.mxu0 %v1264
      %1294 = vmatprep.subr.mxu0 0.0
      %1295 = vmatpush1.msra.mxu0 %v1265
      %1296 = vmatprep.subr.mxu0 0.0
      %1297 = vmatpush1.msra.mxu0 %v1266
      %1298 = vmatprep.subr.mxu0 0.0
      %1299 = vmatpush1.msra.mxu0 %v1267
      %1300 = vmatprep.subr.mxu0 0.0
      %1301 = vmatpush1.msra.mxu0 0.0
      %1302 = vmatprep.subr.mxu0 0.0
      %1303 = vmatpush1.msra.mxu0 0.0
      %1304 = vmatprep.subr.mxu0 0.0
      %1305 = vmatpush1.msra.mxu0 0.0
      %1306 = vmatprep.subr.mxu0 0.0
      %1307 = vmatpush1.msra.mxu0 0.0
      %1308 = vmatprep.subr.mxu0 0.0
      %1309 = vmatpush1.msra.mxu0 0.0
      %1310 = vmatprep.subr.mxu0 0.0
      %1311 = vmatpush1.msra.mxu0 0.0
      %1312 = vmatprep.subr.mxu0 0.0
      %1313 = vmatpush1.msra.mxu0 0.0
      %1314 = vmatprep.subr.mxu0 0.0
      %1315 = vmatpush1.msra.mxu0 0.0
      %1316 = vmatprep.subr.mxu0 0.0
      %1317 = vmatpush1.msra.mxu0 0.0
      %1318 = vmatprep.subr.mxu0 0.0
      %1319 = vmatpush1.msra.mxu0 0.0
      %1320 = vmatprep.subr.mxu0 0.0
      %1321 = vmatpush1.msra.mxu0 0.0
      %1322 = vmatprep.subr.mxu0 0.0
      %1323 = vmatpush1.msra.mxu0 0.0
      %1324 = vmatprep.subr.mxu0 0.0
      %1325 = vmatpush1.msra.mxu0 0.0
      %1326 = vmatprep.subr.mxu0 0.0
      %1327 = vmatpush1.msra.mxu0 0.0
      %1328 = vmatprep.subr.mxu0 0.0
      %1329 = vmatpush1.msra.mxu0 0.0
      %1330 = vmatprep.subr.mxu0 0.0
      %1331 = vmatpush1.msra.mxu0 0.0
      %1332 = vmatprep.mubr.f32.mxu0 0.0
      %1333 = vmatmul.mubr.f32.gmra.mrb[0].mxu0 %v1247
      %v1334 = vpop.f32.mrb[0].mxu0
      %v1335 = vadd.f32 0.0, %v1334
      %v1336 = vpop.f32.mrb[0].mxu0
      %1337 = vmatprep.mubr.f32.mxu0 0.0
      %1338 = vmatmul.mubr.f32.gmra.mrb[0].mxu0 %v1248
      %v1339 = vpop.f32.mrb[0].mxu0
      %v1340 = vadd.f32 0.0, %v1339
      %v1341 = vpop.f32.mrb[0].mxu0
      %1342 = vmatprep.mubr.f32.mxu0 0.0
      %1343 = vmatmul.mubr.f32.gmra.mrb[0].mxu0 %v1249
      %v1344 = vpop.f32.mrb[0].mxu0
      %v1345 = vadd.f32 0.0, %v1344
      %v1346 = vpop.f32.mrb[0].mxu0
      %1347 = vmatprep.mubr.f32.mxu0 0.0
      %1348 = vmatmul.mubr.f32.gmra.mrb[0].mxu0 %v1250
      %v1349 = vpop.f32.mrb[0].mxu0
      %v1350 = vadd.f32 0.0, %v1349
      %v1351 = vpop.f32.mrb[0].mxu0
      %1352 = vdwg.mxu0
      %s1353 = scalar_lea.vmem %s2, 64
      %v1354 = vld [vmem:[%s1353] sm:$0xff]
      %v1355 = vld [vmem:[%s1353 + $0x8] sm:$0xff]
      %v1356 = vld [vmem:[%s1353 + $0x10] sm:$0xff]
      %v1357 = vld [vmem:[%s1353 + $0x18] sm:$0xff]
      %v1358 = vld [vmem:[%s1353 + $0x20] sm:$0xff]
      %v1359 = vld [vmem:[%s1353 + $0x28] sm:$0xff]
      %v1360 = vld [vmem:[%s1353 + $0x30] sm:$0xff]
      %v1361 = vld [vmem:[%s1353 + $0x38] sm:$0xff]
      %s1362 = scalar_lea.vmem %s3, 64
      %v1363 = vld [vmem:[%s1362] sm:$0xff]
      %v1364 = vld [vmem:[%s1362 + $0x8] sm:$0xff]
      %v1365 = vld [vmem:[%s1362 + $0x10] sm:$0xff]
      %v1366 = vld [vmem:[%s1362 + $0x18] sm:$0xff]
      %v1367 = vld [vmem:[%s1362 + $0x20] sm:$0xff]
      %v1368 = vld [vmem:[%s1362 + $0x28] sm:$0xff]
      %v1369 = vld [vmem:[%s1362 + $0x30] sm:$0xff]
      %v1370 = vld [vmem:[%s1362 + $0x38] sm:$0xff]
      %v1372 = vsel %vm497, %v1354, 0
      %v1375 = vsel %vm497, %v1355, 0
      %v1378 = vsel %vm497, %v1356, 0
      %v1381 = vsel %vm497, %v1357, 0
      %v1384 = vsel %vm497, %v1358, 0
      %v1387 = vsel %vm497, %v1359, 0
      %v1390 = vsel %vm497, %v1360, 0
      %v1393 = vsel %vm497, %v1361, 0
      %1395 = vmatprep.subr.mxu0 0.0
      %1396 = vmatpush1.msra.mxu0 %v1335
      %1397 = vmatprep.subr.mxu0 0.0
      %1398 = vmatpush1.msra.mxu0 %v1340
      %1399 = vmatprep.subr.mxu0 0.0
      %1400 = vmatpush1.msra.mxu0 %v1345
      %1401 = vmatprep.subr.mxu0 0.0
      %1402 = vmatpush1.msra.mxu0 %v1350
      %1403 = vmatprep.subr.mxu0 0.0
      %1404 = vmatpush1.msra.mxu0 0.0
      %1405 = vmatprep.subr.mxu0 0.0
      %1406 = vmatpush1.msra.mxu0 0.0
      %1407 = vmatprep.subr.mxu0 0.0
      %1408 = vmatpush1.msra.mxu0 0.0
      %1409 = vmatprep.subr.mxu0 0.0
      %1410 = vmatpush1.msra.mxu0 0.0
      %1411 = vmatprep.subr.mxu0 0.0
      %1412 = vmatpush1.msra.mxu0 0.0
      %1413 = vmatprep.subr.mxu0 0.0
      %1414 = vmatpush1.msra.mxu0 0.0
      %1415 = vmatprep.subr.mxu0 0.0
      %1416 = vmatpush1.msra.mxu0 0.0
      %1417 = vmatprep.subr.mxu0 0.0
      %1418 = vmatpush1.msra.mxu0 0.0
      %1419 = vmatprep.subr.mxu0 0.0
      %1420 = vmatpush1.msra.mxu0 0.0
      %1421 = vmatprep.subr.mxu0 0.0
      %1422 = vmatpush1.msra.mxu0 0.0
      %1423 = vmatprep.subr.mxu0 0.0
      %1424 = vmatpush1.msra.mxu0 0.0
      %1425 = vmatprep.subr.mxu0 0.0
      %1426 = vmatpush1.msra.mxu0 0.0
      %1427 = vmatprep.subr.mxu0 0.0
      %1428 = vmatpush1.msra.mxu0 0.0
      %1429 = vmatprep.subr.mxu0 0.0
      %1430 = vmatpush1.msra.mxu0 0.0
      %1431 = vmatprep.subr.mxu0 0.0
      %1432 = vmatpush1.msra.mxu0 0.0
      %1433 = vmatprep.subr.mxu0 0.0
      %1434 = vmatpush1.msra.mxu0 0.0
      %1435 = vmatprep.subr.mxu0 0.0
      %1436 = vmatpush1.msra.mxu0 0.0
      %1437 = vmatprep.subr.mxu0 0.0
      %1438 = vmatpush1.msra.mxu0 0.0
      %1439 = vmatprep.subr.mxu0 0.0
      %1440 = vmatpush1.msra.mxu0 0.0
      %1441 = vmatprep.subr.mxu0 0.0
      %1442 = vmatpush1.msra.mxu0 0.0
      %1443 = vmatprep.subr.mxu0 0.0
      %1444 = vmatpush1.msra.mxu0 0.0
      %1445 = vmatprep.subr.mxu0 0.0
      %1446 = vmatpush1.msra.mxu0 0.0
      %1447 = vmatprep.subr.mxu0 0.0
      %1448 = vmatpush1.msra.mxu0 0.0
      %1449 = vmatprep.subr.mxu0 0.0
      %1450 = vmatpush1.msra.mxu0 0.0
      %1451 = vmatprep.subr.mxu0 0.0
      %1452 = vmatpush1.msra.mxu0 0.0
      %1453 = vmatprep.subr.mxu0 0.0
      %1454 = vmatpush1.msra.mxu0 0.0
      %1455 = vmatprep.subr.mxu0 0.0
      %1456 = vmatpush1.msra.mxu0 0.0
      %1457 = vmatprep.subr.mxu0 0.0
      %1458 = vmatpush1.msra.mxu0 0.0
      %1459 = vmatprep.mubr.f32.mxu0 0.0
      %1460 = vmatmul.mubr.f32.gmra.mrb[0].mxu0 %v1372
      %v1461 = vpop.f32.mrb[0].mxu0
      %v1462 = vadd.f32 %v1363, %v1461
      %v1463 = vpop.f32.mrb[0].mxu0
      %1464 = vmatprep.mubr.f32.mxu0 0.0
      %1465 = vmatmul.mubr.f32.gmra.mrb[0].mxu0 %v1375
      %v1466 = vpop.f32.mrb[0].mxu0
      %v1467 = vadd.f32 %v1364, %v1466
      %v1468 = vpop.f32.mrb[0].mxu0
      %1469 = vmatprep.mubr.f32.mxu0 0.0
      %1470 = vmatmul.mubr.f32.gmra.mrb[0].mxu0 %v1378
      %v1471 = vpop.f32.mrb[0].mxu0
      %v1472 = vadd.f32 %v1365, %v1471
      %v1473 = vpop.f32.mrb[0].mxu0
      %1474 = vmatprep.mubr.f32.mxu0 0.0
      %1475 = vmatmul.mubr.f32.gmra.mrb[0].mxu0 %v1381
      %v1476 = vpop.f32.mrb[0].mxu0
      %v1477 = vadd.f32 %v1366, %v1476
      %v1478 = vpop.f32.mrb[0].mxu0
      %1479 = vmatprep.mubr.f32.mxu0 0.0
      %1480 = vmatmul.mubr.f32.gmra.mrb[0].mxu0 %v1384
      %v1481 = vpop.f32.mrb[0].mxu0
      %v1482 = vadd.f32 %v1367, %v1481
      %v1483 = vpop.f32.mrb[0].mxu0
      %1484 = vmatprep.mubr.f32.mxu0 0.0
      %1485 = vmatmul.mubr.f32.gmra.mrb[0].mxu0 %v1387
      %v1486 = vpop.f32.mrb[0].mxu0
      %v1487 = vadd.f32 %v1368, %v1486
      %v1488 = vpop.f32.mrb[0].mxu0
      %1489 = vmatprep.mubr.f32.mxu0 0.0
      %1490 = vmatmul.mubr.f32.gmra.mrb[0].mxu0 %v1390
      %v1491 = vpop.f32.mrb[0].mxu0
      %v1492 = vadd.f32 %v1369, %v1491
      %v1493 = vpop.f32.mrb[0].mxu0
      %1494 = vmatprep.mubr.f32.mxu0 0.0
      %1495 = vmatmul.mubr.f32.gmra.mrb[0].mxu0 %v1393
      %v1496 = vpop.f32.mrb[0].mxu0
      %v1497 = vadd.f32 %v1370, %v1496
      %v1498 = vpop.f32.mrb[0].mxu0
      %1499 = vdwg.mxu0
      %v1500 = vmul.f32 %v1462, %v1482
      %v1501 = vmul.f32 %v1467, %v1487
      %v1502 = vmul.f32 %v1472, %v1492
      %v1503 = vmul.f32 %v1477, %v1497
      %v1504 = vmax.f32 %v1500, 0.0
      %v1505 = vmax.f32 %v1501, 0.0
      %v1506 = vmax.f32 %v1502, 0.0
      %v1507 = vmax.f32 %v1503, 0.0
      %v1508 = vadd.f32 %v1504, %v1462
      %v1509 = vadd.f32 %v1505, %v1467
      %v1510 = vadd.f32 %v1506, %v1472
      %v1511 = vadd.f32 %v1507, %v1477
      %v1512 = vadd.f32 %v1508, %v1247
      %v1513 = vadd.f32 %v1509, %v1248
      %v1514 = vadd.f32 %v1510, %v1249
      %v1515 = vadd.f32 %v1511, %v1250
      %s1516 = scalar_lea.vmem %s4, 32
      %v1517 = vld [vmem:[%s1516] sm:$0xff]
      %v1518 = vld [vmem:[%s1516 + $0x8] sm:$0xff]
      %v1519 = vld [vmem:[%s1516 + $0x10] sm:$0xff]
      %v1520 = vld [vmem:[%s1516 + $0x18] sm:$0xff]
      %s1521 = scalar_lea.vmem %s5, 32
      %v1522 = vld [vmem:[%s1521] sm:$0xff]
      %v1523 = vld [vmem:[%s1521 + $0x8] sm:$0xff]
      %v1524 = vld [vmem:[%s1521 + $0x10] sm:$0xff]
      %v1525 = vld [vmem:[%s1521 + $0x18] sm:$0xff]
      %v1526 = vadd.f32 %v1512, %v1513
      %v1527 = vadd.f32 %v1526, %v1514
      %v1528 = vadd.f32 %v1527, %v1515
      %v1529 = vrot.slane %v1528, 4
      %v1530 = vadd.f32 %v1528, %v1529
      %v1531 = vrot.slane %v1530, 2
      %v1532 = vadd.f32 %v1530, %v1531
      %v1533 = vrot.slane %v1532, 1
      %v1534 = vadd.f32 %v1532, %v1533
      %v1535 = vmul.f32 %v1534, %v660
      %v1536 = vsub.f32 %v1512, %v1535
      %v1537 = vsub.f32 %v1513, %v1535
      %v1538 = vsub.f32 %v1514, %v1535
      %v1539 = vsub.f32 %v1515, %v1535
      %v1540 = vmul.f32 %v1536, %v1536
      %v1541 = vmul.f32 %v1537, %v1537
      %v1542 = vmul.f32 %v1538, %v1538
      %v1543 = vmul.f32 %v1539, %v1539
      %v1544 = vadd.f32 %v1540, %v1541
      %v1545 = vadd.f32 %v1544, %v1542
      %v1546 = vadd.f32 %v1545, %v1543
      %v1547 = vrot.slane %v1546, 4
      %v1548 = vadd.f32 %v1546, %v1547
      %v1549 = vrot.slane %v1548, 2
      %v1550 = vadd.f32 %v1548, %v1549
      %v1551 = vrot.slane %v1550, 1
      %v1552 = vadd.f32 %v1550, %v1551
      %v1553 = vmul.f32 %v1552, %v660
      %v1554 = vadd.f32 %v1553, 1e-05
      %v1555 = vrsqrt.pop %v1554
      %v1556 = vmul.f32 %v1536, %v1555
      %v1557 = vmul.f32 %v1537, %v1555
      %v1558 = vmul.f32 %v1538, %v1555
      %v1559 = vmul.f32 %v1539, %v1555
      %1561 = vset.pattern.permute.xlu0 0
      %1562 = vperm.xlu0 %1561, %v1517
      %v1563 = vpop.permute.xlu0 %1562
      %1566 = vset.pattern.permute.xlu0 0
      %1567 = vperm.xlu0 %1566, %v1518
      %v1568 = vpop.permute.xlu0 %1567
      %1571 = vset.pattern.permute.xlu0 0
      %1572 = vperm.xlu0 %1571, %v1519
      %v1573 = vpop.permute.xlu0 %1572
      %1576 = vset.pattern.permute.xlu0 0
      %1577 = vperm.xlu0 %1576, %v1520
      %v1578 = vpop.permute.xlu0 %1577
      %v1580 = vmul.f32 %v1556, %v1563
      %v1581 = vmul.f32 %v1557, %v1568
      %v1582 = vmul.f32 %v1558, %v1573
      %v1583 = vmul.f32 %v1559, %v1578
      %1585 = vset.pattern.permute.xlu0 0
      %1586 = vperm.xlu0 %1585, %v1522
      %v1587 = vpop.permute.xlu0 %1586
      %1590 = vset.pattern.permute.xlu0 0
      %1591 = vperm.xlu0 %1590, %v1523
      %v1592 = vpop.permute.xlu0 %1591
      %1595 = vset.pattern.permute.xlu0 0
      %1596 = vperm.xlu0 %1595, %v1524
      %v1597 = vpop.permute.xlu0 %1596
      %1600 = vset.pattern.permute.xlu0 0
      %1601 = vperm.xlu0 %1600, %v1525
      %v1602 = vpop.permute.xlu0 %1601
      %v1604 = vadd.f32 %v1580, %v1587
      %v1605 = vadd.f32 %v1581, %v1592
      %v1606 = vadd.f32 %v1582, %v1597
      %v1607 = vadd.f32 %v1583, %v1602
      %1608 = vmatprep.subr.mxu0 0.0
      %1609 = vmatpush1.msra.mxu0 %v1247
      %1610 = vmatprep.subr.mxu0 0.0
      %1611 = vmatpush1.msra.mxu0 %v1248
      %1612 = vmatprep.subr.mxu0 0.0
      %1613 = vmatpush1.msra.mxu0 %v1249
      %1614 = vmatprep.subr.mxu0 0.0
      %1615 = vmatpush1.msra.mxu0 %v1250
      %1616 = vmatprep.subr.mxu0 0.0
      %1617 = vmatpush1.msra.mxu0 0.0
      %1618 = vmatprep.subr.mxu0 0.0
      %1619 = vmatpush1.msra.mxu0 0.0
      %1620 = vmatprep.subr.mxu0 0.0
      %1621 = vmatpush1.msra.mxu0 0.0
      %1622 = vmatprep.subr.mxu0 0.0
      %1623 = vmatpush1.msra.mxu0 0.0
      %1624 = vmatprep.subr.mxu0 0.0
      %1625 = vmatpush1.msra.mxu0 0.0
      %1626 = vmatprep.subr.mxu0 0.0
      %1627 = vmatpush1.msra.mxu0 0.0
      %1628 = vmatprep.subr.mxu0 0.0
      %1629 = vmatpush1.msra.mxu0 0.0
      %1630 = vmatprep.subr.mxu0 0.0
      %1631 = vmatpush1.msra.mxu0 0.0
      %1632 = vmatprep.subr.mxu0 0.0
      %1633 = vmatpush1.msra.mxu0 0.0
      %1634 = vmatprep.subr.mxu0 0.0
      %1635 = vmatpush1.msra.mxu0 0.0
      %1636 = vmatprep.subr.mxu0 0.0
      %1637 = vmatpush1.msra.mxu0 0.0
      %1638 = vmatprep.subr.mxu0 0.0
      %1639 = vmatpush1.msra.mxu0 0.0
      %1640 = vmatprep.subr.mxu0 0.0
      %1641 = vmatpush1.msra.mxu0 0.0
      %1642 = vmatprep.subr.mxu0 0.0
      %1643 = vmatpush1.msra.mxu0 0.0
      %1644 = vmatprep.subr.mxu0 0.0
      %1645 = vmatpush1.msra.mxu0 0.0
      %1646 = vmatprep.subr.mxu0 0.0
      %1647 = vmatpush1.msra.mxu0 0.0
      %1648 = vmatprep.subr.mxu0 0.0
      %1649 = vmatpush1.msra.mxu0 0.0
      %1650 = vmatprep.subr.mxu0 0.0
      %1651 = vmatpush1.msra.mxu0 0.0
      %1652 = vmatprep.subr.mxu0 0.0
      %1653 = vmatpush1.msra.mxu0 0.0
      %1654 = vmatprep.subr.mxu0 0.0
      %1655 = vmatpush1.msra.mxu0 0.0
      %1656 = vmatprep.subr.mxu0 0.0
      %1657 = vmatpush1.msra.mxu0 0.0
      %1658 = vmatprep.subr.mxu0 0.0
      %1659 = vmatpush1.msra.mxu0 0.0
      %1660 = vmatprep.subr.mxu0 0.0
      %1661 = vmatpush1.msra.mxu0 0.0
      %1662 = vmatprep.subr.mxu0 0.0
      %1663 = vmatpush1.msra.mxu0 0.0
      %1664 = vmatprep.subr.mxu0 0.0
      %1665 = vmatpush1.msra.mxu0 0.0
      %1666 = vmatprep.subr.mxu0 0.0
      %1667 = vmatpush1.msra.mxu0 0.0
      %1668 = vmatprep.subr.mxu0 0.0
      %1669 = vmatpush1.msra.mxu0 0.0
      %1670 = vmatprep.subr.mxu0 0.0
      %1671 = vmatpush1.msra.mxu0 0.0
      %1672 = vmatprep.mubr.f32.mxu0 0.0
      %1673 = vmatmul.mubr.f32.gmra.mrb[0].mxu0 %v735
      %v1674 = vpop.f32.mrb[0].mxu0
      %v1675 = vadd.f32 0.0, %v1674
      %v1676 = vpop.f32.mrb[0].mxu0
      %1677 = vmatprep.mubr.f32.mxu0 0.0
      %1678 = vmatmul.mubr.f32.gmra.mrb[0].mxu0 %v738
      %v1679 = vpop.f32.mrb[0].mxu0
      %v1680 = vadd.f32 0.0, %v1679
      %v1681 = vpop.f32.mrb[0].mxu0
      %1682 = vmatprep.mubr.f32.mxu0 0.0
      %1683 = vmatmul.mubr.f32.gmra.mrb[0].mxu0 %v741
      %v1684 = vpop.f32.mrb[0].mxu0
      %v1685 = vadd.f32 0.0, %v1684
      %v1686 = vpop.f32.mrb[0].mxu0
      %1687 = vmatprep.mubr.f32.mxu0 0.0
      %1688 = vmatmul.mubr.f32.gmra.mrb[0].mxu0 %v744
      %v1689 = vpop.f32.mrb[0].mxu0
      %v1690 = vadd.f32 0.0, %v1689
      %v1691 = vpop.f32.mrb[0].mxu0
      %1692 = vdwg.mxu0
      %v1693 = vmax.f32 %v1675, %v1680
      %v1694 = vmax.f32 %v1685, %v1690
      %v1695 = vmax.f32 %v1693, %v1694
      %v1696 = vrot.slane %v1695, 4
      %v1697 = vmax.f32 %v1695, %v1696
      %v1698 = vrot.slane %v1697, 2
      %v1699 = vmax.f32 %v1697, %v1698
      %v1700 = vrot.slane %v1699, 1
      %v1701 = vmax.f32 %v1699, %v1700
      %v1702 = vsub.f32 %v1675, %v1701
      %v1703 = vsub.f32 %v1680, %v1701
      %v1704 = vsub.f32 %v1685, %v1701
      %v1705 = vsub.f32 %v1690, %v1701
      %v1706 = vmul.f32 %v1702, 1.442695
      %v1707 = vpow.pop %v1706
      %v1708 = vmul.f32 %v1703, 1.442695
      %v1709 = vpow.pop %v1708
      %v1710 = vmul.f32 %v1704, 1.442695
      %v1711 = vpow.pop %v1710
      %v1712 = vmul.f32 %v1705, 1.442695
      %v1713 = vpow.pop %v1712
      %v1714 = vadd.f32 %v1707, %v1709
      %v1715 = vadd.f32 %v1714, %v1711
      %v1716 = vadd.f32 %v1715, %v1713
      %v1717 = vrot.slane %v1716, 4
      %v1718 = vadd.f32 %v1716, %v1717
      %v1719 = vrot.slane %v1718, 2
      %v1720 = vadd.f32 %v1718, %v1719
      %v1721 = vrot.slane %v1720, 1
      %v1722 = vadd.f32 %v1720, %v1721
      %v1723 = vrcp.pop %v1722
      %v1724 = vmul.f32 %v1707, %v1723
      %v1725 = vmul.f32 %v1709, %v1723
      %v1726 = vmul.f32 %v1711, %v1723
      %v1727 = vmul.f32 %v1713, %v1723
      %1728 = vmatprep.subr.mxu0 0.0
      %1729 = vmatpush1.xpose.msra.mxu0 %v1724
      %1730 = vmatprep.subr.mxu0 0.0
      %1731 = vmatpush1.xpose.msra.mxu0 %v1725
      %1732 = vmatprep.subr.mxu0 0.0
      %1733 = vmatpush1.xpose.msra.mxu0 %v1726
      %1734 = vmatprep.subr.mxu0 0.0
      %1735 = vmatpush1.xpose.msra.mxu0 %v1727
      %1736 = vmatprep.subr.mxu0 0.0
      %1737 = vmatpush1.xpose.msra.mxu0 0.0
      %1738 = vmatprep.subr.mxu0 0.0
      %1739 = vmatpush1.xpose.msra.mxu0 0.0
      %1740 = vmatprep.subr.mxu0 0.0
      %1741 = vmatpush1.xpose.msra.mxu0 0.0
      %1742 = vmatprep.subr.mxu0 0.0
      %1743 = vmatpush1.xpose.msra.mxu0 0.0
      %1744 = vmatprep.subr.mxu0 0.0
      %1745 = vmatpush1.xpose.msra.mxu0 0.0
      %1746 = vmatprep.subr.mxu0 0.0
      %1747 = vmatpush1.xpose.msra.mxu0 0.0
      %1748 = vmatprep.subr.mxu0 0.0
      %1749 = vmatpush1.xpose.msra.mxu0 0.0
      %1750 = vmatprep.subr.mxu0 0.0
      %1751 = vmatpush1.xpose.msra.mxu0 0.0
      %1752 = vmatprep.subr.mxu0 0.0
      %1753 = vmatpush1.xpose.msra.mxu0 0.0
      %1754 = vmatprep.subr.mxu0 0.0
      %1755 = vmatpush1.xpose.msra.mxu0 0.0
      %1756 = vmatprep.subr.mxu0 0.0
      %1757 = vmatpush1.xpose.msra.mxu0 0.0
      %1758 = vmatprep.subr.mxu0 0.0
      %1759 = vmatpush1.xpose.msra.mxu0 0.0
      %1760 = vmatprep.subr.mxu0 0.0
      %1761 = vmatpush1.xpose.msra.mxu0 0.0
      %1762 = vmatprep.subr.mxu0 0.0
      %1763 = vmatpush1.xpose.msra.mxu0 0.0
      %1764 = vmatprep.subr.mxu0 0.0
      %1765 = vmatpush1.xpose.msra.mxu0 0.0
      %1766 = vmatprep.subr.mxu0 0.0
      %1767 = vmatpush1.xpose.msra.mxu0 0.0
      %1768 = vmatprep.subr.mxu0 0.0
      %1769 = vmatpush1.xpose.msra.mxu0 0.0
      %1770 = vmatprep.subr.mxu0 0.0
      %1771 = vmatpush1.xpose.msra.mxu0 0.0
      %1772 = vmatprep.subr.mxu0 0.0
      %1773 = vmatpush1.xpose.msra.mxu0 0.0
      %1774 = vmatprep.subr.mxu0 0.0
      %1775 = vmatpush1.xpose.msra.mxu0 0.0
      %1776 = vmatprep.subr.mxu0 0.0
      %1777 = vmatpush1.xpose.msra.mxu0 0.0
      %1778 = vmatprep.subr.mxu0 0.0
      %1779 = vmatpush1.xpose.msra.mxu0 0.0
      %1780 = vmatprep.subr.mxu0 0.0
      %1781 = vmatpush1.xpose.msra.mxu0 0.0
      %1782 = vmatprep.subr.mxu0 0.0
      %1783 = vmatpush1.xpose.msra.mxu0 0.0
      %1784 = vmatprep.subr.mxu0 0.0
      %1785 = vmatpush1.xpose.msra.mxu0 0.0
      %1786 = vmatprep.subr.mxu0 0.0
      %1787 = vmatpush1.xpose.msra.mxu0 0.0
      %1788 = vmatprep.subr.mxu0 0.0
      %1789 = vmatpush1.xpose.msra.mxu0 0.0
      %1790 = vmatprep.subr.mxu0 0.0
      %1791 = vmatpush1.xpose.msra.mxu0 0.0
      %1792 = vmatprep.mubr.f32.mxu0 0.0
      %1793 = vmatmul.mubr.f32.gmra.mrb[0].mxu0 %v1247
      %v1794 = vpop.f32.mrb[0].mxu0
      %v1795 = vadd.f32 0.0, %v1794
      %v1796 = vpop.f32.mrb[0].mxu0
      %1797 = vmatprep.mubr.f32.mxu0 0.0
      %1798 = vmatmul.mubr.f32.gmra.mrb[0].mxu0 %v1248
      %v1799 = vpop.f32.mrb[0].mxu0
      %v1800 = vadd.f32 0.0, %v1799
      %v1801 = vpop.f32.mrb[0].mxu0
      %1802 = vmatprep.mubr.f32.mxu0 0.0
      %1803 = vmatmul.mubr.f32.gmra.mrb[0].mxu0 %v1249
      %v1804 = vpop.f32.mrb[0].mxu0
      %v1805 = vadd.f32 0.0, %v1804
      %v1806 = vpop.f32.mrb[0].mxu0
      %1807 = vmatprep.mubr.f32.mxu0 0.0
      %1808 = vmatmul.mubr.f32.gmra.mrb[0].mxu0 %v1250
      %v1809 = vpop.f32.mrb[0].mxu0
      %v1810 = vadd.f32 0.0, %v1809
      %v1811 = vpop.f32.mrb[0].mxu0
      %1812 = vdwg.mxu0
      %v1814 = vsel %vm497, %v1795, 0
      %v1817 = vsel %vm497, %v1800, 0
      %v1820 = vsel %vm497, %v1805, 0
      %v1823 = vsel %vm497, %v1810, 0
      %1825 = vmatprep.subr.mxu0 0.0
      %1826 = vmatpush1.msra.mxu0 %v368
      %1827 = vmatprep.subr.mxu0 0.0
      %1828 = vmatpush1.msra.mxu0 %v369
      %1829 = vmatprep.subr.mxu0 0.0
      %1830 = vmatpush1.msra.mxu0 %v370
      %1831 = vmatprep.subr.mxu0 0.0
      %1832 = vmatpush1.msra.mxu0 %v371
      %1833 = vmatprep.subr.mxu0 0.0
      %1834 = vmatpush1.msra.mxu0 0.0
      %1835 = vmatprep.subr.mxu0 0.0
      %1836 = vmatpush1.msra.mxu0 0.0
      %1837 = vmatprep.subr.mxu0 0.0
      %1838 = vmatpush1.msra.mxu0 0.0
      %1839 = vmatprep.subr.mxu0 0.0
      %1840 = vmatpush1.msra.mxu0 0.0
      %1841 = vmatprep.subr.mxu0 0.0
      %1842 = vmatpush1.msra.mxu0 0.0
      %1843 = vmatprep.subr.mxu0 0.0
      %1844 = vmatpush1.msra.mxu0 0.0
      %1845 = vmatprep.subr.mxu0 0.0
      %1846 = vmatpush1.msra.mxu0 0.0
      %1847 = vmatprep.subr.mxu0 0.0
      %1848 = vmatpush1.msra.mxu0 0.0
      %1849 = vmatprep.subr.mxu0 0.0
      %1850 = vmatpush1.msra.mxu0 0.0
      %1851 = vmatprep.subr.mxu0 0.0
      %1852 = vmatpush1.msra.mxu0 0.0
      %1853 = vmatprep.subr.mxu0 0.0
      %1854 = vmatpush1.msra.mxu0 0.0
      %1855 = vmatprep.subr.mxu0 0.0
      %1856 = vmatpush1.msra.mxu0 0.0
      %1857 = vmatprep.subr.mxu0 0.0
      %1858 = vmatpush1.msra.mxu0 0.0
      %1859 = vmatprep.subr.mxu0 0.0
      %1860 = vmatpush1.msra.mxu0 0.0
      %1861 = vmatprep.subr.mxu0 0.0
      %1862 = vmatpush1.msra.mxu0 0.0
      %1863 = vmatprep.subr.mxu0 0.0
      %1864 = vmatpush1.msra.mxu0 0.0
      %1865 = vmatprep.subr.mxu0 0.0
      %1866 = vmatpush1.msra.mxu0 0.0
      %1867 = vmatprep.subr.mxu0 0.0
      %1868 = vmatpush1.msra.mxu0 0.0
      %1869 = vmatprep.subr.mxu0 0.0
      %1870 = vmatpush1.msra.mxu0 0.0
      %1871 = vmatprep.subr.mxu0 0.0
      %1872 = vmatpush1.msra.mxu0 0.0
      %1873 = vmatprep.subr.mxu0 0.0
      %1874 = vmatpush1.msra.mxu0 0.0
      %1875 = vmatprep.subr.mxu0 0.0
      %1876 = vmatpush1.msra.mxu0 0.0
      %1877 = vmatprep.subr.mxu0 0.0
      %1878 = vmatpush1.msra.mxu0 0.0
      %1879 = vmatprep.subr.mxu0 0.0
      %1880 = vmatpush1.msra.mxu0 0.0
      %1881 = vmatprep.subr.mxu0 0.0
      %1882 = vmatpush1.msra.mxu0 0.0
      %1883 = vmatprep.subr.mxu0 0.0
      %1884 = vmatpush1.msra.mxu0 0.0
      %1885 = vmatprep.subr.mxu0 0.0
      %1886 = vmatpush1.msra.mxu0 0.0
      %1887 = vmatprep.subr.mxu0 0.0
      %1888 = vmatpush1.msra.mxu0 0.0
      %1889 = vmatprep.mubr.f32.mxu0 0.0
      %1890 = vmatmul.mubr.f32.gmra.mrb[0].mxu0 %v1814
      %v1891 = vpop.f32.mrb[0].mxu0
      %v1892 = vadd.f32 0.0, %v1891
      %v1893 = vpop.f32.mrb[0].mxu0
      %1894 = vmatprep.mubr.f32.mxu0 0.0
      %1895 = vmatmul.mubr.f32.gmra.mrb[0].mxu0 %v1817
      %v1896 = vpop.f32.mrb[0].mxu0
      %v1897 = vadd.f32 0.0, %v1896
      %v1898 = vpop.f32.mrb[0].mxu0
      %1899 = vmatprep.mubr.f32.mxu0 0.0
      %1900 = vmatmul.mubr.f32.gmra.mrb[0].mxu0 %v1820
      %v1901 = vpop.f32.mrb[0].mxu0
      %v1902 = vadd.f32 0.0, %v1901
      %v1903 = vpop.f32.mrb[0].mxu0
      %1904 = vmatprep.mubr.f32.mxu0 0.0
      %1905 = vmatmul.mubr.f32.gmra.mrb[0].mxu0 %v1823
      %v1906 = vpop.f32.mrb[0].mxu0
      %v1907 = vadd.f32 0.0, %v1906
      %v1908 = vpop.f32.mrb[0].mxu0
      %1909 = vdwg.mxu0
      %v1910 = vmax.f32 %v1892, 0.0
      %v1911 = vmax.f32 %v1897, 0.0
      %v1912 = vmax.f32 %v1902, 0.0
      %v1913 = vmax.f32 %v1907, 0.0
      %v1914 = vadd.f32 %v1910, %v1795
      %v1915 = vadd.f32 %v1911, %v1800
      %v1916 = vadd.f32 %v1912, %v1805
      %v1917 = vadd.f32 %v1913, %v1810
      %v1919 = vsel %vm497, %v1914, 0
      %v1922 = vsel %vm497, %v1915, 0
      %v1925 = vsel %vm497, %v1916, 0
      %v1928 = vsel %vm497, %v1917, 0
      %1930 = vmatprep.subr.mxu0 0.0
      %1931 = vmatpush1.msra.mxu0 %v1724
      %1932 = vmatprep.subr.mxu0 0.0
      %1933 = vmatpush1.msra.mxu0 %v1725
      %1934 = vmatprep.subr.mxu0 0.0
      %1935 = vmatpush1.msra.mxu0 %v1726
      %1936 = vmatprep.subr.mxu0 0.0
      %1937 = vmatpush1.msra.mxu0 %v1727
      %1938 = vmatprep.subr.mxu0 0.0
      %1939 = vmatpush1.msra.mxu0 0.0
      %1940 = vmatprep.subr.mxu0 0.0
      %1941 = vmatpush1.msra.mxu0 0.0
      %1942 = vmatprep.subr.mxu0 0.0
      %1943 = vmatpush1.msra.mxu0 0.0
      %1944 = vmatprep.subr.mxu0 0.0
      %1945 = vmatpush1.msra.mxu0 0.0
      %1946 = vmatprep.subr.mxu0 0.0
      %1947 = vmatpush1.msra.mxu0 0.0
      %1948 = vmatprep.subr.mxu0 0.0
      %1949 = vmatpush1.msra.mxu0 0.0
      %1950 = vmatprep.subr.mxu0 0.0
      %1951 = vmatpush1.msra.mxu0 0.0
      %1952 = vmatprep.subr.mxu0 0.0
      %1953 = vmatpush1.msra.mxu0 0.0
      %1954 = vmatprep.subr.mxu0 0.0
      %1955 = vmatpush1.msra.mxu0 0.0
      %1956 = vmatprep.subr.mxu0 0.0
      %1957 = vmatpush1.msra.mxu0 0.0
      %1958 = vmatprep.subr.mxu0 0.0
      %1959 = vmatpush1.msra.mxu0 0.0
      %1960 = vmatprep.subr.mxu0 0.0
      %1961 = vmatpush1.msra.mxu0 0.0
      %1962 = vmatprep.subr.mxu0 0.0
      %1963 = vmatpush1.msra.mxu0 0.0
      %1964 = vmatprep.subr.mxu0 0.0
      %1965 = vmatpush1.msra.mxu0 0.0
      %1966 = vmatprep.subr.mxu0 0.0
      %1967 = vmatpush1.msra.mxu0 0.0
      %1968 = vmatprep.subr.mxu0 0.0
      %1969 = vmatpush1.msra.mxu0 0.0
      %1970 = vmatprep.subr.mxu0 0.0
      %1971 = vmatpush1.msra.mxu0 0.0
      %1972 = vmatprep.subr.mxu0 0.0
      %1973 = vmatpush1.msra.mxu0 0.0
      %1974 = vmatprep.subr.mxu0 0.0
      %1975 = vmatpush1.msra.mxu0 0.0
      %1976 = vmatprep.subr.mxu0 0.0
      %1977 = vmatpush1.msra.mxu0 0.0
      %1978 = vmatprep.subr.mxu0 0.0
      %1979 = vmatpush1.msra.mxu0 0.0
      %1980 = vmatprep.subr.mxu0 0.0
      %1981 = vmatpush1.msra.mxu0 0.0
      %1982 = vmatprep.subr.mxu0 0.0
      %1983 = vmatpush1.msra.mxu0 0.0
      %1984 = vmatprep.subr.mxu0 0.0
      %1985 = vmatpush1.msra.mxu0 0.0
      %1986 = vmatprep.subr.mxu0 0.0
      %1987 = vmatpush1.msra.mxu0 0.0
      %1988 = vmatprep.subr.mxu0 0.0
      %1989 = vmatpush1.msra.mxu0 0.0
      %1990 = vmatprep.subr.mxu0 0.0
      %1991 = vmatpush1.msra.mxu0 0.0
      %1992 = vmatprep.subr.mxu0 0.0
      %1993 = vmatpush1.msra.mxu0 0.0
      %1994 = vmatprep.mubr.f32.mxu0 0.0
      %1995 = vmatmul.mubr.f32.gmra.mrb[0].mxu0 %v1919
      %v1996 = vpop.f32.mrb[0].mxu0
      %v1997 = vadd.f32 0.0, %v1996
      %v1998 = vpop.f32.mrb[0].mxu0
      %1999 = vmatprep.mubr.f32.mxu0 0.0
      %2000 = vmatmul.mubr.f32.gmra.mrb[0].mxu0 %v1922
      %v2001 = vpop.f32.mrb[0].mxu0
      %v2002 = vadd.f32 0.0, %v2001
      %v2003 = vpop.f32.mrb[0].mxu0
      %2004 = vmatprep.mubr.f32.mxu0 0.0
      %2005 = vmatmul.mubr.f32.gmra.mrb[0].mxu0 %v1925
      %v2006 = vpop.f32.mrb[0].mxu0
      %v2007 = vadd.f32 0.0, %v2006
      %v2008 = vpop.f32.mrb[0].mxu0
      %2009 = vmatprep.mubr.f32.mxu0 0.0
      %2010 = vmatmul.mubr.f32.gmra.mrb[0].mxu0 %v1928
      %v2011 = vpop.f32.mrb[0].mxu0
      %v2012 = vadd.f32 0.0, %v2011
      %v2013 = vpop.f32.mrb[0].mxu0
      %2014 = vdwg.mxu0
      %v2015 = vmax.f32 %v1997, 0.0
      %v2016 = vmax.f32 %v2002, 0.0
      %v2017 = vmax.f32 %v2007, 0.0
      %v2018 = vmax.f32 %v2012, 0.0
      %v2019 = vadd.f32 %v2015, %v1247
      %v2020 = vadd.f32 %v2016, %v1248
      %v2021 = vadd.f32 %v2017, %v1249
      %v2022 = vadd.f32 %v2018, %v1250
      %v2023 = vadd.f32 %v2019, %v2020
      %v2024 = vadd.f32 %v2023, %v2021
      %v2025 = vadd.f32 %v2024, %v2022
      %v2026 = vrot.slane %v2025, 4
      %v2027 = vadd.f32 %v2025, %v2026
      %v2028 = vrot.slane %v2027, 2
      %v2029 = vadd.f32 %v2027, %v2028
      %v2030 = vrot.slane %v2029, 1
      %v2031 = vadd.f32 %v2029, %v2030
      %v2032 = vmul.f32 %v2031, %v660
      %v2033 = vsub.f32 %v2019, %v2032
      %v2034 = vsub.f32 %v2020, %v2032
      %v2035 = vsub.f32 %v2021, %v2032
      %v2036 = vsub.f32 %v2022, %v2032
      %v2037 = vmul.f32 %v2033, %v2033
      %v2038 = vmul.f32 %v2034, %v2034
      %v2039 = vmul.f32 %v2035, %v2035
      %v2040 = vmul.f32 %v2036, %v2036
      %v2041 = vadd.f32 %v2037, %v2038
      %v2042 = vadd.f32 %v2041, %v2039
      %v2043 = vadd.f32 %v2042, %v2040
      %v2044 = vrot.slane %v2043, 4
      %v2045 = vadd.f32 %v2043, %v2044
      %v2046 = vrot.slane %v2045, 2
      %v2047 = vadd.f32 %v2045, %v2046
      %v2048 = vrot.slane %v2047, 1
      %v2049 = vadd.f32 %v2047, %v2048
      %v2050 = vmul.f32 %v2049, %v660
      %v2051 = vadd.f32 %v2050, 1e-05
      %v2052 = vrsqrt.pop %v2051
      %v2053 = vmul.f32 %v2033, %v2052
      %v2054 = vmul.f32 %v2034, %v2052
      %v2055 = vmul.f32 %v2035, %v2052
      %v2056 = vmul.f32 %v2036, %v2052
      %v2057 = vmul.f32 %v2053, %v1198
      %v2058 = vmul.f32 %v2054, %v1203
      %v2059 = vmul.f32 %v2055, %v1208
      %v2060 = vmul.f32 %v2056, %v1213
      %v2061 = vadd.f32 %v2057, %v1222
      %v2062 = vadd.f32 %v2058, %v1227
      %v2063 = vadd.f32 %v2059, %v1232
      %v2064 = vadd.f32 %v2060, %v1237
      %v2065 = vadd.f32 %v1604, %v2061
      %v2066 = vadd.f32 %v1605, %v2062
      %v2067 = vadd.f32 %v1606, %v2063
      %v2068 = vadd.f32 %v1607, %v2064
      %v2069 = vmul.f32 %v2065, 0.5
      %v2070 = vmul.f32 %v2066, 0.5
      %v2071 = vmul.f32 %v2067, 0.5
      %v2072 = vmul.f32 %v2068, 0.5
      %s2073 = scalar_lea.vmem %s1, 256
      %v2074 = vld [vmem:[%s2073] sm:$0xff]
      %v2075 = vld [vmem:[%s2073 + $0x8] sm:$0xff]
      %v2076 = vld [vmem:[%s2073 + $0x10] sm:$0xff]
      %v2077 = vld [vmem:[%s2073 + $0x18] sm:$0xff]
      %v2078 = vld [vmem:[%s2073 + $0x20] sm:$0xff]
      %v2079 = vld [vmem:[%s2073 + $0x28] sm:$0xff]
      %v2080 = vld [vmem:[%s2073 + $0x30] sm:$0xff]
      %v2081 = vld [vmem:[%s2073 + $0x38] sm:$0xff]
      %v2082 = vld [vmem:[%s2073 + $0x40] sm:$0xff]
      %v2083 = vld [vmem:[%s2073 + $0x48] sm:$0xff]
      %v2084 = vld [vmem:[%s2073 + $0x50] sm:$0xff]
      %v2085 = vld [vmem:[%s2073 + $0x58] sm:$0xff]
      %v2086 = vld [vmem:[%s2073 + $0x60] sm:$0xff]
      %v2087 = vld [vmem:[%s2073 + $0x68] sm:$0xff]
      %v2088 = vld [vmem:[%s2073 + $0x70] sm:$0xff]
      %v2089 = vld [vmem:[%s2073 + $0x78] sm:$0xff]
      %2090 = vmatprep.subr.mxu0 0.0
      %2091 = vmatpush1.msra.mxu0 %v2074
      %2092 = vmatprep.subr.mxu0 0.0
      %2093 = vmatpush1.msra.mxu0 %v2075
      %2094 = vmatprep.subr.mxu0 0.0
      %2095 = vmatpush1.msra.mxu0 %v2076
      %2096 = vmatprep.subr.mxu0 0.0
      %2097 = vmatpush1.msra.mxu0 %v2077
      %2098 = vmatprep.subr.mxu0 0.0
      %2099 = vmatpush1.msra.mxu0 %v2078
      %2100 = vmatprep.subr.mxu0 0.0
      %2101 = vmatpush1.msra.mxu0 %v2079
      %2102 = vmatprep.subr.mxu0 0.0
      %2103 = vmatpush1.msra.mxu0 %v2080
      %2104 = vmatprep.subr.mxu0 0.0
      %2105 = vmatpush1.msra.mxu0 %v2081
      %2106 = vmatprep.subr.mxu0 0.0
      %2107 = vmatpush1.msra.mxu0 %v2082
      %2108 = vmatprep.subr.mxu0 0.0
      %2109 = vmatpush1.msra.mxu0 %v2083
      %2110 = vmatprep.subr.mxu0 0.0
      %2111 = vmatpush1.msra.mxu0 %v2084
      %2112 = vmatprep.subr.mxu0 0.0
      %2113 = vmatpush1.msra.mxu0 %v2085
      %2114 = vmatprep.subr.mxu0 0.0
      %2115 = vmatpush1.msra.mxu0 %v2086
      %2116 = vmatprep.subr.mxu0 0.0
      %2117 = vmatpush1.msra.mxu0 %v2087
      %2118 = vmatprep.subr.mxu0 0.0
      %2119 = vmatpush1.msra.mxu0 %v2088
      %2120 = vmatprep.subr.mxu0 0.0
      %2121 = vmatpush1.msra.mxu0 %v2089
      %2122 = vmatprep.subr.mxu0 0.0
      %2123 = vmatpush1.msra.mxu0 0.0
      %2124 = vmatprep.subr.mxu0 0.0
      %2125 = vmatpush1.msra.mxu0 0.0
      %2126 = vmatprep.subr.mxu0 0.0
      %2127 = vmatpush1.msra.mxu0 0.0
      %2128 = vmatprep.subr.mxu0 0.0
      %2129 = vmatpush1.msra.mxu0 0.0
      %2130 = vmatprep.subr.mxu0 0.0
      %2131 = vmatpush1.msra.mxu0 0.0
      %2132 = vmatprep.subr.mxu0 0.0
      %2133 = vmatpush1.msra.mxu0 0.0
      %2134 = vmatprep.subr.mxu0 0.0
      %2135 = vmatpush1.msra.mxu0 0.0
      %2136 = vmatprep.subr.mxu0 0.0
      %2137 = vmatpush1.msra.mxu0 0.0
      %2138 = vmatprep.subr.mxu0 0.0
      %2139 = vmatpush1.msra.mxu0 0.0
      %2140 = vmatprep.subr.mxu0 0.0
      %2141 = vmatpush1.msra.mxu0 0.0
      %2142 = vmatprep.subr.mxu0 0.0
      %2143 = vmatpush1.msra.mxu0 0.0
      %2144 = vmatprep.subr.mxu0 0.0
      %2145 = vmatpush1.msra.mxu0 0.0
      %2146 = vmatprep.subr.mxu0 0.0
      %2147 = vmatpush1.msra.mxu0 0.0
      %2148 = vmatprep.subr.mxu0 0.0
      %2149 = vmatpush1.msra.mxu0 0.0
      %2150 = vmatprep.subr.mxu0 0.0
      %2151 = vmatpush1.msra.mxu0 0.0
      %2152 = vmatprep.subr.mxu0 0.0
      %2153 = vmatpush1.msra.mxu0 0.0
      %2154 = vmatprep.mubr.f32.mxu0 0.0
      %2155 = vmatmul.mubr.f32.gmra.mrb[0].mxu0 %v2069
      %v2156 = vpop.f32.mrb[0].mxu0
      %v2157 = vadd.f32 0.0, %v2156
      %v2158 = vpop.f32.mrb[0].mxu0
      %2159 = vmatprep.mubr.f32.mxu0 0.0
      %2160 = vmatmul.mubr.f32.gmra.mrb[0].mxu0 %v2070
      %v2161 = vpop.f32.mrb[0].mxu0
      %v2162 = vadd.f32 0.0, %v2161
      %v2163 = vpop.f32.mrb[0].mxu0
      %2164 = vmatprep.mubr.f32.mxu0 0.0
      %2165 = vmatmul.mubr.f32.gmra.mrb[0].mxu0 %v2071
      %v2166 = vpop.f32.mrb[0].mxu0
      %v2167 = vadd.f32 0.0, %v2166
      %v2168 = vpop.f32.mrb[0].mxu0
      %2169 = vmatprep.mubr.f32.mxu0 0.0
      %2170 = vmatmul.mubr.f32.gmra.mrb[0].mxu0 %v2072
      %v2171 = vpop.f32.mrb[0].mxu0
      %v2172 = vadd.f32 0.0, %v2171
      %v2173 = vpop.f32.mrb[0].mxu0
      %2174 = vdwg.mxu0
      %s2175 = scalar_lea.vmem %s2, 128
      %v2176 = vld [vmem:[%s2175] sm:$0xff]
      %v2177 = vld [vmem:[%s2175 + $0x8] sm:$0xff]
      %v2178 = vld [vmem:[%s2175 + $0x10] sm:$0xff]
      %v2179 = vld [vmem:[%s2175 + $0x18] sm:$0xff]
      %v2180 = vld [vmem:[%s2175 + $0x20] sm:$0xff]
      %v2181 = vld [vmem:[%s2175 + $0x28] sm:$0xff]
      %v2182 = vld [vmem:[%s2175 + $0x30] sm:$0xff]
      %v2183 = vld [vmem:[%s2175 + $0x38] sm:$0xff]
      %s2184 = scalar_lea.vmem %s3, 128
      %v2185 = vld [vmem:[%s2184] sm:$0xff]
      %v2186 = vld [vmem:[%s2184 + $0x8] sm:$0xff]
      %v2187 = vld [vmem:[%s2184 + $0x10] sm:$0xff]
      %v2188 = vld [vmem:[%s2184 + $0x18] sm:$0xff]
      %v2189 = vld [vmem:[%s2184 + $0x20] sm:$0xff]
      %v2190 = vld [vmem:[%s2184 + $0x28] sm:$0xff]
      %v2191 = vld [vmem:[%s2184 + $0x30] sm:$0xff]
      %v2192 = vld [vmem:[%s2184 + $0x38] sm:$0xff]
      %v2194 = vsel %vm497, %v2176, 0
      %v2197 = vsel %vm497, %v2177, 0
      %v2200 = vsel %vm497, %v2178, 0
      %v2203 = vsel %vm497, %v2179, 0
      %v2206 = vsel %vm497, %v2180, 0
      %v2209 = vsel %vm497, %v2181, 0
      %v2212 = vsel %vm497, %v2182, 0
      %v2215 = vsel %vm497, %v2183, 0
      %2217 = vmatprep.subr.mxu0 0.0
      %2218 = vmatpush1.msra.mxu0 %v2157
      %2219 = vmatprep.subr.mxu0 0.0
      %2220 = vmatpush1.msra.mxu0 %v2162
      %2221 = vmatprep.subr.mxu0 0.0
      %2222 = vmatpush1.msra.mxu0 %v2167
      %2223 = vmatprep.subr.mxu0 0.0
      %2224 = vmatpush1.msra.mxu0 %v2172
      %2225 = vmatprep.subr.mxu0 0.0
      %2226 = vmatpush1.msra.mxu0 0.0
      %2227 = vmatprep.subr.mxu0 0.0
      %2228 = vmatpush1.msra.mxu0 0.0
      %2229 = vmatprep.subr.mxu0 0.0
      %2230 = vmatpush1.msra.mxu0 0.0
      %2231 = vmatprep.subr.mxu0 0.0
      %2232 = vmatpush1.msra.mxu0 0.0
      %2233 = vmatprep.subr.mxu0 0.0
      %2234 = vmatpush1.msra.mxu0 0.0
      %2235 = vmatprep.subr.mxu0 0.0
      %2236 = vmatpush1.msra.mxu0 0.0
      %2237 = vmatprep.subr.mxu0 0.0
      %2238 = vmatpush1.msra.mxu0 0.0
      %2239 = vmatprep.subr.mxu0 0.0
      %2240 = vmatpush1.msra.mxu0 0.0
      %2241 = vmatprep.subr.mxu0 0.0
      %2242 = vmatpush1.msra.mxu0 0.0
      %2243 = vmatprep.subr.mxu0 0.0
      %2244 = vmatpush1.msra.mxu0 0.0
      %2245 = vmatprep.subr.mxu0 0.0
      %2246 = vmatpush1.msra.mxu0 0.0
      %2247 = vmatprep.subr.mxu0 0.0
      %2248 = vmatpush1.msra.mxu0 0.0
      %2249 = vmatprep.subr.mxu0 0.0
      %2250 = vmatpush1.msra.mxu0 0.0
      %2251 = vmatprep.subr.mxu0 0.0
      %2252 = vmatpush1.msra.mxu0 0.0
      %2253 = vmatprep.subr.mxu0 0.0
      %2254 = vmatpush1.msra.mxu0 0.0
      %2255 = vmatprep.subr.mxu0 0.0
      %2256 = vmatpush1.msra.mxu0 0.0
      %2257 = vmatprep.subr.mxu0 0.0
      %2258 = vmatpush1.msra.mxu0 0.0
      %2259 = vmatprep.subr.mxu0 0.0
      %2260 = vmatpush1.msra.mxu0 0.0
      %2261 = vmatprep.subr.mxu0 0.0
      %2262 = vmatpush1.msra.mxu0 0.0
      %2263 = vmatprep.subr.mxu0 0.0
      %2264 = vmatpush1.msra.mxu0 0.0
      %2265 = vmatprep.subr.mxu0 0.0
      %2266 = vmatpush1.msra.mxu0 0.0
      %2267 = vmatprep.subr.mxu0 0.0
      %2268 = vmatpush1.msra.mxu0 0.0
      %2269 = vmatprep.subr.mxu0 0.0
      %2270 = vmatpush1.msra.mxu0 0.0
      %2271 = vmatprep.subr.mxu0 0.0
      %2272 = vmatpush1.msra.mxu0 0.0
      %2273 = vmatprep.subr.mxu0 0.0
      %2274 = vmatpush1.msra.mxu0 0.0
      %2275 = vmatprep.subr.mxu0 0.0
      %2276 = vmatpush1.msra.mxu0 0.0
      %2277 = vmatprep.subr.mxu0 0.0
      %2278 = vmatpush1.msra.mxu0 0.0
      %2279 = vmatprep.subr.mxu0 0.0
      %2280 = vmatpush1.msra.mxu0 0.0
      %2281 = vmatprep.mubr.f32.mxu0 0.0
      %2282 = vmatmul.mubr.f32.gmra.mrb[0].mxu0 %v2194
      %v2283 = vpop.f32.mrb[0].mxu0
      %v2284 = vadd.f32 %v2185, %v2283
      %v2285 = vpop.f32.mrb[0].mxu0
      %2286 = vmatprep.mubr.f32.mxu0 0.0
      %2287 = vmatmul.mubr.f32.gmra.mrb[0].mxu0 %v2197
      %v2288 = vpop.f32.mrb[0].mxu0
      %v2289 = vadd.f32 %v2186, %v2288
      %v2290 = vpop.f32.mrb[0].mxu0
      %2291 = vmatprep.mubr.f32.mxu0 0.0
      %2292 = vmatmul.mubr.f32.gmra.mrb[0].mxu0 %v2200
      %v2293 = vpop.f32.mrb[0].mxu0
      %v2294 = vadd.f32 %v2187, %v2293
      %v2295 = vpop.f32.mrb[0].mxu0
      %2296 = vmatprep.mubr.f32.mxu0 0.0
      %2297 = vmatmul.mubr.f32.gmra.mrb[0].mxu0 %v2203
      %v2298 = vpop.f32.mrb[0].mxu0
      %v2299 = vadd.f32 %v2188, %v2298
      %v2300 = vpop.f32.mrb[0].mxu0
      %2301 = vmatprep.mubr.f32.mxu0 0.0
      %2302 = vmatmul.mubr.f32.gmra.mrb[0].mxu0 %v2206
      %v2303 = vpop.f32.mrb[0].mxu0
      %v2304 = vadd.f32 %v2189, %v2303
      %v2305 = vpop.f32.mrb[0].mxu0
      %2306 = vmatprep.mubr.f32.mxu0 0.0
      %2307 = vmatmul.mubr.f32.gmra.mrb[0].mxu0 %v2209
      %v2308 = vpop.f32.mrb[0].mxu0
      %v2309 = vadd.f32 %v2190, %v2308
      %v2310 = vpop.f32.mrb[0].mxu0
      %2311 = vmatprep.mubr.f32.mxu0 0.0
      %2312 = vmatmul.mubr.f32.gmra.mrb[0].mxu0 %v2212
      %v2313 = vpop.f32.mrb[0].mxu0
      %v2314 = vadd.f32 %v2191, %v2313
      %v2315 = vpop.f32.mrb[0].mxu0
      %2316 = vmatprep.mubr.f32.mxu0 0.0
      %2317 = vmatmul.mubr.f32.gmra.mrb[0].mxu0 %v2215
      %v2318 = vpop.f32.mrb[0].mxu0
      %v2319 = vadd.f32 %v2192, %v2318
      %v2320 = vpop.f32.mrb[0].mxu0
      %2321 = vdwg.mxu0
      %v2322 = vmul.f32 %v2284, %v2304
      %v2323 = vmul.f32 %v2289, %v2309
      %v2324 = vmul.f32 %v2294, %v2314
      %v2325 = vmul.f32 %v2299, %v2319
      %v2326 = vmax.f32 %v2322, 0.0
      %v2327 = vmax.f32 %v2323, 0.0
      %v2328 = vmax.f32 %v2324, 0.0
      %v2329 = vmax.f32 %v2325, 0.0
      %v2330 = vadd.f32 %v2326, %v2284
      %v2331 = vadd.f32 %v2327, %v2289
      %v2332 = vadd.f32 %v2328, %v2294
      %v2333 = vadd.f32 %v2329, %v2299
      %v2334 = vadd.f32 %v2330, %v2069
      %v2335 = vadd.f32 %v2331, %v2070
      %v2336 = vadd.f32 %v2332, %v2071
      %v2337 = vadd.f32 %v2333, %v2072
      %s2338 = scalar_lea.vmem %s4, 64
      %v2339 = vld [vmem:[%s2338] sm:$0xff]
      %v2340 = vld [vmem:[%s2338 + $0x8] sm:$0xff]
      %v2341 = vld [vmem:[%s2338 + $0x10] sm:$0xff]
      %v2342 = vld [vmem:[%s2338 + $0x18] sm:$0xff]
      %s2343 = scalar_lea.vmem %s5, 64
      %v2344 = vld [vmem:[%s2343] sm:$0xff]
      %v2345 = vld [vmem:[%s2343 + $0x8] sm:$0xff]
      %v2346 = vld [vmem:[%s2343 + $0x10] sm:$0xff]
      %v2347 = vld [vmem:[%s2343 + $0x18] sm:$0xff]
      %v2348 = vadd.f32 %v2334, %v2335
      %v2349 = vadd.f32 %v2348, %v2336
      %v2350 = vadd.f32 %v2349, %v2337
      %v2351 = vrot.slane %v2350, 4
      %v2352 = vadd.f32 %v2350, %v2351
      %v2353 = vrot.slane %v2352, 2
      %v2354 = vadd.f32 %v2352, %v2353
      %v2355 = vrot.slane %v2354, 1
      %v2356 = vadd.f32 %v2354, %v2355
      %v2357 = vmul.f32 %v2356, %v660
      %v2358 = vsub.f32 %v2334, %v2357
      %v2359 = vsub.f32 %v2335, %v2357
      %v2360 = vsub.f32 %v2336, %v2357
      %v2361 = vsub.f32 %v2337, %v2357
      %v2362 = vmul.f32 %v2358, %v2358
      %v2363 = vmul.f32 %v2359, %v2359
      %v2364 = vmul.f32 %v2360, %v2360
      %v2365 = vmul.f32 %v2361, %v2361
      %v2366 = vadd.f32 %v2362, %v2363
      %v2367 = vadd.f32 %v2366, %v2364
      %v2368 = vadd.f32 %v2367, %v2365
      %v2369 = vrot.slane %v2368, 4
      %v2370 = vadd.f32 %v2368, %v2369
      %v2371 = vrot.slane %v2370, 2
      %v2372 = vadd.f32 %v2370, %v2371
      %v2373 = vrot.slane %v2372, 1
      %v2374 = vadd.f32 %v2372, %v2373
      %v2375 = vmul.f32 %v2374, %v660
      %v2376 = vadd.f32 %v2375, 1e-05
      %v2377 = vrsqrt.pop %v2376
      %v2378 = vmul.f32 %v2358, %v2377
      %v2379 = vmul.f32 %v2359, %v2377
      %v2380 = vmul.f32 %v2360, %v2377
      %v2381 = vmul.f32 %v2361, %v2377
      %2383 = vset.pattern.permute.xlu0 0
      %2384 = vperm.xlu0 %2383, %v2339
      %v2385 = vpop.permute.xlu0 %2384
      %2388 = vset.pattern.permute.xlu0 0
      %2389 = vperm.xlu0 %2388, %v2340
      %v2390 = vpop.permute.xlu0 %2389
      %2393 = vset.pattern.permute.xlu0 0
      %2394 = vperm.xlu0 %2393, %v2341
      %v2395 = vpop.permute.xlu0 %2394
      %2398 = vset.pattern.permute.xlu0 0
      %2399 = vperm.xlu0 %2398, %v2342
      %v2400 = vpop.permute.xlu0 %2399
      %v2402 = vmul.f32 %v2378, %v2385
      %v2403 = vmul.f32 %v2379, %v2390
      %v2404 = vmul.f32 %v2380, %v2395
      %v2405 = vmul.f32 %v2381, %v2400
      %2407 = vset.pattern.permute.xlu0 0
      %2408 = vperm.xlu0 %2407, %v2344
      %v2409 = vpop.permute.xlu0 %2408
      %2412 = vset.pattern.permute.xlu0 0
      %2413 = vperm.xlu0 %2412, %v2345
      %v2414 = vpop.permute.xlu0 %2413
      %2417 = vset.pattern.permute.xlu0 0
      %2418 = vperm.xlu0 %2417, %v2346
      %v2419 = vpop.permute.xlu0 %2418
      %2422 = vset.pattern.permute.xlu0 0
      %2423 = vperm.xlu0 %2422, %v2347
      %v2424 = vpop.permute.xlu0 %2423
      %v2426 = vadd.f32 %v2402, %v2409
      %v2427 = vadd.f32 %v2403, %v2414
      %v2428 = vadd.f32 %v2404, %v2419
      %v2429 = vadd.f32 %v2405, %v2424
      %2430 = vmatprep.subr.mxu0 0.0
      %2431 = vmatpush1.msra.mxu0 %v2069
      %2432 = vmatprep.subr.mxu0 0.0
      %2433 = vmatpush1.msra.mxu0 %v2070
      %2434 = vmatprep.subr.mxu0 0.0
      %2435 = vmatpush1.msra.mxu0 %v2071
      %2436 = vmatprep.subr.mxu0 0.0
      %2437 = vmatpush1.msra.mxu0 %v2072
      %2438 = vmatprep.subr.mxu0 0.0
      %2439 = vmatpush1.msra.mxu0 0.0
      %2440 = vmatprep.subr.mxu0 0.0
      %2441 = vmatpush1.msra.mxu0 0.0
      %2442 = vmatprep.subr.mxu0 0.0
      %2443 = vmatpush1.msra.mxu0 0.0
      %2444 = vmatprep.subr.mxu0 0.0
      %2445 = vmatpush1.msra.mxu0 0.0
      %2446 = vmatprep.subr.mxu0 0.0
      %2447 = vmatpush1.msra.mxu0 0.0
      %2448 = vmatprep.subr.mxu0 0.0
      %2449 = vmatpush1.msra.mxu0 0.0
      %2450 = vmatprep.subr.mxu0 0.0
      %2451 = vmatpush1.msra.mxu0 0.0
      %2452 = vmatprep.subr.mxu0 0.0
      %2453 = vmatpush1.msra.mxu0 0.0
      %2454 = vmatprep.subr.mxu0 0.0
      %2455 = vmatpush1.msra.mxu0 0.0
      %2456 = vmatprep.subr.mxu0 0.0
      %2457 = vmatpush1.msra.mxu0 0.0
      %2458 = vmatprep.subr.mxu0 0.0
      %2459 = vmatpush1.msra.mxu0 0.0
      %2460 = vmatprep.subr.mxu0 0.0
      %2461 = vmatpush1.msra.mxu0 0.0
      %2462 = vmatprep.subr.mxu0 0.0
      %2463 = vmatpush1.msra.mxu0 0.0
      %2464 = vmatprep.subr.mxu0 0.0
      %2465 = vmatpush1.msra.mxu0 0.0
      %2466 = vmatprep.subr.mxu0 0.0
      %2467 = vmatpush1.msra.mxu0 0.0
      %2468 = vmatprep.subr.mxu0 0.0
      %2469 = vmatpush1.msra.mxu0 0.0
      %2470 = vmatprep.subr.mxu0 0.0
      %2471 = vmatpush1.msra.mxu0 0.0
      %2472 = vmatprep.subr.mxu0 0.0
      %2473 = vmatpush1.msra.mxu0 0.0
      %2474 = vmatprep.subr.mxu0 0.0
      %2475 = vmatpush1.msra.mxu0 0.0
      %2476 = vmatprep.subr.mxu0 0.0
      %2477 = vmatpush1.msra.mxu0 0.0
      %2478 = vmatprep.subr.mxu0 0.0
      %2479 = vmatpush1.msra.mxu0 0.0
      %2480 = vmatprep.subr.mxu0 0.0
      %2481 = vmatpush1.msra.mxu0 0.0
      %2482 = vmatprep.subr.mxu0 0.0
      %2483 = vmatpush1.msra.mxu0 0.0
      %2484 = vmatprep.subr.mxu0 0.0
      %2485 = vmatpush1.msra.mxu0 0.0
      %2486 = vmatprep.subr.mxu0 0.0
      %2487 = vmatpush1.msra.mxu0 0.0
      %2488 = vmatprep.subr.mxu0 0.0
      %2489 = vmatpush1.msra.mxu0 0.0
      %2490 = vmatprep.subr.mxu0 0.0
      %2491 = vmatpush1.msra.mxu0 0.0
      %2492 = vmatprep.subr.mxu0 0.0
      %2493 = vmatpush1.msra.mxu0 0.0
      %2494 = vmatprep.mubr.f32.mxu0 0.0
      %2495 = vmatmul.mubr.f32.gmra.mrb[0].mxu0 %v735
      %v2496 = vpop.f32.mrb[0].mxu0
      %v2497 = vadd.f32 0.0, %v2496
      %v2498 = vpop.f32.mrb[0].mxu0
      %2499 = vmatprep.mubr.f32.mxu0 0.0
      %2500 = vmatmul.mubr.f32.gmra.mrb[0].mxu0 %v738
      %v2501 = vpop.f32.mrb[0].mxu0
      %v2502 = vadd.f32 0.0, %v2501
      %v2503 = vpop.f32.mrb[0].mxu0
      %2504 = vmatprep.mubr.f32.mxu0 0.0
      %2505 = vmatmul.mubr.f32.gmra.mrb[0].mxu0 %v741
      %v2506 = vpop.f32.mrb[0].mxu0
      %v2507 = vadd.f32 0.0, %v2506
      %v2508 = vpop.f32.mrb[0].mxu0
      %2509 = vmatprep.mubr.f32.mxu0 0.0
      %2510 = vmatmul.mubr.f32.gmra.mrb[0].mxu0 %v744
      %v2511 = vpop.f32.mrb[0].mxu0
      %v2512 = vadd.f32 0.0, %v2511
      %v2513 = vpop.f32.mrb[0].mxu0
      %2514 = vdwg.mxu0
      %v2515 = vmax.f32 %v2497, %v2502
      %v2516 = vmax.f32 %v2507, %v2512
      %v2517 = vmax.f32 %v2515, %v2516
      %v2518 = vrot.slane %v2517, 4
      %v2519 = vmax.f32 %v2517, %v2518
      %v2520 = vrot.slane %v2519, 2
      %v2521 = vmax.f32 %v2519, %v2520
      %v2522 = vrot.slane %v2521, 1
      %v2523 = vmax.f32 %v2521, %v2522
      %v2524 = vsub.f32 %v2497, %v2523
      %v2525 = vsub.f32 %v2502, %v2523
      %v2526 = vsub.f32 %v2507, %v2523
      %v2527 = vsub.f32 %v2512, %v2523
      %v2528 = vmul.f32 %v2524, 1.442695
      %v2529 = vpow.pop %v2528
      %v2530 = vmul.f32 %v2525, 1.442695
      %v2531 = vpow.pop %v2530
      %v2532 = vmul.f32 %v2526, 1.442695
      %v2533 = vpow.pop %v2532
      %v2534 = vmul.f32 %v2527, 1.442695
      %v2535 = vpow.pop %v2534
      %v2536 = vadd.f32 %v2529, %v2531
      %v2537 = vadd.f32 %v2536, %v2533
      %v2538 = vadd.f32 %v2537, %v2535
      %v2539 = vrot.slane %v2538, 4
      %v2540 = vadd.f32 %v2538, %v2539
      %v2541 = vrot.slane %v2540, 2
      %v2542 = vadd.f32 %v2540, %v2541
      %v2543 = vrot.slane %v2542, 1
      %v2544 = vadd.f32 %v2542, %v2543
      %v2545 = vrcp.pop %v2544
      %v2546 = vmul.f32 %v2529, %v2545
      %v2547 = vmul.f32 %v2531, %v2545
      %v2548 = vmul.f32 %v2533, %v2545
      %v2549 = vmul.f32 %v2535, %v2545
      %2550 = vmatprep.subr.mxu0 0.0
      %2551 = vmatpush1.xpose.msra.mxu0 %v2546
      %2552 = vmatprep.subr.mxu0 0.0
      %2553 = vmatpush1.xpose.msra.mxu0 %v2547
      %2554 = vmatprep.subr.mxu0 0.0
      %2555 = vmatpush1.xpose.msra.mxu0 %v2548
      %2556 = vmatprep.subr.mxu0 0.0
      %2557 = vmatpush1.xpose.msra.mxu0 %v2549
      %2558 = vmatprep.subr.mxu0 0.0
      %2559 = vmatpush1.xpose.msra.mxu0 0.0
      %2560 = vmatprep.subr.mxu0 0.0
      %2561 = vmatpush1.xpose.msra.mxu0 0.0
      %2562 = vmatprep.subr.mxu0 0.0
      %2563 = vmatpush1.xpose.msra.mxu0 0.0
      %2564 = vmatprep.subr.mxu0 0.0
      %2565 = vmatpush1.xpose.msra.mxu0 0.0
      %2566 = vmatprep.subr.mxu0 0.0
      %2567 = vmatpush1.xpose.msra.mxu0 0.0
      %2568 = vmatprep.subr.mxu0 0.0
      %2569 = vmatpush1.xpose.msra.mxu0 0.0
      %2570 = vmatprep.subr.mxu0 0.0
      %2571 = vmatpush1.xpose.msra.mxu0 0.0
      %2572 = vmatprep.subr.mxu0 0.0
      %2573 = vmatpush1.xpose.msra.mxu0 0.0
      %2574 = vmatprep.subr.mxu0 0.0
      %2575 = vmatpush1.xpose.msra.mxu0 0.0
      %2576 = vmatprep.subr.mxu0 0.0
      %2577 = vmatpush1.xpose.msra.mxu0 0.0
      %2578 = vmatprep.subr.mxu0 0.0
      %2579 = vmatpush1.xpose.msra.mxu0 0.0
      %2580 = vmatprep.subr.mxu0 0.0
      %2581 = vmatpush1.xpose.msra.mxu0 0.0
      %2582 = vmatprep.subr.mxu0 0.0
      %2583 = vmatpush1.xpose.msra.mxu0 0.0
      %2584 = vmatprep.subr.mxu0 0.0
      %2585 = vmatpush1.xpose.msra.mxu0 0.0
      %2586 = vmatprep.subr.mxu0 0.0
      %2587 = vmatpush1.xpose.msra.mxu0 0.0
      %2588 = vmatprep.subr.mxu0 0.0
      %2589 = vmatpush1.xpose.msra.mxu0 0.0
      %2590 = vmatprep.subr.mxu0 0.0
      %2591 = vmatpush1.xpose.msra.mxu0 0.0
      %2592 = vmatprep.subr.mxu0 0.0
      %2593 = vmatpush1.xpose.msra.mxu0 0.0
      %2594 = vmatprep.subr.mxu0 0.0
      %2595 = vmatpush1.xpose.msra.mxu0 0.0
      %2596 = vmatprep.subr.mxu0 0.0
      %2597 = vmatpush1.xpose.msra.mxu0 0.0
      %2598 = vmatprep.subr.mxu0 0.0
      %2599 = vmatpush1.xpose.msra.mxu0 0.0
      %2600 = vmatprep.subr.mxu0 0.0
      %2601 = vmatpush1.xpose.msra.mxu0 0.0
      %2602 = vmatprep.subr.mxu0 0.0
      %2603 = vmatpush1.xpose.msra.mxu0 0.0
      %2604 = vmatprep.subr.mxu0 0.0
      %2605 = vmatpush1.xpose.msra.mxu0 0.0
      %2606 = vmatprep.subr.mxu0 0.0
      %2607 = vmatpush1.xpose.msra.mxu0 0.0
      %2608 = vmatprep.subr.mxu0 0.0
      %2609 = vmatpush1.xpose.msra.mxu0 0.0
      %2610 = vmatprep.subr.mxu0 0.0
      %2611 = vmatpush1.xpose.msra.mxu0 0.0
      %2612 = vmatprep.subr.mxu0 0.0
      %2613 = vmatpush1.xpose.msra.mxu0 0.0
      %2614 = vmatprep.mubr.f32.mxu0 0.0
      %2615 = vmatmul.mubr.f32.gmra.mrb[0].mxu0 %v2069
      %v2616 = vpop.f32.mrb[0].mxu0
      %v2617 = vadd.f32 0.0, %v2616
      %v2618 = vpop.f32.mrb[0].mxu0
      %2619 = vmatprep.mubr.f32.mxu0 0.0
      %2620 = vmatmul.mubr.f32.gmra.mrb[0].mxu0 %v2070
      %v2621 = vpop.f32.mrb[0].mxu0
      %v2622 = vadd.f32 0.0, %v2621
      %v2623 = vpop.f32.mrb[0].mxu0
      %2624 = vmatprep.mubr.f32.mxu0 0.0
      %2625 = vmatmul.mubr.f32.gmra.mrb[0].mxu0 %v2071
      %v2626 = vpop.f32.mrb[0].mxu0
      %v2627 = vadd.f32 0.0, %v2626
      %v2628 = vpop.f32.mrb[0].mxu0
      %2629 = vmatprep.mubr.f32.mxu0 0.0
      %2630 = vmatmul.mubr.f32.gmra.mrb[0].mxu0 %v2072
      %v2631 = vpop.f32.mrb[0].mxu0
      %v2632 = vadd.f32 0.0, %v2631
      %v2633 = vpop.f32.mrb[0].mxu0
      %2634 = vdwg.mxu0
      %v2636 = vsel %vm497, %v2617, 0
      %v2639 = vsel %vm497, %v2622, 0
      %v2642 = vsel %vm497, %v2627, 0
      %v2645 = vsel %vm497, %v2632, 0
      %2647 = vmatprep.subr.mxu0 0.0
      %2648 = vmatpush1.msra.mxu0 %v368
      %2649 = vmatprep.subr.mxu0 0.0
      %2650 = vmatpush1.msra.mxu0 %v369
      %2651 = vmatprep.subr.mxu0 0.0
      %2652 = vmatpush1.msra.mxu0 %v370
      %2653 = vmatprep.subr.mxu0 0.0
      %2654 = vmatpush1.msra.mxu0 %v371
      %2655 = vmatprep.subr.mxu0 0.0
      %2656 = vmatpush1.msra.mxu0 0.0
      %2657 = vmatprep.subr.mxu0 0.0
      %2658 = vmatpush1.msra.mxu0 0.0
      %2659 = vmatprep.subr.mxu0 0.0
      %2660 = vmatpush1.msra.mxu0 0.0
      %2661 = vmatprep.subr.mxu0 0.0
      %2662 = vmatpush1.msra.mxu0 0.0
      %2663 = vmatprep.subr.mxu0 0.0
      %2664 = vmatpush1.msra.mxu0 0.0
      %2665 = vmatprep.subr.mxu0 0.0
      %2666 = vmatpush1.msra.mxu0 0.0
      %2667 = vmatprep.subr.mxu0 0.0
      %2668 = vmatpush1.msra.mxu0 0.0
      %2669 = vmatprep.subr.mxu0 0.0
      %2670 = vmatpush1.msra.mxu0 0.0
      %2671 = vmatprep.subr.mxu0 0.0
      %2672 = vmatpush1.msra.mxu0 0.0
      %2673 = vmatprep.subr.mxu0 0.0
      %2674 = vmatpush1.msra.mxu0 0.0
      %2675 = vmatprep.subr.mxu0 0.0
      %2676 = vmatpush1.msra.mxu0 0.0
      %2677 = vmatprep.subr.mxu0 0.0
      %2678 = vmatpush1.msra.mxu0 0.0
      %2679 = vmatprep.subr.mxu0 0.0
      %2680 = vmatpush1.msra.mxu0 0.0
      %2681 = vmatprep.subr.mxu0 0.0
      %2682 = vmatpush1.msra.mxu0 0.0
      %2683 = vmatprep.subr.mxu0 0.0
      %2684 = vmatpush1.msra.mxu0 0.0
      %2685 = vmatprep.subr.mxu0 0.0
      %2686 = vmatpush1.msra.mxu0 0.0
      %2687 = vmatprep.subr.mxu0 0.0
      %2688 = vmatpush1.msra.mxu0 0.0
      %2689 = vmatprep.subr.mxu0 0.0
      %2690 = vmatpush1.msra.mxu0 0.0
      %2691 = vmatprep.subr.mxu0 0.0
      %2692 = vmatpush1.msra.mxu0 0.0
      %2693 = vmatprep.subr.mxu0 0.0
      %2694 = vmatpush1.msra.mxu0 0.0
      %2695 = vmatprep.subr.mxu0 0.0
      %2696 = vmatpush1.msra.mxu0 0.0
      %2697 = vmatprep.subr.mxu0 0.0
      %2698 = vmatpush1.msra.mxu0 0.0
      %2699 = vmatprep.subr.mxu0 0.0
      %2700 = vmatpush1.msra.mxu0 0.0
      %2701 = vmatprep.subr.mxu0 0.0
      %2702 = vmatpush1.msra.mxu0 0.0
      %2703 = vmatprep.subr.mxu0 0.0
      %2704 = vmatpush1.msra.mxu0 0.0
      %2705 = vmatprep.subr.mxu0 0.0
      %2706 = vmatpush1.msra.mxu0 0.0
      %2707 = vmatprep.subr.mxu0 0.0
      %2708 = vmatpush1.msra.mxu0 0.0
      %2709 = vmatprep.subr.mxu0 0.0
      %2710 = vmatpush1.msra.mxu0 0.0
      %2711 = vmatprep.mubr.f32.mxu0 0.0
      %2712 = vmatmul.mubr.f32.gmra.mrb[0].mxu0 %v2636
      %v2713 = vpop.f32.mrb[0].mxu0
      %v2714 = vadd.f32 0.0, %v2713
      %v2715 = vpop.f32.mrb[0].mxu0
      %2716 = vmatprep.mubr.f32.mxu0 0.0
      %2717 = vmatmul.mubr.f32.gmra.mrb[0].mxu0 %v2639
      %v2718 = vpop.f32.mrb[0].mxu0
      %v2719 = vadd.f32 0.0, %v2718
      %v2720 = vpop.f32.mrb[0].mxu0
      %2721 = vmatprep.mubr.f32.mxu0 0.0
      %2722 = vmatmul.mubr.f32.gmra.mrb[0].mxu0 %v2642
      %v2723 = vpop.f32.mrb[0].mxu0
      %v2724 = vadd.f32 0.0, %v2723
      %v2725 = vpop.f32.mrb[0].mxu0
      %2726 = vmatprep.mubr.f32.mxu0 0.0
      %2727 = vmatmul.mubr.f32.gmra.mrb[0].mxu0 %v2645
      %v2728 = vpop.f32.mrb[0].mxu0
      %v2729 = vadd.f32 0.0, %v2728
      %v2730 = vpop.f32.mrb[0].mxu0
      %2731 = vdwg.mxu0
      %v2732 = vmax.f32 %v2714, 0.0
      %v2733 = vmax.f32 %v2719, 0.0
      %v2734 = vmax.f32 %v2724, 0.0
      %v2735 = vmax.f32 %v2729, 0.0
      %v2736 = vadd.f32 %v2732, %v2617
      %v2737 = vadd.f32 %v2733, %v2622
      %v2738 = vadd.f32 %v2734, %v2627
      %v2739 = vadd.f32 %v2735, %v2632
      %v2741 = vsel %vm497, %v2736, 0
      %v2744 = vsel %vm497, %v2737, 0
      %v2747 = vsel %vm497, %v2738, 0
      %v2750 = vsel %vm497, %v2739, 0
      %2752 = vmatprep.subr.mxu0 0.0
      %2753 = vmatpush1.msra.mxu0 %v2546
      %2754 = vmatprep.subr.mxu0 0.0
      %2755 = vmatpush1.msra.mxu0 %v2547
      %2756 = vmatprep.subr.mxu0 0.0
      %2757 = vmatpush1.msra.mxu0 %v2548
      %2758 = vmatprep.subr.mxu0 0.0
      %2759 = vmatpush1.msra.mxu0 %v2549
      %2760 = vmatprep.subr.mxu0 0.0
      %2761 = vmatpush1.msra.mxu0 0.0
      %2762 = vmatprep.subr.mxu0 0.0
      %2763 = vmatpush1.msra.mxu0 0.0
      %2764 = vmatprep.subr.mxu0 0.0
      %2765 = vmatpush1.msra.mxu0 0.0
      %2766 = vmatprep.subr.mxu0 0.0
      %2767 = vmatpush1.msra.mxu0 0.0
      %2768 = vmatprep.subr.mxu0 0.0
      %2769 = vmatpush1.msra.mxu0 0.0
      %2770 = vmatprep.subr.mxu0 0.0
      %2771 = vmatpush1.msra.mxu0 0.0
      %2772 = vmatprep.subr.mxu0 0.0
      %2773 = vmatpush1.msra.mxu0 0.0
      %2774 = vmatprep.subr.mxu0 0.0
      %2775 = vmatpush1.msra.mxu0 0.0
      %2776 = vmatprep.subr.mxu0 0.0
      %2777 = vmatpush1.msra.mxu0 0.0
      %2778 = vmatprep.subr.mxu0 0.0
      %2779 = vmatpush1.msra.mxu0 0.0
      %2780 = vmatprep.subr.mxu0 0.0
      %2781 = vmatpush1.msra.mxu0 0.0
      %2782 = vmatprep.subr.mxu0 0.0
      %2783 = vmatpush1.msra.mxu0 0.0
      %2784 = vmatprep.subr.mxu0 0.0
      %2785 = vmatpush1.msra.mxu0 0.0
      %2786 = vmatprep.subr.mxu0 0.0
      %2787 = vmatpush1.msra.mxu0 0.0
      %2788 = vmatprep.subr.mxu0 0.0
      %2789 = vmatpush1.msra.mxu0 0.0
      %2790 = vmatprep.subr.mxu0 0.0
      %2791 = vmatpush1.msra.mxu0 0.0
      %2792 = vmatprep.subr.mxu0 0.0
      %2793 = vmatpush1.msra.mxu0 0.0
      %2794 = vmatprep.subr.mxu0 0.0
      %2795 = vmatpush1.msra.mxu0 0.0
      %2796 = vmatprep.subr.mxu0 0.0
      %2797 = vmatpush1.msra.mxu0 0.0
      %2798 = vmatprep.subr.mxu0 0.0
      %2799 = vmatpush1.msra.mxu0 0.0
      %2800 = vmatprep.subr.mxu0 0.0
      %2801 = vmatpush1.msra.mxu0 0.0
      %2802 = vmatprep.subr.mxu0 0.0
      %2803 = vmatpush1.msra.mxu0 0.0
      %2804 = vmatprep.subr.mxu0 0.0
      %2805 = vmatpush1.msra.mxu0 0.0
      %2806 = vmatprep.subr.mxu0 0.0
      %2807 = vmatpush1.msra.mxu0 0.0
      %2808 = vmatprep.subr.mxu0 0.0
      %2809 = vmatpush1.msra.mxu0 0.0
      %2810 = vmatprep.subr.mxu0 0.0
      %2811 = vmatpush1.msra.mxu0 0.0
      %2812 = vmatprep.subr.mxu0 0.0
      %2813 = vmatpush1.msra.mxu0 0.0
      %2814 = vmatprep.subr.mxu0 0.0
      %2815 = vmatpush1.msra.mxu0 0.0
      %2816 = vmatprep.mubr.f32.mxu0 0.0
      %2817 = vmatmul.mubr.f32.gmra.mrb[0].mxu0 %v2741
      %v2818 = vpop.f32.mrb[0].mxu0
      %v2819 = vadd.f32 0.0, %v2818
      %v2820 = vpop.f32.mrb[0].mxu0
      %2821 = vmatprep.mubr.f32.mxu0 0.0
      %2822 = vmatmul.mubr.f32.gmra.mrb[0].mxu0 %v2744
      %v2823 = vpop.f32.mrb[0].mxu0
      %v2824 = vadd.f32 0.0, %v2823
      %v2825 = vpop.f32.mrb[0].mxu0
      %2826 = vmatprep.mubr.f32.mxu0 0.0
      %2827 = vmatmul.mubr.f32.gmra.mrb[0].mxu0 %v2747
      %v2828 = vpop.f32.mrb[0].mxu0
      %v2829 = vadd.f32 0.0, %v2828
      %v2830 = vpop.f32.mrb[0].mxu0
      %2831 = vmatprep.mubr.f32.mxu0 0.0
      %2832 = vmatmul.mubr.f32.gmra.mrb[0].mxu0 %v2750
      %v2833 = vpop.f32.mrb[0].mxu0
      %v2834 = vadd.f32 0.0, %v2833
      %v2835 = vpop.f32.mrb[0].mxu0
      %2836 = vdwg.mxu0
      %v2837 = vmax.f32 %v2819, 0.0
      %v2838 = vmax.f32 %v2824, 0.0
      %v2839 = vmax.f32 %v2829, 0.0
      %v2840 = vmax.f32 %v2834, 0.0
      %v2841 = vadd.f32 %v2837, %v2069
      %v2842 = vadd.f32 %v2838, %v2070
      %v2843 = vadd.f32 %v2839, %v2071
      %v2844 = vadd.f32 %v2840, %v2072
      %v2845 = vadd.f32 %v2841, %v2842
      %v2846 = vadd.f32 %v2845, %v2843
      %v2847 = vadd.f32 %v2846, %v2844
      %v2848 = vrot.slane %v2847, 4
      %v2849 = vadd.f32 %v2847, %v2848
      %v2850 = vrot.slane %v2849, 2
      %v2851 = vadd.f32 %v2849, %v2850
      %v2852 = vrot.slane %v2851, 1
      %v2853 = vadd.f32 %v2851, %v2852
      %v2854 = vmul.f32 %v2853, %v660
      %v2855 = vsub.f32 %v2841, %v2854
      %v2856 = vsub.f32 %v2842, %v2854
      %v2857 = vsub.f32 %v2843, %v2854
      %v2858 = vsub.f32 %v2844, %v2854
      %v2859 = vmul.f32 %v2855, %v2855
      %v2860 = vmul.f32 %v2856, %v2856
      %v2861 = vmul.f32 %v2857, %v2857
      %v2862 = vmul.f32 %v2858, %v2858
      %v2863 = vadd.f32 %v2859, %v2860
      %v2864 = vadd.f32 %v2863, %v2861
      %v2865 = vadd.f32 %v2864, %v2862
      %v2866 = vrot.slane %v2865, 4
      %v2867 = vadd.f32 %v2865, %v2866
      %v2868 = vrot.slane %v2867, 2
      %v2869 = vadd.f32 %v2867, %v2868
      %v2870 = vrot.slane %v2869, 1
      %v2871 = vadd.f32 %v2869, %v2870
      %v2872 = vmul.f32 %v2871, %v660
      %v2873 = vadd.f32 %v2872, 1e-05
      %v2874 = vrsqrt.pop %v2873
      %v2875 = vmul.f32 %v2855, %v2874
      %v2876 = vmul.f32 %v2856, %v2874
      %v2877 = vmul.f32 %v2857, %v2874
      %v2878 = vmul.f32 %v2858, %v2874
      %v2879 = vmul.f32 %v2875, %v1198
      %v2880 = vmul.f32 %v2876, %v1203
      %v2881 = vmul.f32 %v2877, %v1208
      %v2882 = vmul.f32 %v2878, %v1213
      %v2883 = vadd.f32 %v2879, %v1222
      %v2884 = vadd.f32 %v2880, %v1227
      %v2885 = vadd.f32 %v2881, %v1232
      %v2886 = vadd.f32 %v2882, %v1237
      %v2887 = vadd.f32 %v2426, %v2883
      %v2888 = vadd.f32 %v2427, %v2884
      %v2889 = vadd.f32 %v2428, %v2885
      %v2890 = vadd.f32 %v2429, %v2886
      %v2891 = vmul.f32 %v2887, 0.5
      %v2892 = vmul.f32 %v2888, 0.5
      %v2893 = vmul.f32 %v2889, 0.5
      %v2894 = vmul.f32 %v2890, 0.5
      %2895 = vst [vmem:[%s359] sm:$0xff] %v2891
      %2896 = vst [vmem:[%s359 + $0x8] sm:$0xff] %v2892
      %2897 = vst [vmem:[%s359 + $0x10] sm:$0xff] %v2893
      %2898 = vst [vmem:[%s359 + $0x18] sm:$0xff] %v2894
      %p2899 = scmp.lt.s32.totalorder %s21, 1
      %s2900 = scalar_select %p2899, %s21, 1
      %s2901 = smul.addr %s2900, 4
      %s2902 = smul.addr %s2901, 8
      %s2903 = scalar_lea.vmem %s10, %s2902
      // Predicated region
      $region61: #{stgcn_with_hypergraph_forward.1} parent=59 // pred_check
        %p2904 = pneg %p254
      $region62: #{stgcn_with_hypergraph_forward.1} parent=59 // pred_check_branch
        %2906 = sbr.rel (%p2904) target = $region64
      $region63: #{stgcn_with_hypergraph_forward.1} parent=59 // pred_region
        _
      $region64: #{stgcn_with_hypergraph_forward.1} parent=59 // pred_fallthru
        _
    $region60: #{stgcn_with_hypergraph_forward.1} parent=5 // pred_fallthru
      _
    %p2907 = scmp.le.s32.totalorder 2, %s16
    // Predicated region
    $region65: #{stgcn_with_hypergraph_forward.1} parent=5 // pred_check
      %p2908 = pneg %p2907
    $region66: #{stgcn_with_hypergraph_forward.1} parent=5 // pred_check_branch
      %2910 = sbr.rel (%p2908) target = $region68
    $region67: #{stgcn_with_hypergraph_forward.1} parent=5 // pred_region
      %s2911 = ssub.s32 %s16, 2
      // Predicated region
      $region69: #{stgcn_with_hypergraph_forward.1} parent=67 // pred_check
        %p2912 = pneg %p260
      $region70: #{stgcn_with_hypergraph_forward.1} parent=67 // pred_check_branch
        %2914 = sbr.rel (%p2912) target = $region72
      $region71: #{stgcn_with_hypergraph_forward.1} parent=67 // pred_region
        %p2915 = scmp.lt.s32.totalorder %s22, 1
        %s2916 = scalar_select %p2915, %s22, 1
        %s2917 = smul.addr %s2916, 4
        %s2918 = smul.addr %s2917, 8
        %s2919 = scalar_lea.vmem %s10, %s2918
      $region72: #{stgcn_with_hypergraph_forward.1} parent=67 // pred_fallthru
        _
    $region68: #{stgcn_with_hypergraph_forward.1} parent=5 // pred_fallthru
      _
  $region6: #{stgcn_with_hypergraph_forward.1} parent=0 // loop_footer
    %s20 = sadd.s32 1, %s16
  $region7: #{stgcn_with_hypergraph_forward.1} parent=0 // loop_footer_branch
    %15 = sbr.rel target = $region3
  $region8: #{stgcn_with_hypergraph_forward.1} parent=0 // loop_exit
    _

</llo_original>
